<compile_context>
chip_gen: v7x
topology: tpu7x:2x2x1
jax: 0.10.0
libtpu: 0.0.40
codegen_flags: <defaults>
</compile_context>

<pallas_src>
import math

import jax
import jax.numpy as jnp
from jax.experimental import pallas as pl
from jax.experimental.pallas import tpu as pltpu


def _layernorm(x, gamma, beta, eps=1e-5):
    # torch.nn.LayerNorm semantics: biased variance over last dim, eps=1e-5
    mean = jnp.mean(x, axis=-1, keepdims=True)
    var = jnp.mean((x - mean) ** 2, axis=-1, keepdims=True)
    inv = jax.lax.rsqrt(var + eps)
    return (x - mean) * inv * gamma + beta


def encoder_layer_kernel(
    x_ref,                 # (1, S, E)  f32  full sequence of this batch element
    wq_ref, bq_ref,        # (E, E) bf16, (1, E) f32   (1/sqrt(E) pre-folded)
    wkv_ref, bkv_ref,      # (E, 2E) bf16, (1, 2E) f32
    g1_ref, be1_ref,       # (1, E) f32   norm1 gamma/beta
    w1_ref, b1_ref,        # (E, F) bf16, (1, F) f32
    w2_ref, b2_ref,        # (F, E) bf16, (1, E) f32
    g2_ref, be2_ref,       # (1, E) f32   norm2 gamma/beta
    out_ref,               # (1, TQ, E) f32
    attn_ref,              # (1, TQ, S) f32
    k_scratch,             # (S, E) bf16  persistent across grid steps
    v_scratch,             # (S, E) bf16
):
    qi = pl.program_id(1)
    tq = out_ref.shape[1]
    E = x_ref.shape[-1]

    # --- K/V projection: once per batch element, cached for all q-tiles ------
    @pl.when(qi == 0)
    def _():
        xf = x_ref[0].astype(jnp.bfloat16)                       # (S, E)
        kv = jnp.dot(xf, wkv_ref[...], preferred_element_type=jnp.float32)
        kv = kv + bkv_ref[0]                                     # (S, 2E) f32
        k_scratch[...] = kv[:, :E].astype(jnp.bfloat16)
        v_scratch[...] = kv[:, E:].astype(jnp.bfloat16)

    # --- Q projection for this query tile (scale folded into wq/bq) ----------
    row0 = pl.multiple_of(qi * tq, tq)
    xq = x_ref[0, pl.ds(row0, tq), :]                            # (TQ, E) f32
    q = jnp.dot(xq.astype(jnp.bfloat16), wq_ref[...],
                preferred_element_type=jnp.float32) + bq_ref[0]  # (TQ, E) f32

    # scores = q @ k^T without materializing the transpose (contract last dims)
    scores = jax.lax.dot_general(
        q.astype(jnp.bfloat16), k_scratch[...],
        (((1,), (1,)), ((), ())),
        preferred_element_type=jnp.float32)                      # (TQ, S) f32

    # numerically stable softmax; exact reciprocal so stored rows sum to 1
    m = jnp.max(scores, axis=-1, keepdims=True)
    e = jnp.exp(scores - m)
    attn = e * pl.reciprocal(jnp.sum(e, axis=-1, keepdims=True), approx=False)

    attn_out = jnp.dot(attn.astype(jnp.bfloat16), v_scratch[...],
                       preferred_element_type=jnp.float32)       # (TQ, E) f32

    # --- Residual + LayerNorm 1 ----------------------------------------------
    h = _layernorm(xq + attn_out, g1_ref[0], be1_ref[0])

    # --- Feed-forward: Linear -> ReLU -> Linear (bf16 matmuls, f32 acc) ------
    f = jnp.dot(h.astype(jnp.bfloat16), w1_ref[...],
                preferred_element_type=jnp.float32) + b1_ref[0]
    f = jnp.maximum(f, 0.0)
    ff = jnp.dot(f.astype(jnp.bfloat16), w2_ref[...],
                 preferred_element_type=jnp.float32) + b2_ref[0]

    # --- Residual + LayerNorm 2 ----------------------------------------------
    y = _layernorm(h + ff, g2_ref[0], be2_ref[0])

    out_ref[0] = y
    attn_ref[0] = attn


def encoder_layer(x, params, *, tq=256):
    B, S, E = x.shape
    F = params["w1"].shape[1]

    tq = min(tq, S)
    assert S % tq == 0 and tq % 8 == 0, "S must be a multiple of the q-tile (>=8)"
    nq = S // tq

    # ---- VMEM budget: exact-ish resident footprint + headroom, capped per-gen
    bf16, f32 = 2, 4
    weight_bytes = bf16 * (3 * E * E + 2 * E * F)          # single-buffered bf16
    param_bytes = f32 * (8 * E + F)                        # biases + LN params
    x_bytes = 2 * f32 * S * E                              # double-buffered x
    out_bytes = 2 * f32 * (tq * E + tq * S)                # out + attn blocks
    scratch_bytes = 2 * bf16 * S * E                       # K/V cache
    live_bytes = f32 * (2 * S * E + 3 * tq * S + tq * F + 6 * tq * E)
    needed = (weight_bytes + param_bytes + x_bytes + out_bytes
              + scratch_bytes + live_bytes)
    try:
        phys_vmem = pltpu.get_tpu_info().vmem_capacity_bytes
    except Exception:
        phys_vmem = 64 * 1024 * 1024                       # conservative (v7x)
    vmem_limit = min(max(int(1.4 * needed) + (2 << 20), 16 << 20),
                     int(0.65 * phys_vmem))

    cost = pl.CostEstimate(
        flops=2 * B * S * (3 * E * E + 2 * S * E + 2 * E * F),
        transcendentals=B * S * (S + 4),
        bytes_accessed=(B * S * E * f32 * 2            # x in, out
                        + B * S * S * f32              # attn out
                        + weight_bytes + param_bytes),
    )

    out_shape = (
        jax.ShapeDtypeStruct((B, S, E), jnp.float32),
        jax.ShapeDtypeStruct((B, S, S), jnp.float32),
    )

    def build(single_buffer_params):
        if single_buffer_params:
            # Grid-invariant params: one buffer is enough (index_map constant).
            def invariant(shape):
                return pl.BlockSpec(shape, lambda b, q: (0, 0),
                                    pipeline_mode=pl.Buffered(1))
        else:
            def invariant(shape):
                return pl.BlockSpec(shape, lambda b, q: (0, 0))

        in_specs = [
            pl.BlockSpec((1, S, E), lambda b, q: (b, 0, 0)),   # x (full seq)
            invariant((E, E)), invariant((1, E)),              # wq, bq
            invariant((E, 2 * E)), invariant((1, 2 * E)),      # wkv, bkv
            invariant((1, E)), invariant((1, E)),              # norm1
            invariant((E, F)), invariant((1, F)),              # ff linear1
            invariant((F, E)), invariant((1, E)),              # ff linear2
            invariant((1, E)), invariant((1, E)),              # norm2
        ]
        out_specs = (
            pl.BlockSpec((1, tq, E), lambda b, q: (b, q, 0)),
            pl.BlockSpec((1, tq, S), lambda b, q: (b, q, 0)),
        )
        return pl.pallas_call(
            encoder_layer_kernel,
            out_shape=out_shape,
            grid_spec=pltpu.PrefetchScalarGridSpec(
                num_scalar_prefetch=0,
                grid=(B, nq),
                in_specs=in_specs,
                out_specs=out_specs,
                scratch_shapes=[
                    pltpu.VMEM((S, E), jnp.bfloat16),   # K cache
                    pltpu.VMEM((S, E), jnp.bfloat16),   # V cache
                ],
            ),
            compiler_params=pltpu.CompilerParams(
                # q-tile axis must be "arbitrary": the K/V scratch written at
                # qi == 0 is reused by later q-tiles of the same batch element.
                dimension_semantics=("parallel", "arbitrary"),
                vmem_limit_bytes=vmem_limit,
            ),
            cost_estimate=cost,
        )

    args = (
        x,
        params["wq"], params["bq"],
        params["wkv"], params["bkv"],
        params["g1"], params["be1"],
        params["w1"], params["b1"],
        params["w2"], params["b2"],
        params["g2"], params["be2"],
    )
    try:
        return build(True)(*args)
    except Exception:
        # Fallback for jax builds without BlockSpec pipeline_mode support:
        # identical kernel, default (double-buffered) parameter blocks.
        return build(False)(*args)


def init_params(key, embed_dim, ff_dim):
    ks = jax.random.split(key, 8)
    se = 1.0 / math.sqrt(embed_dim)
    sf = 1.0 / math.sqrt(ff_dim)
    u = lambda k, shape, s: jax.random.uniform(k, shape, jnp.float32, -s, s)
    wq = u(ks[0], (embed_dim, embed_dim), se)
    wk = u(ks[1], (embed_dim, embed_dim), se)
    wv = u(ks[2], (embed_dim, embed_dim), se)
    bq = u(ks[3], (1, embed_dim), se)
    bk = u(ks[4], (1, embed_dim), se)
    bv = u(ks[5], (1, embed_dim), se)
    scale = 1.0 / math.sqrt(embed_dim)
    return {
        # 1/sqrt(E) folded into the Q projection once at prep time; weights are
        # stored bf16 (halves HBM->VMEM traffic, native MXU operand dtype).
        "wq": (wq * scale).astype(jnp.bfloat16),
        "bq": bq * scale,                                          # (1, E) f32
        "wkv": jnp.concatenate([wk, wv], axis=1).astype(jnp.bfloat16),
        "bkv": jnp.concatenate([bk, bv], axis=1),                  # (1, 2E) f32
        "g1": jnp.ones((1, embed_dim), jnp.float32),
        "be1": jnp.zeros((1, embed_dim), jnp.float32),
        "w1": u(ks[6], (embed_dim, ff_dim), se).astype(jnp.bfloat16),
        "b1": jnp.zeros((1, ff_dim), jnp.float32),
        "w2": u(ks[7], (ff_dim, embed_dim), sf).astype(jnp.bfloat16),
        "b2": jnp.zeros((1, embed_dim), jnp.float32),
        "g2": jnp.ones((1, embed_dim), jnp.float32),
        "be2": jnp.zeros((1, embed_dim), jnp.float32),
    }


def _reference(x, p):
    # pure-JAX f32 reference using the same (bf16-rounded, pre-scaled) weights
    E = x.shape[-1]
    q = jnp.einsum("bse,ef->bsf", x, p["wq"].astype(jnp.float32)) + p["bq"][0]
    kv = jnp.einsum("bse,ef->bsf", x, p["wkv"].astype(jnp.float32)) + p["bkv"][0]
    k, v = kv[..., :E], kv[..., E:]
    scores = jnp.einsum("bqd,bkd->bqk", q, k)     # 1/sqrt(E) already in q
    attn = jax.nn.softmax(scores, axis=-1)
    attn_out = jnp.einsum("bqk,bkd->bqd", attn, v)

    def ln(z, g, b):
        m = jnp.mean(z, -1, keepdims=True)
        var = jnp.mean((z - m) ** 2, -1, keepdims=True)
        return (z - m) / jnp.sqrt(var + 1e-5) * g[0] + b[0]

    h = ln(x + attn_out, p["g1"], p["be1"])
    f = jnp.maximum(h @ p["w1"].astype(jnp.float32) + p["b1"][0], 0.0)
    ff_out = f @ p["w2"].astype(jnp.float32) + p["b2"][0]
    y = ln(h + ff_out, p["g2"], p["be2"])
    return y, attn


if __name__ == "__main__":
    # Small, lane-aligned shapes: E, F, S multiples of 128 (attn store is
    # lane-dense); TQ = 64 gives 2 q-tiles per batch element so the q-tile
    # grid axis + K/V scratch reuse is actually exercised.
    B, S, E, F = 2, 128, 128, 256
    TQ = 64
    key = jax.random.PRNGKey(0)
    kx, kp = jax.random.split(key)
    x = jax.random.normal(kx, (B, S, E), jnp.float32)
    params = init_params(kp, E, F)

    out, attn = encoder_layer(x, params, tq=TQ)
    out = jax.block_until_ready(out)
    attn = jax.block_until_ready(attn)

    ref_out, ref_attn = _reference(x, params)
    # bf16 matmul operands (f32 accumulation) -> modest tolerances vs f32 ref
    assert jnp.allclose(out, ref_out, atol=5e-2, rtol=5e-2), "output mismatch"
    assert jnp.allclose(attn, ref_attn, atol=2e-2, rtol=2e-2), "attn mismatch"

    print("KERNEL_OK")
</pallas_src>

<mosaic_0001>
module attributes {stable_mosaic.version = 11 : i64} {
  func.func @encoder_layer_kernel(%arg0: i32, %arg1: i32, %arg2: memref<1x128x128xf32, #tpu.memory_space<vmem>>, %arg3: memref<128x128xbf16, #tpu.memory_space<vmem>>, %arg4: memref<1x128xf32, #tpu.memory_space<vmem>>, %arg5: memref<128x256xbf16, #tpu.memory_space<vmem>>, %arg6: memref<1x256xf32, #tpu.memory_space<vmem>>, %arg7: memref<1x128xf32, #tpu.memory_space<vmem>>, %arg8: memref<1x128xf32, #tpu.memory_space<vmem>>, %arg9: memref<128x256xbf16, #tpu.memory_space<vmem>>, %arg10: memref<1x256xf32, #tpu.memory_space<vmem>>, %arg11: memref<256x128xbf16, #tpu.memory_space<vmem>>, %arg12: memref<1x128xf32, #tpu.memory_space<vmem>>, %arg13: memref<1x128xf32, #tpu.memory_space<vmem>>, %arg14: memref<1x128xf32, #tpu.memory_space<vmem>>, %arg15: memref<1x64x128xf32, #tpu.memory_space<vmem>>, %arg16: memref<1x64x128xf32, #tpu.memory_space<vmem>>, %arg17: memref<128x128xbf16, #tpu.memory_space<vmem>>, %arg18: memref<128x128xbf16, #tpu.memory_space<vmem>>) attributes {dimension_semantics = [#tpu.dimension_semantics<parallel>, #tpu.dimension_semantics<arbitrary>], iteration_bounds = array<i64: 2, 2>, scalar_prefetch = 0 : i64, scratch_operands = 2 : i64, tpu.core_type = #tpu.core_type<tc>, window_params = [{transform_indices = @transform_0, window_bounds = array<i64: 1, 128, 128>}, {pipeline_mode = #tpu.pipeline_mode<synchronous>, transform_indices = @transform_1, window_bounds = array<i64: 128, 128>}, {pipeline_mode = #tpu.pipeline_mode<synchronous>, transform_indices = @transform_2, window_bounds = array<i64: 1, 128>}, {pipeline_mode = #tpu.pipeline_mode<synchronous>, transform_indices = @transform_3, window_bounds = array<i64: 128, 256>}, {pipeline_mode = #tpu.pipeline_mode<synchronous>, transform_indices = @transform_4, window_bounds = array<i64: 1, 256>}, {pipeline_mode = #tpu.pipeline_mode<synchronous>, transform_indices = @transform_5, window_bounds = array<i64: 1, 128>}, {pipeline_mode = #tpu.pipeline_mode<synchronous>, transform_indices = @transform_6, window_bounds = array<i64: 1, 128>}, {pipeline_mode = #tpu.pipeline_mode<synchronous>, transform_indices = @transform_7, window_bounds = array<i64: 128, 256>}, {pipeline_mode = #tpu.pipeline_mode<synchronous>, transform_indices = @transform_8, window_bounds = array<i64: 1, 256>}, {pipeline_mode = #tpu.pipeline_mode<synchronous>, transform_indices = @transform_9, window_bounds = array<i64: 256, 128>}, {pipeline_mode = #tpu.pipeline_mode<synchronous>, transform_indices = @transform_10, window_bounds = array<i64: 1, 128>}, {pipeline_mode = #tpu.pipeline_mode<synchronous>, transform_indices = @transform_11, window_bounds = array<i64: 1, 128>}, {pipeline_mode = #tpu.pipeline_mode<synchronous>, transform_indices = @transform_12, window_bounds = array<i64: 1, 128>}, {transform_indices = @transform_13, window_bounds = array<i64: 1, 64, 128>}, {transform_indices = @transform_14, window_bounds = array<i64: 1, 64, 128>}]} {
    %c0_i32 = arith.constant 0 : i32
    %0 = arith.cmpi eq, %arg1, %c0_i32 : i32
    %1 = arith.extui %0 : i1 to i32
    %c0_i32_0 = arith.constant 0 : i32
    %2 = arith.cmpi ne, %1, %c0_i32_0 : i32
    scf.if %2 {
      %c0_49 = arith.constant 0 : index
      %c0_50 = arith.constant 0 : index
      %c0_51 = arith.constant 0 : index
      %114 = vector.load %arg2[%c0_49, %c0_50, %c0_51] : memref<1x128x128xf32, #tpu.memory_space<vmem>>, vector<1x128x128xf32>
      %115 = vector.shape_cast %114 : vector<1x128x128xf32> to vector<128x128xf32>
      %116 = arith.truncf %115 : vector<128x128xf32> to vector<128x128xbf16>
      %c0_52 = arith.constant 0 : index
      %c0_53 = arith.constant 0 : index
      %117 = vector.load %arg5[%c0_52, %c0_53] : memref<128x256xbf16, #tpu.memory_space<vmem>>, vector<128x256xbf16>
      %cst_54 = arith.constant dense<0.000000e+00> : vector<128x256xf32>
      %118 = tpu.matmul %116, %117, %cst_54 {dimension_numbers = #tpu.dot_dimension_numbers<[1], [0], [0], [1], [0, 0, 1, 1], [], []>} : vector<128x128xbf16>, vector<128x256xbf16>, vector<128x256xf32> -> vector<128x256xf32>
      %c0_55 = arith.constant 0 : index
      %c0_56 = arith.constant 0 : index
      %119 = vector.load %arg6[%c0_55, %c0_56] : memref<1x256xf32, #tpu.memory_space<vmem>>, vector<1x256xf32>
      %120 = vector.shape_cast %119 : vector<1x256xf32> to vector<256xf32>
      %121 = vector.shape_cast %120 : vector<256xf32> to vector<1x256xf32>
      %122 = vector.broadcast %121 : vector<1x256xf32> to vector<128x256xf32>
      %123 = arith.addf %118, %122 : vector<128x256xf32>
      %124 = vector.extract_strided_slice %123 {offsets = [0, 0], sizes = [128, 128], strides = [1, 1]} : vector<128x256xf32> to vector<128x128xf32>
      %125 = arith.truncf %124 : vector<128x128xf32> to vector<128x128xbf16>
      %c0_57 = arith.constant 0 : index
      %c0_58 = arith.constant 0 : index
      %126 = vector.load %arg17[%c0_57, %c0_58] : memref<128x128xbf16, #tpu.memory_space<vmem>>, vector<128x128xbf16>
      tpu.vector_store %arg17[%c0_57, %c0_58], %125 {strides = array<i32>} : memref<128x128xbf16, #tpu.memory_space<vmem>>, vector<128x128xbf16>,
      %127 = vector.extract_strided_slice %123 {offsets = [0, 128], sizes = [128, 128], strides = [1, 1]} : vector<128x256xf32> to vector<128x128xf32>
      %128 = arith.truncf %127 : vector<128x128xf32> to vector<128x128xbf16>
      %c0_59 = arith.constant 0 : index
      %c0_60 = arith.constant 0 : index
      %129 = vector.load %arg18[%c0_59, %c0_60] : memref<128x128xbf16, #tpu.memory_space<vmem>>, vector<128x128xbf16>
      tpu.vector_store %arg18[%c0_59, %c0_60], %128 {strides = array<i32>} : memref<128x128xbf16, #tpu.memory_space<vmem>>, vector<128x128xbf16>,
    } else {
    }
    %c64_i32 = arith.constant 64 : i32
    %3 = arith.muli %arg1, %c64_i32 : i32
    %4 = tpu.assume_multiple %3, 64 : i32
    %c0 = arith.constant 0 : index
    %5 = arith.index_cast %4 : i32 to index
    %c0_1 = arith.constant 0 : index
    %6 = vector.load %arg2[%c0, %5, %c0_1] : memref<1x128x128xf32, #tpu.memory_space<vmem>>, vector<1x64x128xf32>
    %7 = vector.shape_cast %6 : vector<1x64x128xf32> to vector<64x128xf32>
    %8 = arith.truncf %7 : vector<64x128xf32> to vector<64x128xbf16>
    %c0_2 = arith.constant 0 : index
    %c0_3 = arith.constant 0 : index
    %9 = vector.load %arg3[%c0_2, %c0_3] : memref<128x128xbf16, #tpu.memory_space<vmem>>, vector<128x128xbf16>
    %cst = arith.constant dense<0.000000e+00> : vector<64x128xf32>
    %10 = tpu.matmul %8, %9, %cst {dimension_numbers = #tpu.dot_dimension_numbers<[1], [0], [0], [1], [0, 0, 1, 1], [], []>} : vector<64x128xbf16>, vector<128x128xbf16>, vector<64x128xf32> -> vector<64x128xf32>
    %c0_4 = arith.constant 0 : index
    %c0_5 = arith.constant 0 : index
    %11 = vector.load %arg4[%c0_4, %c0_5] : memref<1x128xf32, #tpu.memory_space<vmem>>, vector<1x128xf32>
    %12 = vector.shape_cast %11 : vector<1x128xf32> to vector<128xf32>
    %13 = vector.shape_cast %12 : vector<128xf32> to vector<1x128xf32>
    %14 = vector.broadcast %13 : vector<1x128xf32> to vector<64x128xf32>
    %15 = arith.addf %10, %14 : vector<64x128xf32>
    %16 = arith.truncf %15 : vector<64x128xf32> to vector<64x128xbf16>
    %c0_6 = arith.constant 0 : index
    %c0_7 = arith.constant 0 : index
    %17 = vector.load %arg17[%c0_6, %c0_7] : memref<128x128xbf16, #tpu.memory_space<vmem>>, vector<128x128xbf16>
    %cst_8 = arith.constant dense<0.000000e+00> : vector<64x128xf32>
    %18 = tpu.matmul %16, %17, %cst_8 {dimension_numbers = #tpu.dot_dimension_numbers<[1], [1], [0], [0], [0, 0, 1, 0], [], []>} : vector<64x128xbf16>, vector<128x128xbf16>, vector<64x128xf32> -> vector<64x128xf32>
    %cst_9 = arith.constant dense<0xFF800000> : vector<64xf32>
    %19 = vector.multi_reduction <maximumf>, %18, %cst_9 [1] : vector<64x128xf32> to vector<64xf32>
    %20 = vector.shape_cast %19 : vector<64xf32> to vector<64x1xf32>
    %21 = vector.broadcast %20 : vector<64x1xf32> to vector<64x128xf32>
    %22 = arith.subf %18, %21 : vector<64x128xf32>
    %23 = math.exp %22 : vector<64x128xf32>
    %cst_10 = arith.constant dense<0.000000e+00> : vector<64xf32>
    %24 = vector.multi_reduction <add>, %23, %cst_10 [1] : vector<64x128xf32> to vector<64xf32>
    %25 = vector.shape_cast %24 : vector<64xf32> to vector<64x1xf32>
    %26 = tpu.reciprocal %25 : vector<64x1xf32> -> vector<64x1xf32>
    %27 = vector.broadcast %26 : vector<64x1xf32> to vector<64x128xf32>
    %28 = arith.mulf %23, %27 : vector<64x128xf32>
    %29 = arith.truncf %28 : vector<64x128xf32> to vector<64x128xbf16>
    %c0_11 = arith.constant 0 : index
    %c0_12 = arith.constant 0 : index
    %30 = vector.load %arg18[%c0_11, %c0_12] : memref<128x128xbf16, #tpu.memory_space<vmem>>, vector<128x128xbf16>
    %cst_13 = arith.constant dense<0.000000e+00> : vector<64x128xf32>
    %31 = tpu.matmul %29, %30, %cst_13 {dimension_numbers = #tpu.dot_dimension_numbers<[1], [0], [0], [1], [0, 0, 1, 1], [], []>} : vector<64x128xbf16>, vector<128x128xbf16>, vector<64x128xf32> -> vector<64x128xf32>
    %32 = arith.addf %7, %31 : vector<64x128xf32>
    %c0_14 = arith.constant 0 : index
    %c0_15 = arith.constant 0 : index
    %33 = vector.load %arg7[%c0_14, %c0_15] : memref<1x128xf32, #tpu.memory_space<vmem>>, vector<1x128xf32>
    %34 = vector.shape_cast %33 : vector<1x128xf32> to vector<128xf32>
    %c0_16 = arith.constant 0 : index
    %c0_17 = arith.constant 0 : index
    %35 = vector.load %arg8[%c0_16, %c0_17] : memref<1x128xf32, #tpu.memory_space<vmem>>, vector<1x128xf32>
    %36 = vector.shape_cast %35 : vector<1x128xf32> to vector<128xf32>
    %cst_18 = arith.constant dense<0.000000e+00> : vector<64xf32>
    %37 = vector.multi_reduction <add>, %32, %cst_18 [1] : vector<64x128xf32> to vector<64xf32>
    %38 = vector.shape_cast %37 : vector<64xf32> to vector<64x1xf32>
    %cst_19 = arith.constant 1.280000e+02 : f32
    %39 = vector.broadcast %cst_19 : f32 to vector<64x1xf32>
    %40 = arith.divf %38, %39 : vector<64x1xf32>
    %41 = vector.broadcast %40 : vector<64x1xf32> to vector<64x128xf32>
    %42 = arith.subf %32, %41 : vector<64x128xf32>
    %43 = arith.mulf %42, %42 : vector<64x128xf32>
    %cst_20 = arith.constant dense<0.000000e+00> : vector<64xf32>
    %44 = vector.multi_reduction <add>, %43, %cst_20 [1] : vector<64x128xf32> to vector<64xf32>
    %45 = vector.shape_cast %44 : vector<64xf32> to vector<64x1xf32>
    %cst_21 = arith.constant 1.280000e+02 : f32
    %46 = vector.broadcast %cst_21 : f32 to vector<64x1xf32>
    %47 = arith.divf %45, %46 : vector<64x1xf32>
    %cst_22 = arith.constant 9.99999974E-6 : f32
    %48 = vector.broadcast %cst_22 : f32 to vector<64x1xf32>
    %49 = arith.addf %47, %48 : vector<64x1xf32>
    %50 = math.rsqrt %49 : vector<64x1xf32>
    %51 = vector.broadcast %40 : vector<64x1xf32> to vector<64x128xf32>
    %52 = arith.subf %32, %51 : vector<64x128xf32>
    %53 = vector.broadcast %50 : vector<64x1xf32> to vector<64x128xf32>
    %54 = arith.mulf %52, %53 : vector<64x128xf32>
    %55 = vector.shape_cast %34 : vector<128xf32> to vector<1x128xf32>
    %56 = vector.broadcast %55 : vector<1x128xf32> to vector<64x128xf32>
    %57 = arith.mulf %54, %56 : vector<64x128xf32>
    %58 = vector.shape_cast %36 : vector<128xf32> to vector<1x128xf32>
    %59 = vector.broadcast %58 : vector<1x128xf32> to vector<64x128xf32>
    %60 = arith.addf %57, %59 : vector<64x128xf32>
    %61 = arith.truncf %60 : vector<64x128xf32> to vector<64x128xbf16>
    %c0_23 = arith.constant 0 : index
    %c0_24 = arith.constant 0 : index
    %62 = vector.load %arg9[%c0_23, %c0_24] : memref<128x256xbf16, #tpu.memory_space<vmem>>, vector<128x256xbf16>
    %cst_25 = arith.constant dense<0.000000e+00> : vector<64x256xf32>
    %63 = tpu.matmul %61, %62, %cst_25 {dimension_numbers = #tpu.dot_dimension_numbers<[1], [0], [0], [1], [0, 0, 1, 1], [], []>} : vector<64x128xbf16>, vector<128x256xbf16>, vector<64x256xf32> -> vector<64x256xf32>
    %c0_26 = arith.constant 0 : index
    %c0_27 = arith.constant 0 : index
    %64 = vector.load %arg10[%c0_26, %c0_27] : memref<1x256xf32, #tpu.memory_space<vmem>>, vector<1x256xf32>
    %65 = vector.shape_cast %64 : vector<1x256xf32> to vector<256xf32>
    %66 = vector.shape_cast %65 : vector<256xf32> to vector<1x256xf32>
    %67 = vector.broadcast %66 : vector<1x256xf32> to vector<64x256xf32>
    %68 = arith.addf %63, %67 : vector<64x256xf32>
    %cst_28 = arith.constant 0.000000e+00 : f32
    %69 = vector.broadcast %cst_28 : f32 to vector<64x256xf32>
    %70 = arith.maximumf %68, %69 : vector<64x256xf32>
    %71 = arith.truncf %70 : vector<64x256xf32> to vector<64x256xbf16>
    %c0_29 = arith.constant 0 : index
    %c0_30 = arith.constant 0 : index
    %72 = vector.load %arg11[%c0_29, %c0_30] : memref<256x128xbf16, #tpu.memory_space<vmem>>, vector<256x128xbf16>
    %cst_31 = arith.constant dense<0.000000e+00> : vector<64x128xf32>
    %73 = tpu.matmul %71, %72, %cst_31 {dimension_numbers = #tpu.dot_dimension_numbers<[1], [0], [0], [1], [0, 0, 1, 1], [], []>} : vector<64x256xbf16>, vector<256x128xbf16>, vector<64x128xf32> -> vector<64x128xf32>
    %c0_32 = arith.constant 0 : index
    %c0_33 = arith.constant 0 : index
    %74 = vector.load %arg12[%c0_32, %c0_33] : memref<1x128xf32, #tpu.memory_space<vmem>>, vector<1x128xf32>
    %75 = vector.shape_cast %74 : vector<1x128xf32> to vector<128xf32>
    %76 = vector.shape_cast %75 : vector<128xf32> to vector<1x128xf32>
    %77 = vector.broadcast %76 : vector<1x128xf32> to vector<64x128xf32>
    %78 = arith.addf %73, %77 : vector<64x128xf32>
    %79 = arith.addf %60, %78 : vector<64x128xf32>
    %c0_34 = arith.constant 0 : index
    %c0_35 = arith.constant 0 : index
    %80 = vector.load %arg13[%c0_34, %c0_35] : memref<1x128xf32, #tpu.memory_space<vmem>>, vector<1x128xf32>
    %81 = vector.shape_cast %80 : vector<1x128xf32> to vector<128xf32>
    %c0_36 = arith.constant 0 : index
    %c0_37 = arith.constant 0 : index
    %82 = vector.load %arg14[%c0_36, %c0_37] : memref<1x128xf32, #tpu.memory_space<vmem>>, vector<1x128xf32>
    %83 = vector.shape_cast %82 : vector<1x128xf32> to vector<128xf32>
    %cst_38 = arith.constant dense<0.000000e+00> : vector<64xf32>
    %84 = vector.multi_reduction <add>, %79, %cst_38 [1] : vector<64x128xf32> to vector<64xf32>
    %85 = vector.shape_cast %84 : vector<64xf32> to vector<64x1xf32>
    %cst_39 = arith.constant 1.280000e+02 : f32
    %86 = vector.broadcast %cst_39 : f32 to vector<64x1xf32>
    %87 = arith.divf %85, %86 : vector<64x1xf32>
    %88 = vector.broadcast %87 : vector<64x1xf32> to vector<64x128xf32>
    %89 = arith.subf %79, %88 : vector<64x128xf32>
    %90 = arith.mulf %89, %89 : vector<64x128xf32>
    %cst_40 = arith.constant dense<0.000000e+00> : vector<64xf32>
    %91 = vector.multi_reduction <add>, %90, %cst_40 [1] : vector<64x128xf32> to vector<64xf32>
    %92 = vector.shape_cast %91 : vector<64xf32> to vector<64x1xf32>
    %cst_41 = arith.constant 1.280000e+02 : f32
    %93 = vector.broadcast %cst_41 : f32 to vector<64x1xf32>
    %94 = arith.divf %92, %93 : vector<64x1xf32>
    %cst_42 = arith.constant 9.99999974E-6 : f32
    %95 = vector.broadcast %cst_42 : f32 to vector<64x1xf32>
    %96 = arith.addf %94, %95 : vector<64x1xf32>
    %97 = math.rsqrt %96 : vector<64x1xf32>
    %98 = vector.broadcast %87 : vector<64x1xf32> to vector<64x128xf32>
    %99 = arith.subf %79, %98 : vector<64x128xf32>
    %100 = vector.broadcast %97 : vector<64x1xf32> to vector<64x128xf32>
    %101 = arith.mulf %99, %100 : vector<64x128xf32>
    %102 = vector.shape_cast %81 : vector<128xf32> to vector<1x128xf32>
    %103 = vector.broadcast %102 : vector<1x128xf32> to vector<64x128xf32>
    %104 = arith.mulf %101, %103 : vector<64x128xf32>
    %105 = vector.shape_cast %83 : vector<128xf32> to vector<1x128xf32>
    %106 = vector.broadcast %105 : vector<1x128xf32> to vector<64x128xf32>
    %107 = arith.addf %104, %106 : vector<64x128xf32>
    %c0_43 = arith.constant 0 : index
    %c0_44 = arith.constant 0 : index
    %c0_45 = arith.constant 0 : index
    %108 = vector.load %arg15[%c0_43, %c0_44, %c0_45] : memref<1x64x128xf32, #tpu.memory_space<vmem>>, vector<1x64x128xf32>
    %109 = vector.shape_cast %108 : vector<1x64x128xf32> to vector<64x128xf32>
    %110 = vector.shape_cast %107 : vector<64x128xf32> to vector<1x64x128xf32>
    tpu.vector_store %arg15[%c0_43, %c0_44, %c0_45], %110 {strides = array<i32>} : memref<1x64x128xf32, #tpu.memory_space<vmem>>, vector<1x64x128xf32>,
    %c0_46 = arith.constant 0 : index
    %c0_47 = arith.constant 0 : index
    %c0_48 = arith.constant 0 : index
    %111 = vector.load %arg16[%c0_46, %c0_47, %c0_48] : memref<1x64x128xf32, #tpu.memory_space<vmem>>, vector<1x64x128xf32>
    %112 = vector.shape_cast %111 : vector<1x64x128xf32> to vector<64x128xf32>
    %113 = vector.shape_cast %28 : vector<64x128xf32> to vector<1x64x128xf32>
    tpu.vector_store %arg16[%c0_46, %c0_47, %c0_48], %113 {strides = array<i32>} : memref<1x64x128xf32, #tpu.memory_space<vmem>>, vector<1x64x128xf32>,
    return
  }
  func.func @transform_0(%arg0: i32, %arg1: i32) -> (i32, i32, i32) {
    %c0_i32 = arith.constant 0 : i32
    %c0_i32_0 = arith.constant 0 : i32
    %c0_i32_1 = arith.constant 0 : i32
    return %arg0, %c0_i32, %c0_i32_0 : i32, i32, i32
  }
  func.func @transform_1(%arg0: i32, %arg1: i32) -> (i32, i32) {
    %c0_i32 = arith.constant 0 : i32
    %c0_i32_0 = arith.constant 0 : i32
    %c0_i32_1 = arith.constant 0 : i32
    return %c0_i32, %c0_i32_0 : i32, i32
  }
  func.func @transform_2(%arg0: i32, %arg1: i32) -> (i32, i32) {
    %c0_i32 = arith.constant 0 : i32
    %c0_i32_0 = arith.constant 0 : i32
    %c0_i32_1 = arith.constant 0 : i32
    return %c0_i32, %c0_i32_0 : i32, i32
  }
  func.func @transform_3(%arg0: i32, %arg1: i32) -> (i32, i32) {
    %c0_i32 = arith.constant 0 : i32
    %c0_i32_0 = arith.constant 0 : i32
    %c0_i32_1 = arith.constant 0 : i32
    return %c0_i32, %c0_i32_0 : i32, i32
  }
  func.func @transform_4(%arg0: i32, %arg1: i32) -> (i32, i32) {
    %c0_i32 = arith.constant 0 : i32
    %c0_i32_0 = arith.constant 0 : i32
    %c0_i32_1 = arith.constant 0 : i32
    return %c0_i32, %c0_i32_0 : i32, i32
  }
  func.func @transform_5(%arg0: i32, %arg1: i32) -> (i32, i32) {
    %c0_i32 = arith.constant 0 : i32
    %c0_i32_0 = arith.constant 0 : i32
    %c0_i32_1 = arith.constant 0 : i32
    return %c0_i32, %c0_i32_0 : i32, i32
  }
  func.func @transform_6(%arg0: i32, %arg1: i32) -> (i32, i32) {
    %c0_i32 = arith.constant 0 : i32
    %c0_i32_0 = arith.constant 0 : i32
    %c0_i32_1 = arith.constant 0 : i32
    return %c0_i32, %c0_i32_0 : i32, i32
  }
  func.func @transform_7(%arg0: i32, %arg1: i32) -> (i32, i32) {
    %c0_i32 = arith.constant 0 : i32
    %c0_i32_0 = arith.constant 0 : i32
    %c0_i32_1 = arith.constant 0 : i32
    return %c0_i32, %c0_i32_0 : i32, i32
  }
  func.func @transform_8(%arg0: i32, %arg1: i32) -> (i32, i32) {
    %c0_i32 = arith.constant 0 : i32
    %c0_i32_0 = arith.constant 0 : i32
    %c0_i32_1 = arith.constant 0 : i32
    return %c0_i32, %c0_i32_0 : i32, i32
  }
  func.func @transform_9(%arg0: i32, %arg1: i32) -> (i32, i32) {
    %c0_i32 = arith.constant 0 : i32
    %c0_i32_0 = arith.constant 0 : i32
    %c0_i32_1 = arith.constant 0 : i32
    return %c0_i32, %c0_i32_0 : i32, i32
  }
  func.func @transform_10(%arg0: i32, %arg1: i32) -> (i32, i32) {
    %c0_i32 = arith.constant 0 : i32
    %c0_i32_0 = arith.constant 0 : i32
    %c0_i32_1 = arith.constant 0 : i32
    return %c0_i32, %c0_i32_0 : i32, i32
  }
  func.func @transform_11(%arg0: i32, %arg1: i32) -> (i32, i32) {
    %c0_i32 = arith.constant 0 : i32
    %c0_i32_0 = arith.constant 0 : i32
    %c0_i32_1 = arith.constant 0 : i32
    return %c0_i32, %c0_i32_0 : i32, i32
  }
  func.func @transform_12(%arg0: i32, %arg1: i32) -> (i32, i32) {
    %c0_i32 = arith.constant 0 : i32
    %c0_i32_0 = arith.constant 0 : i32
    %c0_i32_1 = arith.constant 0 : i32
    return %c0_i32, %c0_i32_0 : i32, i32
  }
  func.func @transform_13(%arg0: i32, %arg1: i32) -> (i32, i32, i32) {
    %c0_i32 = arith.constant 0 : i32
    %c0_i32_0 = arith.constant 0 : i32
    return %arg0, %arg1, %c0_i32 : i32, i32, i32
  }
  func.func @transform_14(%arg0: i32, %arg1: i32) -> (i32, i32, i32) {
    %c0_i32 = arith.constant 0 : i32
    %c0_i32_0 = arith.constant 0 : i32
    return %arg0, %arg1, %c0_i32 : i32, i32, i32
  }
}

module attributes {stable_mosaic.version = 11 : i64} {
  func.func @encoder_layer_kernel(%arg0: i32, %arg1: i32, %arg2: memref<1x128x128xf32, #tpu.memory_space<vmem>>, %arg3: memref<128x128xbf16, #tpu.memory_space<vmem>>, %arg4: memref<1x128xf32, #tpu.memory_space<vmem>>, %arg5: memref<128x256xbf16, #tpu.memory_space<vmem>>, %arg6: memref<1x256xf32, #tpu.memory_space<vmem>>, %arg7: memref<1x128xf32, #tpu.memory_space<vmem>>, %arg8: memref<1x128xf32, #tpu.memory_space<vmem>>, %arg9: memref<128x256xbf16, #tpu.memory_space<vmem>>, %arg10: memref<1x256xf32, #tpu.memory_space<vmem>>, %arg11: memref<256x128xbf16, #tpu.memory_space<vmem>>, %arg12: memref<1x128xf32, #tpu.memory_space<vmem>>, %arg13: memref<1x128xf32, #tpu.memory_space<vmem>>, %arg14: memref<1x128xf32, #tpu.memory_space<vmem>>, %arg15: memref<1x64x128xf32, #tpu.memory_space<vmem>>, %arg16: memref<1x64x128xf32, #tpu.memory_space<vmem>>, %arg17: memref<128x128xbf16, #tpu.memory_space<vmem>>, %arg18: memref<128x128xbf16, #tpu.memory_space<vmem>>) attributes {dimension_semantics = [#tpu.dimension_semantics<parallel>, #tpu.dimension_semantics<arbitrary>], iteration_bounds = array<i64: 2, 2>, scalar_prefetch = 0 : i64, scratch_operands = 2 : i64, tpu.core_type = #tpu.core_type<tc>, window_params = [{transform_indices = @transform_0, window_bounds = array<i64: 1, 128, 128>}, {pipeline_mode = #tpu.pipeline_mode<synchronous>, transform_indices = @transform_1, window_bounds = array<i64: 128, 128>}, {pipeline_mode = #tpu.pipeline_mode<synchronous>, transform_indices = @transform_2, window_bounds = array<i64: 1, 128>}, {pipeline_mode = #tpu.pipeline_mode<synchronous>, transform_indices = @transform_3, window_bounds = array<i64: 128, 256>}, {pipeline_mode = #tpu.pipeline_mode<synchronous>, transform_indices = @transform_4, window_bounds = array<i64: 1, 256>}, {pipeline_mode = #tpu.pipeline_mode<synchronous>, transform_indices = @transform_5, window_bounds = array<i64: 1, 128>}, {pipeline_mode = #tpu.pipeline_mode<synchronous>, transform_indices = @transform_6, window_bounds = array<i64: 1, 128>}, {pipeline_mode = #tpu.pipeline_mode<synchronous>, transform_indices = @transform_7, window_bounds = array<i64: 128, 256>}, {pipeline_mode = #tpu.pipeline_mode<synchronous>, transform_indices = @transform_8, window_bounds = array<i64: 1, 256>}, {pipeline_mode = #tpu.pipeline_mode<synchronous>, transform_indices = @transform_9, window_bounds = array<i64: 256, 128>}, {pipeline_mode = #tpu.pipeline_mode<synchronous>, transform_indices = @transform_10, window_bounds = array<i64: 1, 128>}, {pipeline_mode = #tpu.pipeline_mode<synchronous>, transform_indices = @transform_11, window_bounds = array<i64: 1, 128>}, {pipeline_mode = #tpu.pipeline_mode<synchronous>, transform_indices = @transform_12, window_bounds = array<i64: 1, 128>}, {transform_indices = @transform_13, window_bounds = array<i64: 1, 64, 128>}, {transform_indices = @transform_14, window_bounds = array<i64: 1, 64, 128>}]} {
    %c0_i32 = arith.constant 0 : i32
    %0 = arith.cmpi eq, %arg1, %c0_i32 : i32
    %1 = arith.extui %0 : i1 to i32
    %c0_i32_0 = arith.constant 0 : i32
    %2 = arith.cmpi ne, %1, %c0_i32_0 : i32
    scf.if %2 {
      %c0_49 = arith.constant 0 : index
      %c0_50 = arith.constant 0 : index
      %c0_51 = arith.constant 0 : index
      %114 = vector.load %arg2[%c0_49, %c0_50, %c0_51] : memref<1x128x128xf32, #tpu.memory_space<vmem>>, vector<1x128x128xf32>
      %115 = vector.shape_cast %114 : vector<1x128x128xf32> to vector<128x128xf32>
      %116 = arith.truncf %115 : vector<128x128xf32> to vector<128x128xbf16>
      %c0_52 = arith.constant 0 : index
      %c0_53 = arith.constant 0 : index
      %117 = vector.load %arg5[%c0_52, %c0_53] : memref<128x256xbf16, #tpu.memory_space<vmem>>, vector<128x256xbf16>
      %cst_54 = arith.constant dense<0.000000e+00> : vector<128x256xf32>
      %118 = tpu.matmul %116, %117, %cst_54 {dimension_numbers = #tpu.dot_dimension_numbers<[1], [0], [0], [1], [0, 0, 1, 1], [], []>} : vector<128x128xbf16>, vector<128x256xbf16>, vector<128x256xf32> -> vector<128x256xf32>
      %c0_55 = arith.constant 0 : index
      %c0_56 = arith.constant 0 : index
      %119 = vector.load %arg6[%c0_55, %c0_56] : memref<1x256xf32, #tpu.memory_space<vmem>>, vector<1x256xf32>
      %120 = vector.shape_cast %119 : vector<1x256xf32> to vector<256xf32>
      %121 = vector.shape_cast %120 : vector<256xf32> to vector<1x256xf32>
      %122 = vector.broadcast %121 : vector<1x256xf32> to vector<128x256xf32>
      %123 = arith.addf %118, %122 : vector<128x256xf32>
      %124 = vector.extract_strided_slice %123 {offsets = [0, 0], sizes = [128, 128], strides = [1, 1]} : vector<128x256xf32> to vector<128x128xf32>
      %125 = arith.truncf %124 : vector<128x128xf32> to vector<128x128xbf16>
      %c0_57 = arith.constant 0 : index
      %c0_58 = arith.constant 0 : index
      %126 = vector.load %arg17[%c0_57, %c0_58] : memref<128x128xbf16, #tpu.memory_space<vmem>>, vector<128x128xbf16>
      tpu.vector_store %arg17[%c0_57, %c0_58], %125 {strides = array<i32>} : memref<128x128xbf16, #tpu.memory_space<vmem>>, vector<128x128xbf16>,
      %127 = vector.extract_strided_slice %123 {offsets = [0, 128], sizes = [128, 128], strides = [1, 1]} : vector<128x256xf32> to vector<128x128xf32>
      %128 = arith.truncf %127 : vector<128x128xf32> to vector<128x128xbf16>
      %c0_59 = arith.constant 0 : index
      %c0_60 = arith.constant 0 : index
      %129 = vector.load %arg18[%c0_59, %c0_60] : memref<128x128xbf16, #tpu.memory_space<vmem>>, vector<128x128xbf16>
      tpu.vector_store %arg18[%c0_59, %c0_60], %128 {strides = array<i32>} : memref<128x128xbf16, #tpu.memory_space<vmem>>, vector<128x128xbf16>,
    } else {
    }
    %c64_i32 = arith.constant 64 : i32
    %3 = arith.muli %arg1, %c64_i32 : i32
    %4 = tpu.assume_multiple %3, 64 : i32
    %c0 = arith.constant 0 : index
    %5 = arith.index_cast %4 : i32 to index
    %c0_1 = arith.constant 0 : index
    %6 = vector.load %arg2[%c0, %5, %c0_1] : memref<1x128x128xf32, #tpu.memory_space<vmem>>, vector<1x64x128xf32>
    %7 = vector.shape_cast %6 : vector<1x64x128xf32> to vector<64x128xf32>
    %8 = arith.truncf %7 : vector<64x128xf32> to vector<64x128xbf16>
    %c0_2 = arith.constant 0 : index
    %c0_3 = arith.constant 0 : index
    %9 = vector.load %arg3[%c0_2, %c0_3] : memref<128x128xbf16, #tpu.memory_space<vmem>>, vector<128x128xbf16>
    %cst = arith.constant dense<0.000000e+00> : vector<64x128xf32>
    %10 = tpu.matmul %8, %9, %cst {dimension_numbers = #tpu.dot_dimension_numbers<[1], [0], [0], [1], [0, 0, 1, 1], [], []>} : vector<64x128xbf16>, vector<128x128xbf16>, vector<64x128xf32> -> vector<64x128xf32>
    %c0_4 = arith.constant 0 : index
    %c0_5 = arith.constant 0 : index
    %11 = vector.load %arg4[%c0_4, %c0_5] : memref<1x128xf32, #tpu.memory_space<vmem>>, vector<1x128xf32>
    %12 = vector.shape_cast %11 : vector<1x128xf32> to vector<128xf32>
    %13 = vector.shape_cast %12 : vector<128xf32> to vector<1x128xf32>
    %14 = vector.broadcast %13 : vector<1x128xf32> to vector<64x128xf32>
    %15 = arith.addf %10, %14 : vector<64x128xf32>
    %16 = arith.truncf %15 : vector<64x128xf32> to vector<64x128xbf16>
    %c0_6 = arith.constant 0 : index
    %c0_7 = arith.constant 0 : index
    %17 = vector.load %arg17[%c0_6, %c0_7] : memref<128x128xbf16, #tpu.memory_space<vmem>>, vector<128x128xbf16>
    %cst_8 = arith.constant dense<0.000000e+00> : vector<64x128xf32>
    %18 = tpu.matmul %16, %17, %cst_8 {dimension_numbers = #tpu.dot_dimension_numbers<[1], [1], [0], [0], [0, 0, 1, 0], [], []>} : vector<64x128xbf16>, vector<128x128xbf16>, vector<64x128xf32> -> vector<64x128xf32>
    %cst_9 = arith.constant dense<0xFF800000> : vector<64xf32>
    %19 = vector.multi_reduction <maximumf>, %18, %cst_9 [1] : vector<64x128xf32> to vector<64xf32>
    %20 = vector.shape_cast %19 : vector<64xf32> to vector<64x1xf32>
    %21 = vector.broadcast %20 : vector<64x1xf32> to vector<64x128xf32>
    %22 = arith.subf %18, %21 : vector<64x128xf32>
    %23 = math.exp %22 : vector<64x128xf32>
    %cst_10 = arith.constant dense<0.000000e+00> : vector<64xf32>
    %24 = vector.multi_reduction <add>, %23, %cst_10 [1] : vector<64x128xf32> to vector<64xf32>
    %25 = vector.shape_cast %24 : vector<64xf32> to vector<64x1xf32>
    %26 = tpu.reciprocal %25 : vector<64x1xf32> -> vector<64x1xf32>
    %27 = vector.broadcast %26 : vector<64x1xf32> to vector<64x128xf32>
    %28 = arith.mulf %23, %27 : vector<64x128xf32>
    %29 = arith.truncf %28 : vector<64x128xf32> to vector<64x128xbf16>
    %c0_11 = arith.constant 0 : index
    %c0_12 = arith.constant 0 : index
    %30 = vector.load %arg18[%c0_11, %c0_12] : memref<128x128xbf16, #tpu.memory_space<vmem>>, vector<128x128xbf16>
    %cst_13 = arith.constant dense<0.000000e+00> : vector<64x128xf32>
    %31 = tpu.matmul %29, %30, %cst_13 {dimension_numbers = #tpu.dot_dimension_numbers<[1], [0], [0], [1], [0, 0, 1, 1], [], []>} : vector<64x128xbf16>, vector<128x128xbf16>, vector<64x128xf32> -> vector<64x128xf32>
    %32 = arith.addf %7, %31 : vector<64x128xf32>
    %c0_14 = arith.constant 0 : index
    %c0_15 = arith.constant 0 : index
    %33 = vector.load %arg7[%c0_14, %c0_15] : memref<1x128xf32, #tpu.memory_space<vmem>>, vector<1x128xf32>
    %34 = vector.shape_cast %33 : vector<1x128xf32> to vector<128xf32>
    %c0_16 = arith.constant 0 : index
    %c0_17 = arith.constant 0 : index
    %35 = vector.load %arg8[%c0_16, %c0_17] : memref<1x128xf32, #tpu.memory_space<vmem>>, vector<1x128xf32>
    %36 = vector.shape_cast %35 : vector<1x128xf32> to vector<128xf32>
    %cst_18 = arith.constant dense<0.000000e+00> : vector<64xf32>
    %37 = vector.multi_reduction <add>, %32, %cst_18 [1] : vector<64x128xf32> to vector<64xf32>
    %38 = vector.shape_cast %37 : vector<64xf32> to vector<64x1xf32>
    %cst_19 = arith.constant 1.280000e+02 : f32
    %39 = vector.broadcast %cst_19 : f32 to vector<64x1xf32>
    %40 = arith.divf %38, %39 : vector<64x1xf32>
    %41 = vector.broadcast %40 : vector<64x1xf32> to vector<64x128xf32>
    %42 = arith.subf %32, %41 : vector<64x128xf32>
    %43 = arith.mulf %42, %42 : vector<64x128xf32>
    %cst_20 = arith.constant dense<0.000000e+00> : vector<64xf32>
    %44 = vector.multi_reduction <add>, %43, %cst_20 [1] : vector<64x128xf32> to vector<64xf32>
    %45 = vector.shape_cast %44 : vector<64xf32> to vector<64x1xf32>
    %cst_21 = arith.constant 1.280000e+02 : f32
    %46 = vector.broadcast %cst_21 : f32 to vector<64x1xf32>
    %47 = arith.divf %45, %46 : vector<64x1xf32>
    %cst_22 = arith.constant 9.99999974E-6 : f32
    %48 = vector.broadcast %cst_22 : f32 to vector<64x1xf32>
    %49 = arith.addf %47, %48 : vector<64x1xf32>
    %50 = math.rsqrt %49 : vector<64x1xf32>
    %51 = vector.broadcast %40 : vector<64x1xf32> to vector<64x128xf32>
    %52 = arith.subf %32, %51 : vector<64x128xf32>
    %53 = vector.broadcast %50 : vector<64x1xf32> to vector<64x128xf32>
    %54 = arith.mulf %52, %53 : vector<64x128xf32>
    %55 = vector.shape_cast %34 : vector<128xf32> to vector<1x128xf32>
    %56 = vector.broadcast %55 : vector<1x128xf32> to vector<64x128xf32>
    %57 = arith.mulf %54, %56 : vector<64x128xf32>
    %58 = vector.shape_cast %36 : vector<128xf32> to vector<1x128xf32>
    %59 = vector.broadcast %58 : vector<1x128xf32> to vector<64x128xf32>
    %60 = arith.addf %57, %59 : vector<64x128xf32>
    %61 = arith.truncf %60 : vector<64x128xf32> to vector<64x128xbf16>
    %c0_23 = arith.constant 0 : index
    %c0_24 = arith.constant 0 : index
    %62 = vector.load %arg9[%c0_23, %c0_24] : memref<128x256xbf16, #tpu.memory_space<vmem>>, vector<128x256xbf16>
    %cst_25 = arith.constant dense<0.000000e+00> : vector<64x256xf32>
    %63 = tpu.matmul %61, %62, %cst_25 {dimension_numbers = #tpu.dot_dimension_numbers<[1], [0], [0], [1], [0, 0, 1, 1], [], []>} : vector<64x128xbf16>, vector<128x256xbf16>, vector<64x256xf32> -> vector<64x256xf32>
    %c0_26 = arith.constant 0 : index
    %c0_27 = arith.constant 0 : index
    %64 = vector.load %arg10[%c0_26, %c0_27] : memref<1x256xf32, #tpu.memory_space<vmem>>, vector<1x256xf32>
    %65 = vector.shape_cast %64 : vector<1x256xf32> to vector<256xf32>
    %66 = vector.shape_cast %65 : vector<256xf32> to vector<1x256xf32>
    %67 = vector.broadcast %66 : vector<1x256xf32> to vector<64x256xf32>
    %68 = arith.addf %63, %67 : vector<64x256xf32>
    %cst_28 = arith.constant 0.000000e+00 : f32
    %69 = vector.broadcast %cst_28 : f32 to vector<64x256xf32>
    %70 = arith.maximumf %68, %69 : vector<64x256xf32>
    %71 = arith.truncf %70 : vector<64x256xf32> to vector<64x256xbf16>
    %c0_29 = arith.constant 0 : index
    %c0_30 = arith.constant 0 : index
    %72 = vector.load %arg11[%c0_29, %c0_30] : memref<256x128xbf16, #tpu.memory_space<vmem>>, vector<256x128xbf16>
    %cst_31 = arith.constant dense<0.000000e+00> : vector<64x128xf32>
    %73 = tpu.matmul %71, %72, %cst_31 {dimension_numbers = #tpu.dot_dimension_numbers<[1], [0], [0], [1], [0, 0, 1, 1], [], []>} : vector<64x256xbf16>, vector<256x128xbf16>, vector<64x128xf32> -> vector<64x128xf32>
    %c0_32 = arith.constant 0 : index
    %c0_33 = arith.constant 0 : index
    %74 = vector.load %arg12[%c0_32, %c0_33] : memref<1x128xf32, #tpu.memory_space<vmem>>, vector<1x128xf32>
    %75 = vector.shape_cast %74 : vector<1x128xf32> to vector<128xf32>
    %76 = vector.shape_cast %75 : vector<128xf32> to vector<1x128xf32>
    %77 = vector.broadcast %76 : vector<1x128xf32> to vector<64x128xf32>
    %78 = arith.addf %73, %77 : vector<64x128xf32>
    %79 = arith.addf %60, %78 : vector<64x128xf32>
    %c0_34 = arith.constant 0 : index
    %c0_35 = arith.constant 0 : index
    %80 = vector.load %arg13[%c0_34, %c0_35] : memref<1x128xf32, #tpu.memory_space<vmem>>, vector<1x128xf32>
    %81 = vector.shape_cast %80 : vector<1x128xf32> to vector<128xf32>
    %c0_36 = arith.constant 0 : index
    %c0_37 = arith.constant 0 : index
    %82 = vector.load %arg14[%c0_36, %c0_37] : memref<1x128xf32, #tpu.memory_space<vmem>>, vector<1x128xf32>
    %83 = vector.shape_cast %82 : vector<1x128xf32> to vector<128xf32>
    %cst_38 = arith.constant dense<0.000000e+00> : vector<64xf32>
    %84 = vector.multi_reduction <add>, %79, %cst_38 [1] : vector<64x128xf32> to vector<64xf32>
    %85 = vector.shape_cast %84 : vector<64xf32> to vector<64x1xf32>
    %cst_39 = arith.constant 1.280000e+02 : f32
    %86 = vector.broadcast %cst_39 : f32 to vector<64x1xf32>
    %87 = arith.divf %85, %86 : vector<64x1xf32>
    %88 = vector.broadcast %87 : vector<64x1xf32> to vector<64x128xf32>
    %89 = arith.subf %79, %88 : vector<64x128xf32>
    %90 = arith.mulf %89, %89 : vector<64x128xf32>
    %cst_40 = arith.constant dense<0.000000e+00> : vector<64xf32>
    %91 = vector.multi_reduction <add>, %90, %cst_40 [1] : vector<64x128xf32> to vector<64xf32>
    %92 = vector.shape_cast %91 : vector<64xf32> to vector<64x1xf32>
    %cst_41 = arith.constant 1.280000e+02 : f32
    %93 = vector.broadcast %cst_41 : f32 to vector<64x1xf32>
    %94 = arith.divf %92, %93 : vector<64x1xf32>
    %cst_42 = arith.constant 9.99999974E-6 : f32
    %95 = vector.broadcast %cst_42 : f32 to vector<64x1xf32>
    %96 = arith.addf %94, %95 : vector<64x1xf32>
    %97 = math.rsqrt %96 : vector<64x1xf32>
    %98 = vector.broadcast %87 : vector<64x1xf32> to vector<64x128xf32>
    %99 = arith.subf %79, %98 : vector<64x128xf32>
    %100 = vector.broadcast %97 : vector<64x1xf32> to vector<64x128xf32>
    %101 = arith.mulf %99, %100 : vector<64x128xf32>
    %102 = vector.shape_cast %81 : vector<128xf32> to vector<1x128xf32>
    %103 = vector.broadcast %102 : vector<1x128xf32> to vector<64x128xf32>
    %104 = arith.mulf %101, %103 : vector<64x128xf32>
    %105 = vector.shape_cast %83 : vector<128xf32> to vector<1x128xf32>
    %106 = vector.broadcast %105 : vector<1x128xf32> to vector<64x128xf32>
    %107 = arith.addf %104, %106 : vector<64x128xf32>
    %c0_43 = arith.constant 0 : index
    %c0_44 = arith.constant 0 : index
    %c0_45 = arith.constant 0 : index
    %108 = vector.load %arg15[%c0_43, %c0_44, %c0_45] : memref<1x64x128xf32, #tpu.memory_space<vmem>>, vector<1x64x128xf32>
    %109 = vector.shape_cast %108 : vector<1x64x128xf32> to vector<64x128xf32>
    %110 = vector.shape_cast %107 : vector<64x128xf32> to vector<1x64x128xf32>
    tpu.vector_store %arg15[%c0_43, %c0_44, %c0_45], %110 {strides = array<i32>} : memref<1x64x128xf32, #tpu.memory_space<vmem>>, vector<1x64x128xf32>,
    %c0_46 = arith.constant 0 : index
    %c0_47 = arith.constant 0 : index
    %c0_48 = arith.constant 0 : index
    %111 = vector.load %arg16[%c0_46, %c0_47, %c0_48] : memref<1x64x128xf32, #tpu.memory_space<vmem>>, vector<1x64x128xf32>
    %112 = vector.shape_cast %111 : vector<1x64x128xf32> to vector<64x128xf32>
    %113 = vector.shape_cast %28 : vector<64x128xf32> to vector<1x64x128xf32>
    tpu.vector_store %arg16[%c0_46, %c0_47, %c0_48], %113 {strides = array<i32>} : memref<1x64x128xf32, #tpu.memory_space<vmem>>, vector<1x64x128xf32>,
    return
  }
  func.func @transform_0(%arg0: i32, %arg1: i32) -> (i32, i32, i32) {
    %c0_i32 = arith.constant 0 : i32
    %c0_i32_0 = arith.constant 0 : i32
    %c0_i32_1 = arith.constant 0 : i32
    return %arg0, %c0_i32, %c0_i32_0 : i32, i32, i32
  }
  func.func @transform_1(%arg0: i32, %arg1: i32) -> (i32, i32) {
    %c0_i32 = arith.constant 0 : i32
    %c0_i32_0 = arith.constant 0 : i32
    %c0_i32_1 = arith.constant 0 : i32
    return %c0_i32, %c0_i32_0 : i32, i32
  }
  func.func @transform_2(%arg0: i32, %arg1: i32) -> (i32, i32) {
    %c0_i32 = arith.constant 0 : i32
    %c0_i32_0 = arith.constant 0 : i32
    %c0_i32_1 = arith.constant 0 : i32
    return %c0_i32, %c0_i32_0 : i32, i32
  }
  func.func @transform_3(%arg0: i32, %arg1: i32) -> (i32, i32) {
    %c0_i32 = arith.constant 0 : i32
    %c0_i32_0 = arith.constant 0 : i32
    %c0_i32_1 = arith.constant 0 : i32
    return %c0_i32, %c0_i32_0 : i32, i32
  }
  func.func @transform_4(%arg0: i32, %arg1: i32) -> (i32, i32) {
    %c0_i32 = arith.constant 0 : i32
    %c0_i32_0 = arith.constant 0 : i32
    %c0_i32_1 = arith.constant 0 : i32
    return %c0_i32, %c0_i32_0 : i32, i32
  }
  func.func @transform_5(%arg0: i32, %arg1: i32) -> (i32, i32) {
    %c0_i32 = arith.constant 0 : i32
    %c0_i32_0 = arith.constant 0 : i32
    %c0_i32_1 = arith.constant 0 : i32
    return %c0_i32, %c0_i32_0 : i32, i32
  }
  func.func @transform_6(%arg0: i32, %arg1: i32) -> (i32, i32) {
    %c0_i32 = arith.constant 0 : i32
    %c0_i32_0 = arith.constant 0 : i32
    %c0_i32_1 = arith.constant 0 : i32
    return %c0_i32, %c0_i32_0 : i32, i32
  }
  func.func @transform_7(%arg0: i32, %arg1: i32) -> (i32, i32) {
    %c0_i32 = arith.constant 0 : i32
    %c0_i32_0 = arith.constant 0 : i32
    %c0_i32_1 = arith.constant 0 : i32
    return %c0_i32, %c0_i32_0 : i32, i32
  }
  func.func @transform_8(%arg0: i32, %arg1: i32) -> (i32, i32) {
    %c0_i32 = arith.constant 0 : i32
    %c0_i32_0 = arith.constant 0 : i32
    %c0_i32_1 = arith.constant 0 : i32
    return %c0_i32, %c0_i32_0 : i32, i32
  }
  func.func @transform_9(%arg0: i32, %arg1: i32) -> (i32, i32) {
    %c0_i32 = arith.constant 0 : i32
    %c0_i32_0 = arith.constant 0 : i32
    %c0_i32_1 = arith.constant 0 : i32
    return %c0_i32, %c0_i32_0 : i32, i32
  }
  func.func @transform_10(%arg0: i32, %arg1: i32) -> (i32, i32) {
    %c0_i32 = arith.constant 0 : i32
    %c0_i32_0 = arith.constant 0 : i32
    %c0_i32_1 = arith.constant 0 : i32
    return %c0_i32, %c0_i32_0 : i32, i32
  }
  func.func @transform_11(%arg0: i32, %arg1: i32) -> (i32, i32) {
    %c0_i32 = arith.constant 0 : i32
    %c0_i32_0 = arith.constant 0 : i32
    %c0_i32_1 = arith.constant 0 : i32
    return %c0_i32, %c0_i32_0 : i32, i32
  }
  func.func @transform_12(%arg0: i32, %arg1: i32) -> (i32, i32) {
    %c0_i32 = arith.constant 0 : i32
    %c0_i32_0 = arith.constant 0 : i32
    %c0_i32_1 = arith.constant 0 : i32
    return %c0_i32, %c0_i32_0 : i32, i32
  }
  func.func @transform_13(%arg0: i32, %arg1: i32) -> (i32, i32, i32) {
    %c0_i32 = arith.constant 0 : i32
    %c0_i32_0 = arith.constant 0 : i32
    return %arg0, %arg1, %c0_i32 : i32, i32, i32
  }
  func.func @transform_14(%arg0: i32, %arg1: i32) -> (i32, i32, i32) {
    %c0_i32 = arith.constant 0 : i32
    %c0_i32_0 = arith.constant 0 : i32
    return %arg0, %arg1, %c0_i32 : i32, i32, i32
  }
}

</mosaic_0001>

<llo_original>
// kernel: tpu_custom_call.1
$region0: #{tpu_custom_call.1}
  #allocation0 [shape = 'u32[]', space=smem, size = 0x4, offset = 0x4, fixed_abs, tag = 'smem constant byte address 0x4 - core index']
  #allocation1 [shape = 'u32[144,128]{1,0:T(1,128)}', space=vmem, size = 0x12000, scoped, tag = 'internal scratch']
  #allocation2 [shape = 'bf16[128,128]{1,0:T(16,128)(2,1)}', space=vmem, size = 0x8000, scoped, tag = 'scratch operand']
  #allocation3 [shape = 'bf16[128,128]{1,0:T(16,128)(2,1)}', space=vmem, size = 0x8000, scoped, tag = 'scratch operand']
  %s0 = inlined_call_operand.hbm [shape: f32[2,128,128], index: 0, kind: input, shape index: {}]
  %s1 = inlined_call_operand.hbm [shape: bf16[128,128], index: 1, kind: input, shape index: {}]
  %s2 = inlined_call_operand.vmem [shape: f32[1,128], index: 2, kind: input, shape index: {}]
  %s3 = inlined_call_operand.hbm [shape: bf16[128,256], index: 3, kind: input, shape index: {}]
  %s4 = inlined_call_operand.vmem [shape: f32[1,256], index: 4, kind: input, shape index: {}]
  %s5 = inlined_call_operand.vmem [shape: f32[1,128], index: 5, kind: input, shape index: {}]
  %s6 = inlined_call_operand.vmem [shape: f32[1,128], index: 6, kind: input, shape index: {}]
  %s7 = inlined_call_operand.hbm [shape: bf16[128,256], index: 7, kind: input, shape index: {}]
  %s8 = inlined_call_operand.vmem [shape: f32[1,256], index: 8, kind: input, shape index: {}]
  %s9 = inlined_call_operand.hbm [shape: bf16[256,128], index: 9, kind: input, shape index: {}]
  %s10 = inlined_call_operand.vmem [shape: f32[1,128], index: 10, kind: input, shape index: {}]
  %s11 = inlined_call_operand.vmem [shape: f32[1,128], index: 11, kind: input, shape index: {}]
  %s12 = inlined_call_operand.vmem [shape: f32[1,128], index: 12, kind: input, shape index: {}]
  %s13 = inlined_call_operand.hbm [shape: f32[2,128,128], index: 13, kind: output, shape index: {0}]
  %s14 = inlined_call_operand.hbm [shape: f32[2,128,128], index: 14, kind: output, shape index: {1}]
  %15 = xla_tuple %s13, %s14
  %s16 = sld [smem:[#allocation0]]
  $region117: #{tpu_custom_call.1} parent=0
    _
  %s18 = ssub.s32 1, %s16
  %s19 = scalar_select 0, %s18, %s16
  $region1: #{tpu_custom_call.1} parent=0
    #allocation4 [shape = 'u8[131072]{0}', space=vmem, size = 0x20000, scoped, tag = 'input window, operand 0']
    #allocation5 [shape = 's32[2]{0}', space=sflag, size = 0x8, scoped, tag = 'scoped memory for tpu_custom_call.1']
    #allocation6 [shape = 's32[2]{0}', space=sflag, size = 0x8, scoped, tag = 'scoped memory for tpu_custom_call.1']
    #allocation7 [shape = 'u8[32768]{0}', space=vmem, size = 0x8000, scoped, tag = 'input window, operand 1, single buffered']
    #allocation8 [shape = 's32[1]{0}', space=sflag, size = 0x4, scoped, tag = 'scoped memory for tpu_custom_call.1']
    #allocation9 [shape = 'u8[65536]{0}', space=vmem, size = 0x10000, scoped, tag = 'input window, operand 3, single buffered']
    #allocation10 [shape = 'u8[65536]{0}', space=vmem, size = 0x10000, scoped, tag = 'input window, operand 7, single buffered']
    #allocation11 [shape = 's32[1]{0}', space=sflag, size = 0x4, scoped, tag = 'scoped memory for tpu_custom_call.1']
    #allocation12 [shape = 'u8[65536]{0}', space=vmem, size = 0x10000, scoped, tag = 'input window, operand 9, single buffered']
    #allocation13 [shape = 'u8[65536]{0}', space=vmem, size = 0x10000, scoped, tag = 'output window, operand 0']
    #allocation14 [shape = 'u8[65536]{0}', space=vmem, size = 0x10000, scoped, tag = 'output window, operand 1']
    #allocation15 [shape = 's32[2]{0}', space=sflag, size = 0x8, scoped, tag = 'scoped memory for tpu_custom_call.1']
    %20 = vsyncpa [#allocation5], 0
    %s21 = scalar_lea.sflag [#allocation5], 1
    %22 = vsyncpa %s21, 0
    %23 = vsyncpa [#allocation8], 0
    %24 = vsyncpa [#allocation11], 0
    %25 = vsyncpa [#allocation6], 0
    %s26 = scalar_lea.sflag [#allocation6], 1
    %27 = vsyncpa %s26, 0
    %28 = vsyncpa [#allocation15], 0
    %s29 = scalar_lea.sflag [#allocation15], 1
    %30 = vsyncpa %s29, 0
    loop: start=0, step=1, limit=6
    $region2: #{tpu_custom_call.1} parent=1 // loop_pre_header
      _
    $region3: #{tpu_custom_call.1} parent=1 // loop_header
      %s32 = sphi 0, %s36
      %p33 = scmp.ge.s32.totalorder %s32, 6
      %s39 = sphi 0, %s51
      %s40 = sphi 0, %s47
      %s41 = sphi 0, %s39
      %s42 = sphi 0, %s40
      %s43 = sphi 0, %s41
      %s44 = sphi 0, %s42
      %s54 = sphi 0, %s56
      %s57 = sphi 0, %s54
      %s58 = sphi 0, %s57
      %s74 = sphi 0, %s58
      %s78 = sphi 0, %s78
      %s80 = sphi 0, %s78
      %s81 = sphi 0, %s80
      %s95 = sphi 0, %s81
      %s99 = sphi 0, %s99
      %s101 = sphi 0, %s99
      %s102 = sphi 0, %s101
      %s116 = sphi 0, %s102
      %s120 = sphi 0, %s120
      %s122 = sphi 0, %s120
      %s123 = sphi 0, %s122
      %s137 = sphi 0, %s123
      %s141 = sphi 0, %s141
      %s143 = sphi 0, %s141
      %s144 = sphi 0, %s143
      %s158 = sphi 0, %s144
      %s162 = sphi 0, %s162
      %s164 = sphi 0, %s162
      %s165 = sphi 0, %s164
      %s179 = sphi 0, %s165
      %s183 = sphi 0, %s183
      %s185 = sphi 0, %s183
      %s186 = sphi 0, %s185
      %s200 = sphi 0, %s186
      %s204 = sphi 0, %s204
      %s206 = sphi 0, %s204
      %s207 = sphi 0, %s206
      %s221 = sphi 0, %s207
      %s225 = sphi 0, %s225
      %s227 = sphi 0, %s225
      %s228 = sphi 0, %s227
      %s242 = sphi 0, %s228
      %s246 = sphi 0, %s246
      %s248 = sphi 0, %s246
      %s249 = sphi 0, %s248
      %s263 = sphi 0, %s249
      %s267 = sphi 0, %s267
      %s269 = sphi 0, %s267
      %s270 = sphi 0, %s269
      %s284 = sphi 0, %s270
      %s288 = sphi 0, %s288
      %s290 = sphi 0, %s288
      %s291 = sphi 0, %s290
      %s305 = sphi 0, %s291
      %s309 = sphi 0, %s309
      %s311 = sphi 0, %s309
      %s312 = sphi 0, %s311
      %s326 = sphi 0, %s312
      %s334 = sphi 0, %s336
      %s337 = sphi 0, %s334
      %s338 = sphi 0, %s337
      %s354 = sphi 0, %s338
      %s362 = sphi 0, %s364
      %s365 = sphi 0, %s362
      %s366 = sphi 0, %s365
      %s382 = sphi 0, %s366
    $region4: #{tpu_custom_call.1} parent=1 // loop_header_branch
      %35 = sbr.rel (%p33) target = $region8
    $region5: #{tpu_custom_call.1} parent=1 // loop_body
      %s37 = ssub.s32 %s32, 1
      %s38 = ssub.s32 %s32, 2
      %s45 = sadd.s32 1, %s40
      %p46 = scmp.ge.s32.totalorder %s45, 2
      %s47 = scalar_select %p46, 0, %s45
      %s48 = sadd.s32 1, %s39
      %s49 = scalar_select %p46, %s48, %s39
      %p50 = scmp.ge.s32.totalorder %s49, 2
      %s51 = scalar_select %p50, 0, %s49
      %s52 = ssub.s32 %s39, %s51
      %p53 = scmp.eq.s32.totalorder %s52, 0
      %s55 = sadd.s32 %s54, 1
      %s56 = scalar_select %p53, %s54, %s55
      %p59 = pneg %p53
      %p60 = scmp.eq.s32.totalorder %s32, 3
      %p61 = por %p59, %p60
      %p62 = scmp.ne.s32.totalorder %s54, %s57
      %p63 = scmp.eq.s32.totalorder %s32, 0
      %p64 = por %p62, %p63
      %p65 = scmp.ne.s32.totalorder %s54, %s57
      %p66 = scmp.eq.s32.totalorder %s37, 3
      %p67 = por %p65, %p66
      %p68 = scmp.ne.s32.totalorder %s57, %s58
      %p69 = scmp.eq.s32.totalorder %s37, 0
      %p70 = por %p68, %p69
      %p71 = scmp.ne.s32.totalorder %s57, %s58
      %p72 = scmp.eq.s32.totalorder %s38, 3
      %p73 = por %p71, %p72
      %p75 = scmp.ne.s32.totalorder %s58, %s74
      %p76 = scmp.eq.s32.totalorder %s38, 0
      %p77 = por %p75, %p76
      %s79 = sadd.s32 %s78, 1
      %p82 = scmp.eq.s32.totalorder %s32, 3
      %p83 = scmp.ne.s32.totalorder %s78, %s80
      %p84 = scmp.eq.s32.totalorder %s32, 0
      %p85 = por %p83, %p84
      %p86 = scmp.ne.s32.totalorder %s78, %s80
      %p87 = scmp.eq.s32.totalorder %s37, 3
      %p88 = por %p86, %p87
      %p89 = scmp.ne.s32.totalorder %s80, %s81
      %p90 = scmp.eq.s32.totalorder %s37, 0
      %p91 = por %p89, %p90
      %p92 = scmp.ne.s32.totalorder %s80, %s81
      %p93 = scmp.eq.s32.totalorder %s38, 3
      %p94 = por %p92, %p93
      %p96 = scmp.ne.s32.totalorder %s81, %s95
      %p97 = scmp.eq.s32.totalorder %s38, 0
      %p98 = por %p96, %p97
      %s100 = sadd.s32 %s99, 1
      %p103 = scmp.eq.s32.totalorder %s32, 3
      %p104 = scmp.ne.s32.totalorder %s99, %s101
      %p105 = scmp.eq.s32.totalorder %s32, 0
      %p106 = por %p104, %p105
      %p107 = scmp.ne.s32.totalorder %s99, %s101
      %p108 = scmp.eq.s32.totalorder %s37, 3
      %p109 = por %p107, %p108
      %p110 = scmp.ne.s32.totalorder %s101, %s102
      %p111 = scmp.eq.s32.totalorder %s37, 0
      %p112 = por %p110, %p111
      %p113 = scmp.ne.s32.totalorder %s101, %s102
      %p114 = scmp.eq.s32.totalorder %s38, 3
      %p115 = por %p113, %p114
      %p117 = scmp.ne.s32.totalorder %s102, %s116
      %p118 = scmp.eq.s32.totalorder %s38, 0
      %p119 = por %p117, %p118
      %s121 = sadd.s32 %s120, 1
      %p124 = scmp.eq.s32.totalorder %s32, 3
      %p125 = scmp.ne.s32.totalorder %s120, %s122
      %p126 = scmp.eq.s32.totalorder %s32, 0
      %p127 = por %p125, %p126
      %p128 = scmp.ne.s32.totalorder %s120, %s122
      %p129 = scmp.eq.s32.totalorder %s37, 3
      %p130 = por %p128, %p129
      %p131 = scmp.ne.s32.totalorder %s122, %s123
      %p132 = scmp.eq.s32.totalorder %s37, 0
      %p133 = por %p131, %p132
      %p134 = scmp.ne.s32.totalorder %s122, %s123
      %p135 = scmp.eq.s32.totalorder %s38, 3
      %p136 = por %p134, %p135
      %p138 = scmp.ne.s32.totalorder %s123, %s137
      %p139 = scmp.eq.s32.totalorder %s38, 0
      %p140 = por %p138, %p139
      %s142 = sadd.s32 %s141, 1
      %p145 = scmp.eq.s32.totalorder %s32, 3
      %p146 = scmp.ne.s32.totalorder %s141, %s143
      %p147 = scmp.eq.s32.totalorder %s32, 0
      %p148 = por %p146, %p147
      %p149 = scmp.ne.s32.totalorder %s141, %s143
      %p150 = scmp.eq.s32.totalorder %s37, 3
      %p151 = por %p149, %p150
      %p152 = scmp.ne.s32.totalorder %s143, %s144
      %p153 = scmp.eq.s32.totalorder %s37, 0
      %p154 = por %p152, %p153
      %p155 = scmp.ne.s32.totalorder %s143, %s144
      %p156 = scmp.eq.s32.totalorder %s38, 3
      %p157 = por %p155, %p156
      %p159 = scmp.ne.s32.totalorder %s144, %s158
      %p160 = scmp.eq.s32.totalorder %s38, 0
      %p161 = por %p159, %p160
      %s163 = sadd.s32 %s162, 1
      %p166 = scmp.eq.s32.totalorder %s32, 3
      %p167 = scmp.ne.s32.totalorder %s162, %s164
      %p168 = scmp.eq.s32.totalorder %s32, 0
      %p169 = por %p167, %p168
      %p170 = scmp.ne.s32.totalorder %s162, %s164
      %p171 = scmp.eq.s32.totalorder %s37, 3
      %p172 = por %p170, %p171
      %p173 = scmp.ne.s32.totalorder %s164, %s165
      %p174 = scmp.eq.s32.totalorder %s37, 0
      %p175 = por %p173, %p174
      %p176 = scmp.ne.s32.totalorder %s164, %s165
      %p177 = scmp.eq.s32.totalorder %s38, 3
      %p178 = por %p176, %p177
      %p180 = scmp.ne.s32.totalorder %s165, %s179
      %p181 = scmp.eq.s32.totalorder %s38, 0
      %p182 = por %p180, %p181
      %s184 = sadd.s32 %s183, 1
      %p187 = scmp.eq.s32.totalorder %s32, 3
      %p188 = scmp.ne.s32.totalorder %s183, %s185
      %p189 = scmp.eq.s32.totalorder %s32, 0
      %p190 = por %p188, %p189
      %p191 = scmp.ne.s32.totalorder %s183, %s185
      %p192 = scmp.eq.s32.totalorder %s37, 3
      %p193 = por %p191, %p192
      %p194 = scmp.ne.s32.totalorder %s185, %s186
      %p195 = scmp.eq.s32.totalorder %s37, 0
      %p196 = por %p194, %p195
      %p197 = scmp.ne.s32.totalorder %s185, %s186
      %p198 = scmp.eq.s32.totalorder %s38, 3
      %p199 = por %p197, %p198
      %p201 = scmp.ne.s32.totalorder %s186, %s200
      %p202 = scmp.eq.s32.totalorder %s38, 0
      %p203 = por %p201, %p202
      %s205 = sadd.s32 %s204, 1
      %p208 = scmp.eq.s32.totalorder %s32, 3
      %p209 = scmp.ne.s32.totalorder %s204, %s206
      %p210 = scmp.eq.s32.totalorder %s32, 0
      %p211 = por %p209, %p210
      %p212 = scmp.ne.s32.totalorder %s204, %s206
      %p213 = scmp.eq.s32.totalorder %s37, 3
      %p214 = por %p212, %p213
      %p215 = scmp.ne.s32.totalorder %s206, %s207
      %p216 = scmp.eq.s32.totalorder %s37, 0
      %p217 = por %p215, %p216
      %p218 = scmp.ne.s32.totalorder %s206, %s207
      %p219 = scmp.eq.s32.totalorder %s38, 3
      %p220 = por %p218, %p219
      %p222 = scmp.ne.s32.totalorder %s207, %s221
      %p223 = scmp.eq.s32.totalorder %s38, 0
      %p224 = por %p222, %p223
      %s226 = sadd.s32 %s225, 1
      %p229 = scmp.eq.s32.totalorder %s32, 3
      %p230 = scmp.ne.s32.totalorder %s225, %s227
      %p231 = scmp.eq.s32.totalorder %s32, 0
      %p232 = por %p230, %p231
      %p233 = scmp.ne.s32.totalorder %s225, %s227
      %p234 = scmp.eq.s32.totalorder %s37, 3
      %p235 = por %p233, %p234
      %p236 = scmp.ne.s32.totalorder %s227, %s228
      %p237 = scmp.eq.s32.totalorder %s37, 0
      %p238 = por %p236, %p237
      %p239 = scmp.ne.s32.totalorder %s227, %s228
      %p240 = scmp.eq.s32.totalorder %s38, 3
      %p241 = por %p239, %p240
      %p243 = scmp.ne.s32.totalorder %s228, %s242
      %p244 = scmp.eq.s32.totalorder %s38, 0
      %p245 = por %p243, %p244
      %s247 = sadd.s32 %s246, 1
      %p250 = scmp.eq.s32.totalorder %s32, 3
      %p251 = scmp.ne.s32.totalorder %s246, %s248
      %p252 = scmp.eq.s32.totalorder %s32, 0
      %p253 = por %p251, %p252
      %p254 = scmp.ne.s32.totalorder %s246, %s248
      %p255 = scmp.eq.s32.totalorder %s37, 3
      %p256 = por %p254, %p255
      %p257 = scmp.ne.s32.totalorder %s248, %s249
      %p258 = scmp.eq.s32.totalorder %s37, 0
      %p259 = por %p257, %p258
      %p260 = scmp.ne.s32.totalorder %s248, %s249
      %p261 = scmp.eq.s32.totalorder %s38, 3
      %p262 = por %p260, %p261
      %p264 = scmp.ne.s32.totalorder %s249, %s263
      %p265 = scmp.eq.s32.totalorder %s38, 0
      %p266 = por %p264, %p265
      %s268 = sadd.s32 %s267, 1
      %p271 = scmp.eq.s32.totalorder %s32, 3
      %p272 = scmp.ne.s32.totalorder %s267, %s269
      %p273 = scmp.eq.s32.totalorder %s32, 0
      %p274 = por %p272, %p273
      %p275 = scmp.ne.s32.totalorder %s267, %s269
      %p276 = scmp.eq.s32.totalorder %s37, 3
      %p277 = por %p275, %p276
      %p278 = scmp.ne.s32.totalorder %s269, %s270
      %p279 = scmp.eq.s32.totalorder %s37, 0
      %p280 = por %p278, %p279
      %p281 = scmp.ne.s32.totalorder %s269, %s270
      %p282 = scmp.eq.s32.totalorder %s38, 3
      %p283 = por %p281, %p282
      %p285 = scmp.ne.s32.totalorder %s270, %s284
      %p286 = scmp.eq.s32.totalorder %s38, 0
      %p287 = por %p285, %p286
      %s289 = sadd.s32 %s288, 1
      %p292 = scmp.eq.s32.totalorder %s32, 3
      %p293 = scmp.ne.s32.totalorder %s288, %s290
      %p294 = scmp.eq.s32.totalorder %s32, 0
      %p295 = por %p293, %p294
      %p296 = scmp.ne.s32.totalorder %s288, %s290
      %p297 = scmp.eq.s32.totalorder %s37, 3
      %p298 = por %p296, %p297
      %p299 = scmp.ne.s32.totalorder %s290, %s291
      %p300 = scmp.eq.s32.totalorder %s37, 0
      %p301 = por %p299, %p300
      %p302 = scmp.ne.s32.totalorder %s290, %s291
      %p303 = scmp.eq.s32.totalorder %s38, 3
      %p304 = por %p302, %p303
      %p306 = scmp.ne.s32.totalorder %s291, %s305
      %p307 = scmp.eq.s32.totalorder %s38, 0
      %p308 = por %p306, %p307
      %s310 = sadd.s32 %s309, 1
      %p313 = scmp.eq.s32.totalorder %s32, 3
      %p314 = scmp.ne.s32.totalorder %s309, %s311
      %p315 = scmp.eq.s32.totalorder %s32, 0
      %p316 = por %p314, %p315
      %p317 = scmp.ne.s32.totalorder %s309, %s311
      %p318 = scmp.eq.s32.totalorder %s37, 3
      %p319 = por %p317, %p318
      %p320 = scmp.ne.s32.totalorder %s311, %s312
      %p321 = scmp.eq.s32.totalorder %s37, 0
      %p322 = por %p320, %p321
      %p323 = scmp.ne.s32.totalorder %s311, %s312
      %p324 = scmp.eq.s32.totalorder %s38, 3
      %p325 = por %p323, %p324
      %p327 = scmp.ne.s32.totalorder %s312, %s326
      %p328 = scmp.eq.s32.totalorder %s38, 0
      %p329 = por %p327, %p328
      %s330 = ssub.s32 %s39, %s51
      %s331 = ssub.s32 %s40, %s47
      %s332 = sor.u32 %s330, %s331
      %p333 = scmp.eq.s32.totalorder %s332, 0
      %s335 = sadd.s32 %s334, 1
      %s336 = scalar_select %p333, %s334, %s335
      %p339 = pneg %p333
      %p340 = scmp.eq.s32.totalorder %s32, 3
      %p341 = por %p339, %p340
      %p342 = scmp.ne.s32.totalorder %s334, %s337
      %p343 = scmp.eq.s32.totalorder %s32, 0
      %p344 = por %p342, %p343
      %p345 = scmp.ne.s32.totalorder %s334, %s337
      %p346 = scmp.eq.s32.totalorder %s37, 3
      %p347 = por %p345, %p346
      %p348 = scmp.ne.s32.totalorder %s337, %s338
      %p349 = scmp.eq.s32.totalorder %s37, 0
      %p350 = por %p348, %p349
      %p351 = scmp.ne.s32.totalorder %s337, %s338
      %p352 = scmp.eq.s32.totalorder %s38, 3
      %p353 = por %p351, %p352
      %p355 = scmp.ne.s32.totalorder %s338, %s354
      %p356 = scmp.eq.s32.totalorder %s38, 0
      %p357 = por %p355, %p356
      %s358 = ssub.s32 %s39, %s51
      %s359 = ssub.s32 %s40, %s47
      %s360 = sor.u32 %s358, %s359
      %p361 = scmp.eq.s32.totalorder %s360, 0
      %s363 = sadd.s32 %s362, 1
      %s364 = scalar_select %p361, %s362, %s363
      %p367 = pneg %p361
      %p368 = scmp.eq.s32.totalorder %s32, 3
      %p369 = por %p367, %p368
      %p370 = scmp.ne.s32.totalorder %s362, %s365
      %p371 = scmp.eq.s32.totalorder %s32, 0
      %p372 = por %p370, %p371
      %p373 = scmp.ne.s32.totalorder %s362, %s365
      %p374 = scmp.eq.s32.totalorder %s37, 3
      %p375 = por %p373, %p374
      %p376 = scmp.ne.s32.totalorder %s365, %s366
      %p377 = scmp.eq.s32.totalorder %s37, 0
      %p378 = por %p376, %p377
      %p379 = scmp.ne.s32.totalorder %s365, %s366
      %p380 = scmp.eq.s32.totalorder %s38, 3
      %p381 = por %p379, %p380
      %p383 = scmp.ne.s32.totalorder %s366, %s382
      %p384 = scmp.eq.s32.totalorder %s38, 0
      %p385 = por %p383, %p384
      %p386 = scmp.le.s32.totalorder 1, %s32
      %p387 = scmp.lt.s32.totalorder %s32, 5
      %p388 = pnand %p386, %p387
      %p389 = pneg %p388
      // Predicated region
      $region9: #{tpu_custom_call.1} parent=5 // pred_check
        _
      $region10: #{tpu_custom_call.1} parent=5 // pred_check_branch
        %391 = sbr.rel (%p388) target = $region12
      $region11: #{tpu_custom_call.1} parent=5 // pred_region
        %s392 = ssub.s32 %s32, 1
        // Predicated region
        $region13: #{tpu_custom_call.1} parent=11 // pred_check
          %p393 = pneg %p91
        $region14: #{tpu_custom_call.1} parent=11 // pred_check_branch
          %395 = sbr.rel (%p393) target = $region16
        $region15: #{tpu_custom_call.1} parent=11 // pred_region
          %s397 = ssub.s32 1024, 1024
          %398 = vsyncadd [#allocation8], %s397
          %s399 = sshll.u32 [#allocation7], 4
          %s400 = int_to_ptr.vmem [resolvable:$true] %s399
          %405 = dma.hbm_to_vmem [thread:$0]  %s1, 1024, %s400, [#allocation8], 64, 64, 4
        $region16: #{tpu_custom_call.1} parent=11 // pred_fallthru
          _
        // Predicated region
        $region17: #{tpu_custom_call.1} parent=11 // pred_check
          %p406 = pneg %p112
        $region18: #{tpu_custom_call.1} parent=11 // pred_check_branch
          %408 = sbr.rel (%p406) target = $region20
        $region19: #{tpu_custom_call.1} parent=11 // pred_region
          _
        $region20: #{tpu_custom_call.1} parent=11 // pred_fallthru
          _
        // Predicated region
        $region21: #{tpu_custom_call.1} parent=11 // pred_check
          %p409 = pneg %p133
        $region22: #{tpu_custom_call.1} parent=11 // pred_check_branch
          %411 = sbr.rel (%p409) target = $region24
        $region23: #{tpu_custom_call.1} parent=11 // pred_region
          %s413 = ssub.s32 2048, 2048
          %414 = vsyncadd [#allocation8], %s413
          %s415 = sshll.u32 [#allocation9], 4
          %s416 = int_to_ptr.vmem [resolvable:$true] %s415
          %421 = dma.hbm_to_vmem [thread:$0]  %s3, 2048, %s416, [#allocation8], 128, 128, 8
        $region24: #{tpu_custom_call.1} parent=11 // pred_fallthru
          _
        // Predicated region
        $region25: #{tpu_custom_call.1} parent=11 // pred_check
          %p422 = pneg %p154
        $region26: #{tpu_custom_call.1} parent=11 // pred_check_branch
          %424 = sbr.rel (%p422) target = $region28
        $region27: #{tpu_custom_call.1} parent=11 // pred_region
          _
        $region28: #{tpu_custom_call.1} parent=11 // pred_fallthru
          _
        // Predicated region
        $region29: #{tpu_custom_call.1} parent=11 // pred_check
          %p425 = pneg %p175
        $region30: #{tpu_custom_call.1} parent=11 // pred_check_branch
          %427 = sbr.rel (%p425) target = $region32
        $region31: #{tpu_custom_call.1} parent=11 // pred_region
          _
        $region32: #{tpu_custom_call.1} parent=11 // pred_fallthru
          _
        // Predicated region
        $region33: #{tpu_custom_call.1} parent=11 // pred_check
          %p428 = pneg %p196
        $region34: #{tpu_custom_call.1} parent=11 // pred_check_branch
          %430 = sbr.rel (%p428) target = $region36
        $region35: #{tpu_custom_call.1} parent=11 // pred_region
          _
        $region36: #{tpu_custom_call.1} parent=11 // pred_fallthru
          _
        // Predicated region
        $region37: #{tpu_custom_call.1} parent=11 // pred_check
          %p431 = pneg %p217
        $region38: #{tpu_custom_call.1} parent=11 // pred_check_branch
          %433 = sbr.rel (%p431) target = $region40
        $region39: #{tpu_custom_call.1} parent=11 // pred_region
          %s435 = ssub.s32 2048, 2048
          %436 = vsyncadd [#allocation11], %s435
          %s437 = sshll.u32 [#allocation10], 4
          %s438 = int_to_ptr.vmem [resolvable:$true] %s437
          %443 = dma.hbm_to_vmem [thread:$0]  %s7, 2048, %s438, [#allocation11], 128, 128, 8
        $region40: #{tpu_custom_call.1} parent=11 // pred_fallthru
          _
        // Predicated region
        $region41: #{tpu_custom_call.1} parent=11 // pred_check
          %p444 = pneg %p238
        $region42: #{tpu_custom_call.1} parent=11 // pred_check_branch
          %446 = sbr.rel (%p444) target = $region44
        $region43: #{tpu_custom_call.1} parent=11 // pred_region
          _
        $region44: #{tpu_custom_call.1} parent=11 // pred_fallthru
          _
        // Predicated region
        $region45: #{tpu_custom_call.1} parent=11 // pred_check
          %p447 = pneg %p259
        $region46: #{tpu_custom_call.1} parent=11 // pred_check_branch
          %449 = sbr.rel (%p447) target = $region48
        $region47: #{tpu_custom_call.1} parent=11 // pred_region
          %s451 = ssub.s32 2048, 2048
          %452 = vsyncadd [#allocation11], %s451
          %s453 = sshll.u32 [#allocation12], 4
          %s454 = int_to_ptr.vmem [resolvable:$true] %s453
          %459 = dma.hbm_to_vmem [thread:$0]  %s9, 2048, %s454, [#allocation11], 64, 64, 4
        $region48: #{tpu_custom_call.1} parent=11 // pred_fallthru
          _
        // Predicated region
        $region49: #{tpu_custom_call.1} parent=11 // pred_check
          %p460 = pneg %p280
        $region50: #{tpu_custom_call.1} parent=11 // pred_check_branch
          %462 = sbr.rel (%p460) target = $region52
        $region51: #{tpu_custom_call.1} parent=11 // pred_region
          _
        $region52: #{tpu_custom_call.1} parent=11 // pred_fallthru
          _
        // Predicated region
        $region53: #{tpu_custom_call.1} parent=11 // pred_check
          %p463 = pneg %p301
        $region54: #{tpu_custom_call.1} parent=11 // pred_check_branch
          %465 = sbr.rel (%p463) target = $region56
        $region55: #{tpu_custom_call.1} parent=11 // pred_region
          _
        $region56: #{tpu_custom_call.1} parent=11 // pred_fallthru
          _
        // Predicated region
        $region57: #{tpu_custom_call.1} parent=11 // pred_check
          %p466 = pneg %p322
        $region58: #{tpu_custom_call.1} parent=11 // pred_check_branch
          %468 = sbr.rel (%p466) target = $region60
        $region59: #{tpu_custom_call.1} parent=11 // pred_region
          _
        $region60: #{tpu_custom_call.1} parent=11 // pred_fallthru
          _
      $region12: #{tpu_custom_call.1} parent=5 // pred_fallthru
        _
      %p469 = scmp.lt.s32.totalorder %s32, 4
      // Predicated region
      $region61: #{tpu_custom_call.1} parent=5 // pred_check
        %p470 = pneg %p469
      $region62: #{tpu_custom_call.1} parent=5 // pred_check_branch
        %472 = sbr.rel (%p470) target = $region64
      $region63: #{tpu_custom_call.1} parent=5 // pred_region
        // Predicated region
        $region65: #{tpu_custom_call.1} parent=63 // pred_check
          %p473 = pneg %p64
        $region66: #{tpu_custom_call.1} parent=63 // pred_check_branch
          %475 = sbr.rel (%p473) target = $region68
        $region67: #{tpu_custom_call.1} parent=63 // pred_region
          %s476 = sand.u32 %s54, 1
          %s477 = scalar_lea.sflag [#allocation5], %s476
          %s478 = sand.u32 %s54, 1
          %s479 = smul.addr %s478, 128
          %s480 = scalar_lea.vmem [#allocation4], %s479
          %s482 = ssub.s32 2048, 2048
          %483 = vsyncadd %s477, %s482
          %s484 = smul.addr %s39, 16
          %s485 = smul.addr %s484, 128
          %s486 = scalar_lea.hbm %s0, %s485
          %s487 = sshll.u32 %s480, 4
          %s488 = int_to_ptr.vmem [resolvable:$true] %s487
          %493 = dma.hbm_to_vmem [thread:$0]  %s486, 2048, %s488, %s477, 128, 128, 8
        $region68: #{tpu_custom_call.1} parent=63 // pred_fallthru
          _
      $region64: #{tpu_custom_call.1} parent=5 // pred_fallthru
        _
      %p494 = scmp.le.s32.totalorder 1, %s32
      %p495 = scmp.lt.s32.totalorder %s32, 5
      %p496 = pnand %p494, %p495
      %p497 = pneg %p496
      // Predicated region
      $region69: #{tpu_custom_call.1} parent=5 // pred_check
        _
      $region70: #{tpu_custom_call.1} parent=5 // pred_check_branch
        %499 = sbr.rel (%p496) target = $region72
      $region71: #{tpu_custom_call.1} parent=5 // pred_region
        %s500 = ssub.s32 %s32, 1
        %s501 = sand.u32 %s57, 1
        %s502 = scalar_lea.sflag [#allocation5], %s501
        %s503 = sand.u32 %s57, 1
        %s504 = smul.addr %s503, 128
        %s505 = scalar_lea.vmem [#allocation4], %s504
        // Predicated region
        $region73: #{tpu_custom_call.1} parent=71 // pred_check
          %p506 = pneg %p70
        $region74: #{tpu_custom_call.1} parent=71 // pred_check_branch
          %508 = sbr.rel (%p506) target = $region76
        $region75: #{tpu_custom_call.1} parent=71 // pred_region
          %509 = dma.done %s502, 2048
        $region76: #{tpu_custom_call.1} parent=71 // pred_fallthru
          _
        // Predicated region
        $region77: #{tpu_custom_call.1} parent=71 // pred_check
          %p510 = pneg %p91
        $region78: #{tpu_custom_call.1} parent=71 // pred_check_branch
          %512 = sbr.rel (%p510) target = $region80
        $region79: #{tpu_custom_call.1} parent=71 // pred_region
          %513 = dma.done [#allocation8], 1024
        $region80: #{tpu_custom_call.1} parent=71 // pred_fallthru
          _
        // Predicated region
        $region81: #{tpu_custom_call.1} parent=71 // pred_check
          %p514 = pneg %p133
        $region82: #{tpu_custom_call.1} parent=71 // pred_check_branch
          %516 = sbr.rel (%p514) target = $region84
        $region83: #{tpu_custom_call.1} parent=71 // pred_region
          %517 = dma.done [#allocation8], 2048
        $region84: #{tpu_custom_call.1} parent=71 // pred_fallthru
          _
        // Predicated region
        $region85: #{tpu_custom_call.1} parent=71 // pred_check
          %p518 = pneg %p217
        $region86: #{tpu_custom_call.1} parent=71 // pred_check_branch
          %520 = sbr.rel (%p518) target = $region88
        $region87: #{tpu_custom_call.1} parent=71 // pred_region
          %521 = dma.done [#allocation11], 2048
        $region88: #{tpu_custom_call.1} parent=71 // pred_fallthru
          _
        // Predicated region
        $region89: #{tpu_custom_call.1} parent=71 // pred_check
          %p522 = pneg %p259
        $region90: #{tpu_custom_call.1} parent=71 // pred_check_branch
          %524 = sbr.rel (%p522) target = $region92
        $region91: #{tpu_custom_call.1} parent=71 // pred_region
          %525 = dma.done [#allocation11], 2048
        $region92: #{tpu_custom_call.1} parent=71 // pred_fallthru
          _
        %s526 = sand.u32 %s57, 1
        %s527 = scalar_lea.sflag [#allocation5], %s526
        %s528 = sand.u32 %s57, 1
        %s529 = smul.addr %s528, 128
        %s530 = scalar_lea.vmem [#allocation4], %s529
        %p531 = pneg %p70
        %p532 = pneg %p67
        %p533 = pneg %p91
        %p534 = pneg %p88
        %p535 = pneg %p112
        %p536 = pneg %p109
        %p537 = pneg %p133
        %p538 = pneg %p130
        %p539 = pneg %p154
        %p540 = pneg %p151
        %p541 = pneg %p175
        %p542 = pneg %p172
        %p543 = pneg %p196
        %p544 = pneg %p193
        %p545 = pneg %p217
        %p546 = pneg %p214
        %p547 = pneg %p238
        %p548 = pneg %p235
        %p549 = pneg %p259
        %p550 = pneg %p256
        %p551 = pneg %p280
        %p552 = pneg %p277
        %p553 = pneg %p301
        %p554 = pneg %p298
        %p555 = pneg %p322
        %p556 = pneg %p319
        %p557 = pneg %p350
        %p558 = pneg %p347
        %s559 = sand.u32 %s337, 1
        %s560 = scalar_lea.sflag [#allocation6], %s559
        %s561 = sand.u32 %s337, 1
        %s562 = smul.addr %s561, 64
        %s563 = scalar_lea.vmem [#allocation13], %s562
        %p564 = pneg %p378
        %p565 = pneg %p375
        %s566 = sand.u32 %s365, 1
        %s567 = scalar_lea.sflag [#allocation15], %s566
        %s568 = sand.u32 %s365, 1
        %s569 = smul.addr %s568, 64
        %s570 = scalar_lea.vmem [#allocation14], %s569
        %s571 = smul.u32 8, %s42
        %s572 = smul.u32 8, %s42
        %p574 = scmp.eq.s32.totalorder %s42, 0
        // Predicated region
        $region93: #{tpu_custom_call.1} parent=71 // pred_check
          %p575 = pneg %p574
        $region94: #{tpu_custom_call.1} parent=71 // pred_check_branch
          %577 = sbr.rel (%p575) target = $region96
        $region95: #{tpu_custom_call.1} parent=71 // pred_region
          %v578 = vld [vmem:[%s505] sm:$0xff]
          %v579 = vld [vmem:[%s505 + $0x8] sm:$0xff]
          %v580 = vld [vmem:[%s505 + $0x10] sm:$0xff]
          %v581 = vld [vmem:[%s505 + $0x18] sm:$0xff]
          %v582 = vld [vmem:[%s505 + $0x20] sm:$0xff]
          %v583 = vld [vmem:[%s505 + $0x28] sm:$0xff]
          %v584 = vld [vmem:[%s505 + $0x30] sm:$0xff]
          %v585 = vld [vmem:[%s505 + $0x38] sm:$0xff]
          %v586 = vld [vmem:[%s505 + $0x40] sm:$0xff]
          %v587 = vld [vmem:[%s505 + $0x48] sm:$0xff]
          %v588 = vld [vmem:[%s505 + $0x50] sm:$0xff]
          %v589 = vld [vmem:[%s505 + $0x58] sm:$0xff]
          %v590 = vld [vmem:[%s505 + $0x60] sm:$0xff]
          %v591 = vld [vmem:[%s505 + $0x68] sm:$0xff]
          %v592 = vld [vmem:[%s505 + $0x70] sm:$0xff]
          %v593 = vld [vmem:[%s505 + $0x78] sm:$0xff]
          %v594 = vpack.c.bf16 %v579, %v578
          %v595 = vpack.c.bf16 %v581, %v580
          %v596 = vpack.c.bf16 %v583, %v582
          %v597 = vpack.c.bf16 %v585, %v584
          %v598 = vpack.c.bf16 %v587, %v586
          %v599 = vpack.c.bf16 %v589, %v588
          %v600 = vpack.c.bf16 %v591, %v590
          %v601 = vpack.c.bf16 %v593, %v592
          %v602 = vld [vmem:[#allocation9] sm:$0xff]
          %v603 = vld [vmem:[#allocation9 + $0x8] sm:$0xff]
          %v604 = vld [vmem:[#allocation9 + $0x10] sm:$0xff]
          %v605 = vld [vmem:[#allocation9 + $0x18] sm:$0xff]
          %v606 = vld [vmem:[#allocation9 + $0x20] sm:$0xff]
          %v607 = vld [vmem:[#allocation9 + $0x28] sm:$0xff]
          %v608 = vld [vmem:[#allocation9 + $0x30] sm:$0xff]
          %v609 = vld [vmem:[#allocation9 + $0x38] sm:$0xff]
          %v610 = vld [vmem:[#allocation9 + $0x40] sm:$0xff]
          %v611 = vld [vmem:[#allocation9 + $0x48] sm:$0xff]
          %v612 = vld [vmem:[#allocation9 + $0x50] sm:$0xff]
          %v613 = vld [vmem:[#allocation9 + $0x58] sm:$0xff]
          %v614 = vld [vmem:[#allocation9 + $0x60] sm:$0xff]
          %v615 = vld [vmem:[#allocation9 + $0x68] sm:$0xff]
          %v616 = vld [vmem:[#allocation9 + $0x70] sm:$0xff]
          %v617 = vld [vmem:[#allocation9 + $0x78] sm:$0xff]
          %v618 = vld [vmem:[%s4] sm:$0x3]
          %v620 = vlaneseq
          %v621 = vshrl.u32 %v620, 7
          %v622 = vsub.s32 0, %v621
          %v623 = vrot.slane %v618, %v622
          %v624 = vlaneseq
          %v625 = vshrl.u32 %v624, 7
          %v626 = vsub.s32 1, %v625
          %v627 = vrot.slane %v618, %v626
          %v646 = vunpack.c.l.b16 %v602
          %v647 = vunpack.c.h.b16 %v602
          %v648 = vunpack.c.l.b16 %v603
          %v649 = vunpack.c.h.b16 %v603
          %v650 = vunpack.c.l.b16 %v604
          %v651 = vunpack.c.h.b16 %v604
          %v652 = vunpack.c.l.b16 %v605
          %v653 = vunpack.c.h.b16 %v605
          %v654 = vunpack.c.l.b16 %v606
          %v655 = vunpack.c.h.b16 %v606
          %v656 = vunpack.c.l.b16 %v607
          %v657 = vunpack.c.h.b16 %v607
          %v658 = vunpack.c.l.b16 %v608
          %v659 = vunpack.c.h.b16 %v608
          %v660 = vunpack.c.l.b16 %v609
          %v661 = vunpack.c.h.b16 %v609
          %v662 = vunpack.c.l.b16 %v610
          %v663 = vunpack.c.h.b16 %v610
          %v664 = vunpack.c.l.b16 %v611
          %v665 = vunpack.c.h.b16 %v611
          %v666 = vunpack.c.l.b16 %v612
          %v667 = vunpack.c.h.b16 %v612
          %v668 = vunpack.c.l.b16 %v613
          %v669 = vunpack.c.h.b16 %v613
          %v670 = vunpack.c.l.b16 %v614
          %v671 = vunpack.c.h.b16 %v614
          %v672 = vunpack.c.l.b16 %v615
          %v673 = vunpack.c.h.b16 %v615
          %v674 = vunpack.c.l.b16 %v616
          %v675 = vunpack.c.h.b16 %v616
          %v676 = vunpack.c.l.b16 %v617
          %v677 = vunpack.c.h.b16 %v617
          %v678 = vpack.c.b16 %v648, %v646
          %v679 = vpack.c.b16 %v649, %v647
          %v680 = vpack.c.b16 %v652, %v650
          %v681 = vpack.c.b16 %v653, %v651
          %v682 = vpack.c.b16 %v656, %v654
          %v683 = vpack.c.b16 %v657, %v655
          %v684 = vpack.c.b16 %v660, %v658
          %v685 = vpack.c.b16 %v661, %v659
          %v686 = vpack.c.b16 %v664, %v662
          %v687 = vpack.c.b16 %v665, %v663
          %v688 = vpack.c.b16 %v668, %v666
          %v689 = vpack.c.b16 %v669, %v667
          %v690 = vpack.c.b16 %v672, %v670
          %v691 = vpack.c.b16 %v673, %v671
          %v692 = vpack.c.b16 %v676, %v674
          %v693 = vpack.c.b16 %v677, %v675
          %710 = vmatprep.subr.bf16.mxu0 %v679
          %711 = vmatpush1.bf16.msra.mxu0 %v678
          %712 = vmatprep.subr.bf16.mxu0 %v681
          %713 = vmatpush1.bf16.msra.mxu0 %v680
          %714 = vmatprep.subr.bf16.mxu0 %v683
          %715 = vmatpush1.bf16.msra.mxu0 %v682
          %716 = vmatprep.subr.bf16.mxu0 %v685
          %717 = vmatpush1.bf16.msra.mxu0 %v684
          %718 = vmatprep.subr.bf16.mxu0 %v687
          %719 = vmatpush1.bf16.msra.mxu0 %v686
          %720 = vmatprep.subr.bf16.mxu0 %v689
          %721 = vmatpush1.bf16.msra.mxu0 %v688
          %722 = vmatprep.subr.bf16.mxu0 %v691
          %723 = vmatpush1.bf16.msra.mxu0 %v690
          %724 = vmatprep.subr.bf16.mxu0 %v693
          %725 = vmatpush1.bf16.msra.mxu0 %v692
          %726 = vmatprep.subr.bf16.mxu0 0
          %727 = vmatpush1.bf16.msra.mxu0 0
          %728 = vmatprep.subr.bf16.mxu0 0
          %729 = vmatpush1.bf16.msra.mxu0 0
          %730 = vmatprep.subr.bf16.mxu0 0
          %731 = vmatpush1.bf16.msra.mxu0 0
          %732 = vmatprep.subr.bf16.mxu0 0
          %733 = vmatpush1.bf16.msra.mxu0 0
          %734 = vmatprep.subr.bf16.mxu0 0
          %735 = vmatpush1.bf16.msra.mxu0 0
          %736 = vmatprep.subr.bf16.mxu0 0
          %737 = vmatpush1.bf16.msra.mxu0 0
          %738 = vmatprep.subr.bf16.mxu0 0
          %739 = vmatpush1.bf16.msra.mxu0 0
          %740 = vmatprep.subr.bf16.mxu0 0
          %741 = vmatpush1.bf16.msra.mxu0 0
          %742 = vmatprep.mubr.bf16.mxu0 0
          %743 = vmatmul.mubr.bf16.gmra.mrb[0].mxu0 %v594
          %v744 = vpop.f32.mrb[0].mxu0
          %v745 = vadd.f32 %v623, %v744
          %v746 = vpop.f32.mrb[0].mxu0
          %v747 = vadd.f32 %v627, %v746
          %v748 = vpop.f32.mrb[0].mxu0
          %v749 = vadd.f32 %v623, %v748
          %v750 = vpop.f32.mrb[0].mxu0
          %v751 = vadd.f32 %v627, %v750
          %752 = vmatprep.mubr.bf16.mxu0 0
          %753 = vmatmul.mubr.bf16.gmra.mrb[0].mxu0 %v595
          %v754 = vpop.f32.mrb[0].mxu0
          %v755 = vadd.f32 %v623, %v754
          %v756 = vpop.f32.mrb[0].mxu0
          %v757 = vadd.f32 %v627, %v756
          %v758 = vpop.f32.mrb[0].mxu0
          %v759 = vadd.f32 %v623, %v758
          %v760 = vpop.f32.mrb[0].mxu0
          %v761 = vadd.f32 %v627, %v760
          %762 = vmatprep.mubr.bf16.mxu0 0
          %763 = vmatmul.mubr.bf16.gmra.mrb[0].mxu0 %v596
          %v764 = vpop.f32.mrb[0].mxu0
          %v765 = vadd.f32 %v623, %v764
          %v766 = vpop.f32.mrb[0].mxu0
          %v767 = vadd.f32 %v627, %v766
          %v768 = vpop.f32.mrb[0].mxu0
          %v769 = vadd.f32 %v623, %v768
          %v770 = vpop.f32.mrb[0].mxu0
          %v771 = vadd.f32 %v627, %v770
          %772 = vmatprep.mubr.bf16.mxu0 0
          %773 = vmatmul.mubr.bf16.gmra.mrb[0].mxu0 %v597
          %v774 = vpop.f32.mrb[0].mxu0
          %v775 = vadd.f32 %v623, %v774
          %v776 = vpop.f32.mrb[0].mxu0
          %v777 = vadd.f32 %v627, %v776
          %v778 = vpop.f32.mrb[0].mxu0
          %v779 = vadd.f32 %v623, %v778
          %v780 = vpop.f32.mrb[0].mxu0
          %v781 = vadd.f32 %v627, %v780
          %782 = vmatprep.mubr.bf16.mxu0 0
          %783 = vmatmul.mubr.bf16.gmra.mrb[0].mxu0 %v598
          %v784 = vpop.f32.mrb[0].mxu0
          %v785 = vadd.f32 %v623, %v784
          %v786 = vpop.f32.mrb[0].mxu0
          %v787 = vadd.f32 %v627, %v786
          %v788 = vpop.f32.mrb[0].mxu0
          %v789 = vadd.f32 %v623, %v788
          %v790 = vpop.f32.mrb[0].mxu0
          %v791 = vadd.f32 %v627, %v790
          %792 = vmatprep.mubr.bf16.mxu0 0
          %793 = vmatmul.mubr.bf16.gmra.mrb[0].mxu0 %v599
          %v794 = vpop.f32.mrb[0].mxu0
          %v795 = vadd.f32 %v623, %v794
          %v796 = vpop.f32.mrb[0].mxu0
          %v797 = vadd.f32 %v627, %v796
          %v798 = vpop.f32.mrb[0].mxu0
          %v799 = vadd.f32 %v623, %v798
          %v800 = vpop.f32.mrb[0].mxu0
          %v801 = vadd.f32 %v627, %v800
          %802 = vmatprep.mubr.bf16.mxu0 0
          %803 = vmatmul.mubr.bf16.gmra.mrb[0].mxu0 %v600
          %v804 = vpop.f32.mrb[0].mxu0
          %v805 = vadd.f32 %v623, %v804
          %v806 = vpop.f32.mrb[0].mxu0
          %v807 = vadd.f32 %v627, %v806
          %v808 = vpop.f32.mrb[0].mxu0
          %v809 = vadd.f32 %v623, %v808
          %v810 = vpop.f32.mrb[0].mxu0
          %v811 = vadd.f32 %v627, %v810
          %812 = vmatprep.mubr.bf16.mxu0 0
          %813 = vmatmul.mubr.bf16.gmra.mrb[0].mxu0 %v601
          %v814 = vpop.f32.mrb[0].mxu0
          %v815 = vadd.f32 %v623, %v814
          %v816 = vpop.f32.mrb[0].mxu0
          %v817 = vadd.f32 %v627, %v816
          %v818 = vpop.f32.mrb[0].mxu0
          %v819 = vadd.f32 %v623, %v818
          %v820 = vpop.f32.mrb[0].mxu0
          %v821 = vadd.f32 %v627, %v820
          %822 = vdwg.mxu0
          %v823 = vpack.c.bf16 %v749, %v745
          %v824 = vpack.c.bf16 %v759, %v755
          %v825 = vpack.c.bf16 %v769, %v765
          %v826 = vpack.c.bf16 %v779, %v775
          %v827 = vpack.c.bf16 %v789, %v785
          %v828 = vpack.c.bf16 %v799, %v795
          %v829 = vpack.c.bf16 %v809, %v805
          %v830 = vpack.c.bf16 %v819, %v815
          %831 = vst [vmem:[#allocation2] sm:$0xff] %v823
          %832 = vst [vmem:[#allocation2 + $0x8] sm:$0xff] %v824
          %833 = vst [vmem:[#allocation2 + $0x10] sm:$0xff] %v825
          %834 = vst [vmem:[#allocation2 + $0x18] sm:$0xff] %v826
          %835 = vst [vmem:[#allocation2 + $0x20] sm:$0xff] %v827
          %836 = vst [vmem:[#allocation2 + $0x28] sm:$0xff] %v828
          %837 = vst [vmem:[#allocation2 + $0x30] sm:$0xff] %v829
          %838 = vst [vmem:[#allocation2 + $0x38] sm:$0xff] %v830
          %v839 = vpack.c.bf16 %v751, %v747
          %v840 = vpack.c.bf16 %v761, %v757
          %v841 = vpack.c.bf16 %v771, %v767
          %v842 = vpack.c.bf16 %v781, %v777
          %v843 = vpack.c.bf16 %v791, %v787
          %v844 = vpack.c.bf16 %v801, %v797
          %v845 = vpack.c.bf16 %v811, %v807
          %v846 = vpack.c.bf16 %v821, %v817
          %847 = vst [vmem:[#allocation3] sm:$0xff] %v839
          %848 = vst [vmem:[#allocation3 + $0x8] sm:$0xff] %v840
          %849 = vst [vmem:[#allocation3 + $0x10] sm:$0xff] %v841
          %850 = vst [vmem:[#allocation3 + $0x18] sm:$0xff] %v842
          %851 = vst [vmem:[#allocation3 + $0x20] sm:$0xff] %v843
          %852 = vst [vmem:[#allocation3 + $0x28] sm:$0xff] %v844
          %853 = vst [vmem:[#allocation3 + $0x30] sm:$0xff] %v845
          %854 = vst [vmem:[#allocation3 + $0x38] sm:$0xff] %v846
        $region96: #{tpu_custom_call.1} parent=71 // pred_fallthru
          _
        %s855 = smul.u32 %s42, 64
        %s856 = scalar_lea.vmem %s505, %s855 [#allocation4]
        %v857 = vld [vmem:[%s856] sm:$0xff]
        %v858 = vld [vmem:[%s856 + $0x8] sm:$0xff]
        %v859 = vld [vmem:[%s856 + $0x10] sm:$0xff]
        %v860 = vld [vmem:[%s856 + $0x18] sm:$0xff]
        %v861 = vld [vmem:[%s856 + $0x20] sm:$0xff]
        %v862 = vld [vmem:[%s856 + $0x28] sm:$0xff]
        %v863 = vld [vmem:[%s856 + $0x30] sm:$0xff]
        %v864 = vld [vmem:[%s856 + $0x38] sm:$0xff]
        %v865 = vpack.c.bf16 %v858, %v857
        %v866 = vpack.c.bf16 %v860, %v859
        %v867 = vpack.c.bf16 %v862, %v861
        %v868 = vpack.c.bf16 %v864, %v863
        %v869 = vld [vmem:[#allocation7] sm:$0xf]
        %v870 = vld [vmem:[#allocation7 + $0x4] sm:$0xf]
        %v871 = vld [vmem:[#allocation7 + $0x8] sm:$0xf]
        %v872 = vld [vmem:[#allocation7 + $0xc] sm:$0xf]
        %v873 = vld [vmem:[#allocation7 + $0x10] sm:$0xf]
        %v874 = vld [vmem:[#allocation7 + $0x14] sm:$0xf]
        %v875 = vld [vmem:[#allocation7 + $0x18] sm:$0xf]
        %v876 = vld [vmem:[#allocation7 + $0x1c] sm:$0xf]
        %v877 = vld [vmem:[#allocation7 + $0x20] sm:$0xf]
        %v878 = vld [vmem:[#allocation7 + $0x24] sm:$0xf]
        %v879 = vld [vmem:[#allocation7 + $0x28] sm:$0xf]
        %v880 = vld [vmem:[#allocation7 + $0x2c] sm:$0xf]
        %v881 = vld [vmem:[#allocation7 + $0x30] sm:$0xf]
        %v882 = vld [vmem:[#allocation7 + $0x34] sm:$0xf]
        %v883 = vld [vmem:[#allocation7 + $0x38] sm:$0xf]
        %v884 = vld [vmem:[#allocation7 + $0x3c] sm:$0xf]
        %v885 = vld [vmem:[%s2] sm:$0x1]
        %v887 = vlaneseq
        %v888 = vshrl.u32 %v887, 7
        %v889 = vsub.s32 0, %v888
        %v890 = vrot.slane %v885, %v889
        %v908 = vunpack.c.l.b16 %v869
        %v909 = vunpack.c.l.b16 %v870
        %v910 = vunpack.c.l.b16 %v871
        %v911 = vunpack.c.l.b16 %v872
        %v912 = vunpack.c.l.b16 %v873
        %v913 = vunpack.c.l.b16 %v874
        %v914 = vunpack.c.l.b16 %v875
        %v915 = vunpack.c.l.b16 %v876
        %v916 = vunpack.c.l.b16 %v877
        %v917 = vunpack.c.l.b16 %v878
        %v918 = vunpack.c.l.b16 %v879
        %v919 = vunpack.c.l.b16 %v880
        %v920 = vunpack.c.l.b16 %v881
        %v921 = vunpack.c.l.b16 %v882
        %v922 = vunpack.c.l.b16 %v883
        %v923 = vunpack.c.l.b16 %v884
        %v924 = vpack.c.b16 %v909, %v908
        %v925 = vpack.c.b16 %v911, %v910
        %v926 = vpack.c.b16 %v913, %v912
        %v927 = vpack.c.b16 %v915, %v914
        %v928 = vpack.c.b16 %v917, %v916
        %v929 = vpack.c.b16 %v919, %v918
        %v930 = vpack.c.b16 %v921, %v920
        %v931 = vpack.c.b16 %v923, %v922
        %940 = vmatprep.subr.bf16.mxu0 0
        %941 = vmatpush1.bf16.msra.mxu0 %v924
        %942 = vmatprep.subr.bf16.mxu0 0
        %943 = vmatpush1.bf16.msra.mxu0 %v925
        %944 = vmatprep.subr.bf16.mxu0 0
        %945 = vmatpush1.bf16.msra.mxu0 %v926
        %946 = vmatprep.subr.bf16.mxu0 0
        %947 = vmatpush1.bf16.msra.mxu0 %v927
        %948 = vmatprep.subr.bf16.mxu0 0
        %949 = vmatpush1.bf16.msra.mxu0 %v928
        %950 = vmatprep.subr.bf16.mxu0 0
        %951 = vmatpush1.bf16.msra.mxu0 %v929
        %952 = vmatprep.subr.bf16.mxu0 0
        %953 = vmatpush1.bf16.msra.mxu0 %v930
        %954 = vmatprep.subr.bf16.mxu0 0
        %955 = vmatpush1.bf16.msra.mxu0 %v931
        %956 = vmatprep.subr.bf16.mxu0 0
        %957 = vmatpush1.bf16.msra.mxu0 0
        %958 = vmatprep.subr.bf16.mxu0 0
        %959 = vmatpush1.bf16.msra.mxu0 0
        %960 = vmatprep.subr.bf16.mxu0 0
        %961 = vmatpush1.bf16.msra.mxu0 0
        %962 = vmatprep.subr.bf16.mxu0 0
        %963 = vmatpush1.bf16.msra.mxu0 0
        %964 = vmatprep.subr.bf16.mxu0 0
        %965 = vmatpush1.bf16.msra.mxu0 0
        %966 = vmatprep.subr.bf16.mxu0 0
        %967 = vmatpush1.bf16.msra.mxu0 0
        %968 = vmatprep.subr.bf16.mxu0 0
        %969 = vmatpush1.bf16.msra.mxu0 0
        %970 = vmatprep.subr.bf16.mxu0 0
        %971 = vmatpush1.bf16.msra.mxu0 0
        %972 = vmatprep.mubr.bf16.mxu0 0
        %973 = vmatmul.mubr.bf16.gmra.mrb[0].mxu0 %v865
        %v974 = vpop.f32.mrb[0].mxu0
        %v975 = vadd.f32 %v890, %v974
        %v976 = vpop.f32.mrb[0].mxu0
        %v977 = vpop.f32.mrb[0].mxu0
        %v978 = vadd.f32 %v890, %v977
        %v979 = vpop.f32.mrb[0].mxu0
        %980 = vmatprep.mubr.bf16.mxu0 0
        %981 = vmatmul.mubr.bf16.gmra.mrb[0].mxu0 %v866
        %v982 = vpop.f32.mrb[0].mxu0
        %v983 = vadd.f32 %v890, %v982
        %v984 = vpop.f32.mrb[0].mxu0
        %v985 = vpop.f32.mrb[0].mxu0
        %v986 = vadd.f32 %v890, %v985
        %v987 = vpop.f32.mrb[0].mxu0
        %988 = vmatprep.mubr.bf16.mxu0 0
        %989 = vmatmul.mubr.bf16.gmra.mrb[0].mxu0 %v867
        %v990 = vpop.f32.mrb[0].mxu0
        %v991 = vadd.f32 %v890, %v990
        %v992 = vpop.f32.mrb[0].mxu0
        %v993 = vpop.f32.mrb[0].mxu0
        %v994 = vadd.f32 %v890, %v993
        %v995 = vpop.f32.mrb[0].mxu0
        %996 = vmatprep.mubr.bf16.mxu0 0
        %997 = vmatmul.mubr.bf16.gmra.mrb[0].mxu0 %v868
        %v998 = vpop.f32.mrb[0].mxu0
        %v999 = vadd.f32 %v890, %v998
        %v1000 = vpop.f32.mrb[0].mxu0
        %v1001 = vpop.f32.mrb[0].mxu0
        %v1002 = vadd.f32 %v890, %v1001
        %v1003 = vpop.f32.mrb[0].mxu0
        %1004 = vdwg.mxu0
        %v1005 = vpack.c.bf16 %v978, %v975
        %v1006 = vpack.c.bf16 %v986, %v983
        %v1007 = vpack.c.bf16 %v994, %v991
        %v1008 = vpack.c.bf16 %v1002, %v999
        %v1009 = vld [vmem:[#allocation2] sm:$0xff]
        %v1010 = vld [vmem:[#allocation2 + $0x8] sm:$0xff]
        %v1011 = vld [vmem:[#allocation2 + $0x10] sm:$0xff]
        %v1012 = vld [vmem:[#allocation2 + $0x18] sm:$0xff]
        %v1013 = vld [vmem:[#allocation2 + $0x20] sm:$0xff]
        %v1014 = vld [vmem:[#allocation2 + $0x28] sm:$0xff]
        %v1015 = vld [vmem:[#allocation2 + $0x30] sm:$0xff]
        %v1016 = vld [vmem:[#allocation2 + $0x38] sm:$0xff]
        %1017 = vmatprep.subr.bf16.mxu0 0
        %1018 = vmatpush1.bf16.xpose.msra.mxu0 %v1009
        %1019 = vmatprep.subr.bf16.mxu0 0
        %1020 = vmatpush1.bf16.xpose.msra.mxu0 %v1010
        %1021 = vmatprep.subr.bf16.mxu0 0
        %1022 = vmatpush1.bf16.xpose.msra.mxu0 %v1011
        %1023 = vmatprep.subr.bf16.mxu0 0
        %1024 = vmatpush1.bf16.xpose.msra.mxu0 %v1012
        %1025 = vmatprep.subr.bf16.mxu0 0
        %1026 = vmatpush1.bf16.xpose.msra.mxu0 %v1013
        %1027 = vmatprep.subr.bf16.mxu0 0
        %1028 = vmatpush1.bf16.xpose.msra.mxu0 %v1014
        %1029 = vmatprep.subr.bf16.mxu0 0
        %1030 = vmatpush1.bf16.xpose.msra.mxu0 %v1015
        %1031 = vmatprep.subr.bf16.mxu0 0
        %1032 = vmatpush1.bf16.xpose.msra.mxu0 %v1016
        %1033 = vmatprep.subr.bf16.mxu0 0
        %1034 = vmatpush1.bf16.xpose.msra.mxu0 0
        %1035 = vmatprep.subr.bf16.mxu0 0
        %1036 = vmatpush1.bf16.xpose.msra.mxu0 0
        %1037 = vmatprep.subr.bf16.mxu0 0
        %1038 = vmatpush1.bf16.xpose.msra.mxu0 0
        %1039 = vmatprep.subr.bf16.mxu0 0
        %1040 = vmatpush1.bf16.xpose.msra.mxu0 0
        %1041 = vmatprep.subr.bf16.mxu0 0
        %1042 = vmatpush1.bf16.xpose.msra.mxu0 0
        %1043 = vmatprep.subr.bf16.mxu0 0
        %1044 = vmatpush1.bf16.xpose.msra.mxu0 0
        %1045 = vmatprep.subr.bf16.mxu0 0
        %1046 = vmatpush1.bf16.xpose.msra.mxu0 0
        %1047 = vmatprep.subr.bf16.mxu0 0
        %1048 = vmatpush1.bf16.xpose.msra.mxu0 0
        %1049 = vmatprep.mubr.bf16.mxu0 0
        %1050 = vmatmul.mubr.bf16.gmra.mrb[0].mxu0 %v1005
        %v1051 = vpop.f32.mrb[0].mxu0
        %v1052 = vadd.f32 0.0, %v1051
        %v1053 = vpop.f32.mrb[0].mxu0
        %v1054 = vpop.f32.mrb[0].mxu0
        %v1055 = vadd.f32 0.0, %v1054
        %v1056 = vpop.f32.mrb[0].mxu0
        %1057 = vmatprep.mubr.bf16.mxu0 0
        %1058 = vmatmul.mubr.bf16.gmra.mrb[0].mxu0 %v1006
        %v1059 = vpop.f32.mrb[0].mxu0
        %v1060 = vadd.f32 0.0, %v1059
        %v1061 = vpop.f32.mrb[0].mxu0
        %v1062 = vpop.f32.mrb[0].mxu0
        %v1063 = vadd.f32 0.0, %v1062
        %v1064 = vpop.f32.mrb[0].mxu0
        %1065 = vmatprep.mubr.bf16.mxu0 0
        %1066 = vmatmul.mubr.bf16.gmra.mrb[0].mxu0 %v1007
        %v1067 = vpop.f32.mrb[0].mxu0
        %v1068 = vadd.f32 0.0, %v1067
        %v1069 = vpop.f32.mrb[0].mxu0
        %v1070 = vpop.f32.mrb[0].mxu0
        %v1071 = vadd.f32 0.0, %v1070
        %v1072 = vpop.f32.mrb[0].mxu0
        %1073 = vmatprep.mubr.bf16.mxu0 0
        %1074 = vmatmul.mubr.bf16.gmra.mrb[0].mxu0 %v1008
        %v1075 = vpop.f32.mrb[0].mxu0
        %v1076 = vadd.f32 0.0, %v1075
        %v1077 = vpop.f32.mrb[0].mxu0
        %v1078 = vpop.f32.mrb[0].mxu0
        %v1079 = vadd.f32 0.0, %v1078
        %v1080 = vpop.f32.mrb[0].mxu0
        %1081 = vdwg.mxu0
        %1082 = vmax.xlane.f32.xlu0 %v1052
        %v1083 = vpop.xlane.xlu0 %1082
        %1084 = vmax.xlane.f32.xlu0 %v1055
        %v1085 = vpop.xlane.xlu0 %1084
        %1086 = vmax.xlane.f32.xlu0 %v1060
        %v1087 = vpop.xlane.xlu0 %1086
        %1088 = vmax.xlane.f32.xlu0 %v1063
        %v1089 = vpop.xlane.xlu0 %1088
        %1090 = vmax.xlane.f32.xlu0 %v1068
        %v1091 = vpop.xlane.xlu0 %1090
        %1092 = vmax.xlane.f32.xlu0 %v1071
        %v1093 = vpop.xlane.xlu0 %1092
        %1094 = vmax.xlane.f32.xlu0 %v1076
        %v1095 = vpop.xlane.xlu0 %1094
        %1096 = vmax.xlane.f32.xlu0 %v1079
        %v1097 = vpop.xlane.xlu0 %1096
        %v1098 = vsub.f32 %v1052, %v1083
        %v1099 = vsub.f32 %v1055, %v1085
        %v1100 = vsub.f32 %v1060, %v1087
        %v1101 = vsub.f32 %v1063, %v1089
        %v1102 = vsub.f32 %v1068, %v1091
        %v1103 = vsub.f32 %v1071, %v1093
        %v1104 = vsub.f32 %v1076, %v1095
        %v1105 = vsub.f32 %v1079, %v1097
        %v1106 = vmul.f32 %v1098, 1.442695
        %v1107 = vpow.pop %v1106
        %v1108 = vmul.f32 %v1099, 1.442695
        %v1109 = vpow.pop %v1108
        %v1110 = vmul.f32 %v1100, 1.442695
        %v1111 = vpow.pop %v1110
        %v1112 = vmul.f32 %v1101, 1.442695
        %v1113 = vpow.pop %v1112
        %v1114 = vmul.f32 %v1102, 1.442695
        %v1115 = vpow.pop %v1114
        %v1116 = vmul.f32 %v1103, 1.442695
        %v1117 = vpow.pop %v1116
        %v1118 = vmul.f32 %v1104, 1.442695
        %v1119 = vpow.pop %v1118
        %v1120 = vmul.f32 %v1105, 1.442695
        %v1121 = vpow.pop %v1120
        %1122 = vadd.xlane.f32.xlu0 %v1107
        %v1123 = vpop.xlane.xlu0 %1122
        %1124 = vadd.xlane.f32.xlu0 %v1109
        %v1125 = vpop.xlane.xlu0 %1124
        %1126 = vadd.xlane.f32.xlu0 %v1111
        %v1127 = vpop.xlane.xlu0 %1126
        %1128 = vadd.xlane.f32.xlu0 %v1113
        %v1129 = vpop.xlane.xlu0 %1128
        %1130 = vadd.xlane.f32.xlu0 %v1115
        %v1131 = vpop.xlane.xlu0 %1130
        %1132 = vadd.xlane.f32.xlu0 %v1117
        %v1133 = vpop.xlane.xlu0 %1132
        %1134 = vadd.xlane.f32.xlu0 %v1119
        %v1135 = vpop.xlane.xlu0 %1134
        %1136 = vadd.xlane.f32.xlu0 %v1121
        %v1137 = vpop.xlane.xlu0 %1136
        %v1138 = vrcp.pop %v1123
        %v1139 = vrcp.pop %v1125
        %v1140 = vrcp.pop %v1127
        %v1141 = vrcp.pop %v1129
        %v1142 = vrcp.pop %v1131
        %v1143 = vrcp.pop %v1133
        %v1144 = vrcp.pop %v1135
        %v1145 = vrcp.pop %v1137
        %v1146 = vmul.f32 %v1107, %v1138
        %v1147 = vmul.f32 %v1109, %v1139
        %v1148 = vmul.f32 %v1111, %v1140
        %v1149 = vmul.f32 %v1113, %v1141
        %v1150 = vmul.f32 %v1115, %v1142
        %v1151 = vmul.f32 %v1117, %v1143
        %v1152 = vmul.f32 %v1119, %v1144
        %v1153 = vmul.f32 %v1121, %v1145
        %v1154 = vpack.c.bf16 %v1147, %v1146
        %v1155 = vpack.c.bf16 %v1149, %v1148
        %v1156 = vpack.c.bf16 %v1151, %v1150
        %v1157 = vpack.c.bf16 %v1153, %v1152
        %v1158 = vld [vmem:[#allocation3] sm:$0xff]
        %v1159 = vld [vmem:[#allocation3 + $0x8] sm:$0xff]
        %v1160 = vld [vmem:[#allocation3 + $0x10] sm:$0xff]
        %v1161 = vld [vmem:[#allocation3 + $0x18] sm:$0xff]
        %v1162 = vld [vmem:[#allocation3 + $0x20] sm:$0xff]
        %v1163 = vld [vmem:[#allocation3 + $0x28] sm:$0xff]
        %v1164 = vld [vmem:[#allocation3 + $0x30] sm:$0xff]
        %v1165 = vld [vmem:[#allocation3 + $0x38] sm:$0xff]
        %1166 = vmatprep.subr.bf16.mxu0 0
        %1167 = vmatpush1.bf16.msra.mxu0 %v1158
        %1168 = vmatprep.subr.bf16.mxu0 0
        %1169 = vmatpush1.bf16.msra.mxu0 %v1159
        %1170 = vmatprep.subr.bf16.mxu0 0
        %1171 = vmatpush1.bf16.msra.mxu0 %v1160
        %1172 = vmatprep.subr.bf16.mxu0 0
        %1173 = vmatpush1.bf16.msra.mxu0 %v1161
        %1174 = vmatprep.subr.bf16.mxu0 0
        %1175 = vmatpush1.bf16.msra.mxu0 %v1162
        %1176 = vmatprep.subr.bf16.mxu0 0
        %1177 = vmatpush1.bf16.msra.mxu0 %v1163
        %1178 = vmatprep.subr.bf16.mxu0 0
        %1179 = vmatpush1.bf16.msra.mxu0 %v1164
        %1180 = vmatprep.subr.bf16.mxu0 0
        %1181 = vmatpush1.bf16.msra.mxu0 %v1165
        %1182 = vmatprep.subr.bf16.mxu0 0
        %1183 = vmatpush1.bf16.msra.mxu0 0
        %1184 = vmatprep.subr.bf16.mxu0 0
        %1185 = vmatpush1.bf16.msra.mxu0 0
        %1186 = vmatprep.subr.bf16.mxu0 0
        %1187 = vmatpush1.bf16.msra.mxu0 0
        %1188 = vmatprep.subr.bf16.mxu0 0
        %1189 = vmatpush1.bf16.msra.mxu0 0
        %1190 = vmatprep.subr.bf16.mxu0 0
        %1191 = vmatpush1.bf16.msra.mxu0 0
        %1192 = vmatprep.subr.bf16.mxu0 0
        %1193 = vmatpush1.bf16.msra.mxu0 0
        %1194 = vmatprep.subr.bf16.mxu0 0
        %1195 = vmatpush1.bf16.msra.mxu0 0
        %1196 = vmatprep.subr.bf16.mxu0 0
        %1197 = vmatpush1.bf16.msra.mxu0 0
        %1198 = vmatprep.mubr.bf16.mxu0 0
        %1199 = vmatmul.mubr.bf16.gmra.mrb[0].mxu0 %v1154
        %v1200 = vpop.f32.mrb[0].mxu0
        %v1201 = vadd.f32 0.0, %v1200
        %v1202 = vpop.f32.mrb[0].mxu0
        %v1203 = vpop.f32.mrb[0].mxu0
        %v1204 = vadd.f32 0.0, %v1203
        %v1205 = vpop.f32.mrb[0].mxu0
        %1206 = vmatprep.mubr.bf16.mxu0 0
        %1207 = vmatmul.mubr.bf16.gmra.mrb[0].mxu0 %v1155
        %v1208 = vpop.f32.mrb[0].mxu0
        %v1209 = vadd.f32 0.0, %v1208
        %v1210 = vpop.f32.mrb[0].mxu0
        %v1211 = vpop.f32.mrb[0].mxu0
        %v1212 = vadd.f32 0.0, %v1211
        %v1213 = vpop.f32.mrb[0].mxu0
        %1214 = vmatprep.mubr.bf16.mxu0 0
        %1215 = vmatmul.mubr.bf16.gmra.mrb[0].mxu0 %v1156
        %v1216 = vpop.f32.mrb[0].mxu0
        %v1217 = vadd.f32 0.0, %v1216
        %v1218 = vpop.f32.mrb[0].mxu0
        %v1219 = vpop.f32.mrb[0].mxu0
        %v1220 = vadd.f32 0.0, %v1219
        %v1221 = vpop.f32.mrb[0].mxu0
        %1222 = vmatprep.mubr.bf16.mxu0 0
        %1223 = vmatmul.mubr.bf16.gmra.mrb[0].mxu0 %v1157
        %v1224 = vpop.f32.mrb[0].mxu0
        %v1225 = vadd.f32 0.0, %v1224
        %v1226 = vpop.f32.mrb[0].mxu0
        %v1227 = vpop.f32.mrb[0].mxu0
        %v1228 = vadd.f32 0.0, %v1227
        %v1229 = vpop.f32.mrb[0].mxu0
        %1230 = vdwg.mxu0
        %v1231 = vadd.f32 %v857, %v1201
        %v1232 = vadd.f32 %v858, %v1204
        %v1233 = vadd.f32 %v859, %v1209
        %v1234 = vadd.f32 %v860, %v1212
        %v1235 = vadd.f32 %v861, %v1217
        %v1236 = vadd.f32 %v862, %v1220
        %v1237 = vadd.f32 %v863, %v1225
        %v1238 = vadd.f32 %v864, %v1228
        %v1239 = vld [vmem:[%s5] sm:$0x1]
        %v1240 = vld [vmem:[%s6] sm:$0x1]
        %1241 = vadd.xlane.f32.xlu0 %v1231
        %v1242 = vpop.xlane.xlu0 %1241
        %1243 = vadd.xlane.f32.xlu0 %v1232
        %v1244 = vpop.xlane.xlu0 %1243
        %1245 = vadd.xlane.f32.xlu0 %v1233
        %v1246 = vpop.xlane.xlu0 %1245
        %1247 = vadd.xlane.f32.xlu0 %v1234
        %v1248 = vpop.xlane.xlu0 %1247
        %1249 = vadd.xlane.f32.xlu0 %v1235
        %v1250 = vpop.xlane.xlu0 %1249
        %1251 = vadd.xlane.f32.xlu0 %v1236
        %v1252 = vpop.xlane.xlu0 %1251
        %1253 = vadd.xlane.f32.xlu0 %v1237
        %v1254 = vpop.xlane.xlu0 %1253
        %1255 = vadd.xlane.f32.xlu0 %v1238
        %v1256 = vpop.xlane.xlu0 %1255
        %v1257 = vrcp.pop 128.0
        %v1258 = vmul.f32 %v1242, %v1257
        %v1259 = vmul.f32 %v1244, %v1257
        %v1260 = vmul.f32 %v1246, %v1257
        %v1261 = vmul.f32 %v1248, %v1257
        %v1262 = vmul.f32 %v1250, %v1257
        %v1263 = vmul.f32 %v1252, %v1257
        %v1264 = vmul.f32 %v1254, %v1257
        %v1265 = vmul.f32 %v1256, %v1257
        %v1266 = vsub.f32 %v1231, %v1258
        %v1267 = vsub.f32 %v1232, %v1259
        %v1268 = vsub.f32 %v1233, %v1260
        %v1269 = vsub.f32 %v1234, %v1261
        %v1270 = vsub.f32 %v1235, %v1262
        %v1271 = vsub.f32 %v1236, %v1263
        %v1272 = vsub.f32 %v1237, %v1264
        %v1273 = vsub.f32 %v1238, %v1265
        %v1274 = vmul.f32 %v1266, %v1266
        %v1275 = vmul.f32 %v1267, %v1267
        %v1276 = vmul.f32 %v1268, %v1268
        %v1277 = vmul.f32 %v1269, %v1269
        %v1278 = vmul.f32 %v1270, %v1270
        %v1279 = vmul.f32 %v1271, %v1271
        %v1280 = vmul.f32 %v1272, %v1272
        %v1281 = vmul.f32 %v1273, %v1273
        %1282 = vadd.xlane.f32.xlu0 %v1274
        %v1283 = vpop.xlane.xlu0 %1282
        %1284 = vadd.xlane.f32.xlu0 %v1275
        %v1285 = vpop.xlane.xlu0 %1284
        %1286 = vadd.xlane.f32.xlu0 %v1276
        %v1287 = vpop.xlane.xlu0 %1286
        %1288 = vadd.xlane.f32.xlu0 %v1277
        %v1289 = vpop.xlane.xlu0 %1288
        %1290 = vadd.xlane.f32.xlu0 %v1278
        %v1291 = vpop.xlane.xlu0 %1290
        %1292 = vadd.xlane.f32.xlu0 %v1279
        %v1293 = vpop.xlane.xlu0 %1292
        %1294 = vadd.xlane.f32.xlu0 %v1280
        %v1295 = vpop.xlane.xlu0 %1294
        %1296 = vadd.xlane.f32.xlu0 %v1281
        %v1297 = vpop.xlane.xlu0 %1296
        %v1298 = vmul.f32 %v1283, %v1257
        %v1299 = vmul.f32 %v1285, %v1257
        %v1300 = vmul.f32 %v1287, %v1257
        %v1301 = vmul.f32 %v1289, %v1257
        %v1302 = vmul.f32 %v1291, %v1257
        %v1303 = vmul.f32 %v1293, %v1257
        %v1304 = vmul.f32 %v1295, %v1257
        %v1305 = vmul.f32 %v1297, %v1257
        %v1306 = vadd.f32 %v1298, 1e-05
        %v1307 = vadd.f32 %v1299, 1e-05
        %v1308 = vadd.f32 %v1300, 1e-05
        %v1309 = vadd.f32 %v1301, 1e-05
        %v1310 = vadd.f32 %v1302, 1e-05
        %v1311 = vadd.f32 %v1303, 1e-05
        %v1312 = vadd.f32 %v1304, 1e-05
        %v1313 = vadd.f32 %v1305, 1e-05
        %v1314 = vrsqrt.pop %v1306
        %v1315 = vrsqrt.pop %v1307
        %v1316 = vrsqrt.pop %v1308
        %v1317 = vrsqrt.pop %v1309
        %v1318 = vrsqrt.pop %v1310
        %v1319 = vrsqrt.pop %v1311
        %v1320 = vrsqrt.pop %v1312
        %v1321 = vrsqrt.pop %v1313
        %v1322 = vmul.f32 %v1266, %v1314
        %v1323 = vmul.f32 %v1267, %v1315
        %v1324 = vmul.f32 %v1268, %v1316
        %v1325 = vmul.f32 %v1269, %v1317
        %v1326 = vmul.f32 %v1270, %v1318
        %v1327 = vmul.f32 %v1271, %v1319
        %v1328 = vmul.f32 %v1272, %v1320
        %v1329 = vmul.f32 %v1273, %v1321
        %v1331 = vlaneseq
        %v1332 = vshrl.u32 %v1331, 7
        %v1333 = vsub.s32 0, %v1332
        %v1334 = vrot.slane %v1239, %v1333
        %v1336 = vmul.f32 %v1322, %v1334
        %v1337 = vmul.f32 %v1323, %v1334
        %v1338 = vmul.f32 %v1324, %v1334
        %v1339 = vmul.f32 %v1325, %v1334
        %v1340 = vmul.f32 %v1326, %v1334
        %v1341 = vmul.f32 %v1327, %v1334
        %v1342 = vmul.f32 %v1328, %v1334
        %v1343 = vmul.f32 %v1329, %v1334
        %v1345 = vlaneseq
        %v1346 = vshrl.u32 %v1345, 7
        %v1347 = vsub.s32 0, %v1346
        %v1348 = vrot.slane %v1240, %v1347
        %v1350 = vadd.f32 %v1336, %v1348
        %v1351 = vadd.f32 %v1337, %v1348
        %v1352 = vadd.f32 %v1338, %v1348
        %v1353 = vadd.f32 %v1339, %v1348
        %v1354 = vadd.f32 %v1340, %v1348
        %v1355 = vadd.f32 %v1341, %v1348
        %v1356 = vadd.f32 %v1342, %v1348
        %v1357 = vadd.f32 %v1343, %v1348
        %v1358 = vpack.c.bf16 %v1351, %v1350
        %v1359 = vpack.c.bf16 %v1353, %v1352
        %v1360 = vpack.c.bf16 %v1355, %v1354
        %v1361 = vpack.c.bf16 %v1357, %v1356
        %v1362 = vld [vmem:[#allocation10] sm:$0xff]
        %v1363 = vld [vmem:[#allocation10 + $0x8] sm:$0xff]
        %v1364 = vld [vmem:[#allocation10 + $0x10] sm:$0xff]
        %v1365 = vld [vmem:[#allocation10 + $0x18] sm:$0xff]
        %v1366 = vld [vmem:[#allocation10 + $0x20] sm:$0xff]
        %v1367 = vld [vmem:[#allocation10 + $0x28] sm:$0xff]
        %v1368 = vld [vmem:[#allocation10 + $0x30] sm:$0xff]
        %v1369 = vld [vmem:[#allocation10 + $0x38] sm:$0xff]
        %v1370 = vld [vmem:[#allocation10 + $0x40] sm:$0xff]
        %v1371 = vld [vmem:[#allocation10 + $0x48] sm:$0xff]
        %v1372 = vld [vmem:[#allocation10 + $0x50] sm:$0xff]
        %v1373 = vld [vmem:[#allocation10 + $0x58] sm:$0xff]
        %v1374 = vld [vmem:[#allocation10 + $0x60] sm:$0xff]
        %v1375 = vld [vmem:[#allocation10 + $0x68] sm:$0xff]
        %v1376 = vld [vmem:[#allocation10 + $0x70] sm:$0xff]
        %v1377 = vld [vmem:[#allocation10 + $0x78] sm:$0xff]
        %v1378 = vld [vmem:[%s8] sm:$0x3]
        %v1380 = vlaneseq
        %v1381 = vshrl.u32 %v1380, 7
        %v1382 = vsub.s32 0, %v1381
        %v1383 = vrot.slane %v1378, %v1382
        %v1384 = vlaneseq
        %v1385 = vshrl.u32 %v1384, 7
        %v1386 = vsub.s32 1, %v1385
        %v1387 = vrot.slane %v1378, %v1386
        %v1406 = vunpack.c.l.b16 %v1362
        %v1407 = vunpack.c.h.b16 %v1362
        %v1408 = vunpack.c.l.b16 %v1363
        %v1409 = vunpack.c.h.b16 %v1363
        %v1410 = vunpack.c.l.b16 %v1364
        %v1411 = vunpack.c.h.b16 %v1364
        %v1412 = vunpack.c.l.b16 %v1365
        %v1413 = vunpack.c.h.b16 %v1365
        %v1414 = vunpack.c.l.b16 %v1366
        %v1415 = vunpack.c.h.b16 %v1366
        %v1416 = vunpack.c.l.b16 %v1367
        %v1417 = vunpack.c.h.b16 %v1367
        %v1418 = vunpack.c.l.b16 %v1368
        %v1419 = vunpack.c.h.b16 %v1368
        %v1420 = vunpack.c.l.b16 %v1369
        %v1421 = vunpack.c.h.b16 %v1369
        %v1422 = vunpack.c.l.b16 %v1370
        %v1423 = vunpack.c.h.b16 %v1370
        %v1424 = vunpack.c.l.b16 %v1371
        %v1425 = vunpack.c.h.b16 %v1371
        %v1426 = vunpack.c.l.b16 %v1372
        %v1427 = vunpack.c.h.b16 %v1372
        %v1428 = vunpack.c.l.b16 %v1373
        %v1429 = vunpack.c.h.b16 %v1373
        %v1430 = vunpack.c.l.b16 %v1374
        %v1431 = vunpack.c.h.b16 %v1374
        %v1432 = vunpack.c.l.b16 %v1375
        %v1433 = vunpack.c.h.b16 %v1375
        %v1434 = vunpack.c.l.b16 %v1376
        %v1435 = vunpack.c.h.b16 %v1376
        %v1436 = vunpack.c.l.b16 %v1377
        %v1437 = vunpack.c.h.b16 %v1377
        %v1438 = vpack.c.b16 %v1408, %v1406
        %v1439 = vpack.c.b16 %v1409, %v1407
        %v1440 = vpack.c.b16 %v1412, %v1410
        %v1441 = vpack.c.b16 %v1413, %v1411
        %v1442 = vpack.c.b16 %v1416, %v1414
        %v1443 = vpack.c.b16 %v1417, %v1415
        %v1444 = vpack.c.b16 %v1420, %v1418
        %v1445 = vpack.c.b16 %v1421, %v1419
        %v1446 = vpack.c.b16 %v1424, %v1422
        %v1447 = vpack.c.b16 %v1425, %v1423
        %v1448 = vpack.c.b16 %v1428, %v1426
        %v1449 = vpack.c.b16 %v1429, %v1427
        %v1450 = vpack.c.b16 %v1432, %v1430
        %v1451 = vpack.c.b16 %v1433, %v1431
        %v1452 = vpack.c.b16 %v1436, %v1434
        %v1453 = vpack.c.b16 %v1437, %v1435
        %1470 = vmatprep.subr.bf16.mxu0 %v1439
        %1471 = vmatpush1.bf16.msra.mxu0 %v1438
        %1472 = vmatprep.subr.bf16.mxu0 %v1441
        %1473 = vmatpush1.bf16.msra.mxu0 %v1440
        %1474 = vmatprep.subr.bf16.mxu0 %v1443
        %1475 = vmatpush1.bf16.msra.mxu0 %v1442
        %1476 = vmatprep.subr.bf16.mxu0 %v1445
        %1477 = vmatpush1.bf16.msra.mxu0 %v1444
        %1478 = vmatprep.subr.bf16.mxu0 %v1447
        %1479 = vmatpush1.bf16.msra.mxu0 %v1446
        %1480 = vmatprep.subr.bf16.mxu0 %v1449
        %1481 = vmatpush1.bf16.msra.mxu0 %v1448
        %1482 = vmatprep.subr.bf16.mxu0 %v1451
        %1483 = vmatpush1.bf16.msra.mxu0 %v1450
        %1484 = vmatprep.subr.bf16.mxu0 %v1453
        %1485 = vmatpush1.bf16.msra.mxu0 %v1452
        %1486 = vmatprep.subr.bf16.mxu0 0
        %1487 = vmatpush1.bf16.msra.mxu0 0
        %1488 = vmatprep.subr.bf16.mxu0 0
        %1489 = vmatpush1.bf16.msra.mxu0 0
        %1490 = vmatprep.subr.bf16.mxu0 0
        %1491 = vmatpush1.bf16.msra.mxu0 0
        %1492 = vmatprep.subr.bf16.mxu0 0
        %1493 = vmatpush1.bf16.msra.mxu0 0
        %1494 = vmatprep.subr.bf16.mxu0 0
        %1495 = vmatpush1.bf16.msra.mxu0 0
        %1496 = vmatprep.subr.bf16.mxu0 0
        %1497 = vmatpush1.bf16.msra.mxu0 0
        %1498 = vmatprep.subr.bf16.mxu0 0
        %1499 = vmatpush1.bf16.msra.mxu0 0
        %1500 = vmatprep.subr.bf16.mxu0 0
        %1501 = vmatpush1.bf16.msra.mxu0 0
        %1502 = vmatprep.mubr.bf16.mxu0 0
        %1503 = vmatmul.mubr.bf16.gmra.mrb[0].mxu0 %v1358
        %v1504 = vpop.f32.mrb[0].mxu0
        %v1505 = vadd.f32 %v1383, %v1504
        %v1506 = vpop.f32.mrb[0].mxu0
        %v1507 = vadd.f32 %v1387, %v1506
        %v1508 = vpop.f32.mrb[0].mxu0
        %v1509 = vadd.f32 %v1383, %v1508
        %v1510 = vpop.f32.mrb[0].mxu0
        %v1511 = vadd.f32 %v1387, %v1510
        %1512 = vmatprep.mubr.bf16.mxu0 0
        %1513 = vmatmul.mubr.bf16.gmra.mrb[0].mxu0 %v1359
        %v1514 = vpop.f32.mrb[0].mxu0
        %v1515 = vadd.f32 %v1383, %v1514
        %v1516 = vpop.f32.mrb[0].mxu0
        %v1517 = vadd.f32 %v1387, %v1516
        %v1518 = vpop.f32.mrb[0].mxu0
        %v1519 = vadd.f32 %v1383, %v1518
        %v1520 = vpop.f32.mrb[0].mxu0
        %v1521 = vadd.f32 %v1387, %v1520
        %1522 = vmatprep.mubr.bf16.mxu0 0
        %1523 = vmatmul.mubr.bf16.gmra.mrb[0].mxu0 %v1360
        %v1524 = vpop.f32.mrb[0].mxu0
        %v1525 = vadd.f32 %v1383, %v1524
        %v1526 = vpop.f32.mrb[0].mxu0
        %v1527 = vadd.f32 %v1387, %v1526
        %v1528 = vpop.f32.mrb[0].mxu0
        %v1529 = vadd.f32 %v1383, %v1528
        %v1530 = vpop.f32.mrb[0].mxu0
        %v1531 = vadd.f32 %v1387, %v1530
        %1532 = vmatprep.mubr.bf16.mxu0 0
        %1533 = vmatmul.mubr.bf16.gmra.mrb[0].mxu0 %v1361
        %v1534 = vpop.f32.mrb[0].mxu0
        %v1535 = vadd.f32 %v1383, %v1534
        %v1536 = vpop.f32.mrb[0].mxu0
        %v1537 = vadd.f32 %v1387, %v1536
        %v1538 = vpop.f32.mrb[0].mxu0
        %v1539 = vadd.f32 %v1383, %v1538
        %v1540 = vpop.f32.mrb[0].mxu0
        %v1541 = vadd.f32 %v1387, %v1540
        %1542 = vdwg.mxu0
        %v1543 = vmax.f32 %v1505, 0.0
        %v1544 = vmax.f32 %v1507, 0.0
        %v1545 = vmax.f32 %v1509, 0.0
        %v1546 = vmax.f32 %v1511, 0.0
        %v1547 = vmax.f32 %v1515, 0.0
        %v1548 = vmax.f32 %v1517, 0.0
        %v1549 = vmax.f32 %v1519, 0.0
        %v1550 = vmax.f32 %v1521, 0.0
        %v1551 = vmax.f32 %v1525, 0.0
        %v1552 = vmax.f32 %v1527, 0.0
        %v1553 = vmax.f32 %v1529, 0.0
        %v1554 = vmax.f32 %v1531, 0.0
        %v1555 = vmax.f32 %v1535, 0.0
        %v1556 = vmax.f32 %v1537, 0.0
        %v1557 = vmax.f32 %v1539, 0.0
        %v1558 = vmax.f32 %v1541, 0.0
        %v1559 = vpack.c.bf16 %v1545, %v1543
        %v1560 = vpack.c.bf16 %v1546, %v1544
        %v1561 = vpack.c.bf16 %v1549, %v1547
        %v1562 = vpack.c.bf16 %v1550, %v1548
        %v1563 = vpack.c.bf16 %v1553, %v1551
        %v1564 = vpack.c.bf16 %v1554, %v1552
        %v1565 = vpack.c.bf16 %v1557, %v1555
        %v1566 = vpack.c.bf16 %v1558, %v1556
        %v1567 = vld [vmem:[#allocation12] sm:$0xf]
        %v1568 = vld [vmem:[#allocation12 + $0x4] sm:$0xf]
        %v1569 = vld [vmem:[#allocation12 + $0x8] sm:$0xf]
        %v1570 = vld [vmem:[#allocation12 + $0xc] sm:$0xf]
        %v1571 = vld [vmem:[#allocation12 + $0x10] sm:$0xf]
        %v1572 = vld [vmem:[#allocation12 + $0x14] sm:$0xf]
        %v1573 = vld [vmem:[#allocation12 + $0x18] sm:$0xf]
        %v1574 = vld [vmem:[#allocation12 + $0x1c] sm:$0xf]
        %v1575 = vld [vmem:[#allocation12 + $0x20] sm:$0xf]
        %v1576 = vld [vmem:[#allocation12 + $0x24] sm:$0xf]
        %v1577 = vld [vmem:[#allocation12 + $0x28] sm:$0xf]
        %v1578 = vld [vmem:[#allocation12 + $0x2c] sm:$0xf]
        %v1579 = vld [vmem:[#allocation12 + $0x30] sm:$0xf]
        %v1580 = vld [vmem:[#allocation12 + $0x34] sm:$0xf]
        %v1581 = vld [vmem:[#allocation12 + $0x38] sm:$0xf]
        %v1582 = vld [vmem:[#allocation12 + $0x3c] sm:$0xf]
        %v1583 = vld [vmem:[#allocation12 + $0x40] sm:$0xf]
        %v1584 = vld [vmem:[#allocation12 + $0x44] sm:$0xf]
        %v1585 = vld [vmem:[#allocation12 + $0x48] sm:$0xf]
        %v1586 = vld [vmem:[#allocation12 + $0x4c] sm:$0xf]
        %v1587 = vld [vmem:[#allocation12 + $0x50] sm:$0xf]
        %v1588 = vld [vmem:[#allocation12 + $0x54] sm:$0xf]
        %v1589 = vld [vmem:[#allocation12 + $0x58] sm:$0xf]
        %v1590 = vld [vmem:[#allocation12 + $0x5c] sm:$0xf]
        %v1591 = vld [vmem:[#allocation12 + $0x60] sm:$0xf]
        %v1592 = vld [vmem:[#allocation12 + $0x64] sm:$0xf]
        %v1593 = vld [vmem:[#allocation12 + $0x68] sm:$0xf]
        %v1594 = vld [vmem:[#allocation12 + $0x6c] sm:$0xf]
        %v1595 = vld [vmem:[#allocation12 + $0x70] sm:$0xf]
        %v1596 = vld [vmem:[#allocation12 + $0x74] sm:$0xf]
        %v1597 = vld [vmem:[#allocation12 + $0x78] sm:$0xf]
        %v1598 = vld [vmem:[#allocation12 + $0x7c] sm:$0xf]
        %v1599 = vld [vmem:[%s10] sm:$0x1]
        %v1601 = vlaneseq
        %v1602 = vshrl.u32 %v1601, 7
        %v1603 = vsub.s32 0, %v1602
        %v1604 = vrot.slane %v1599, %v1603
        %v1638 = vunpack.c.l.b16 %v1567
        %v1639 = vunpack.c.l.b16 %v1568
        %v1640 = vunpack.c.l.b16 %v1569
        %v1641 = vunpack.c.l.b16 %v1570
        %v1642 = vunpack.c.l.b16 %v1571
        %v1643 = vunpack.c.l.b16 %v1572
        %v1644 = vunpack.c.l.b16 %v1573
        %v1645 = vunpack.c.l.b16 %v1574
        %v1646 = vunpack.c.l.b16 %v1575
        %v1647 = vunpack.c.l.b16 %v1576
        %v1648 = vunpack.c.l.b16 %v1577
        %v1649 = vunpack.c.l.b16 %v1578
        %v1650 = vunpack.c.l.b16 %v1579
        %v1651 = vunpack.c.l.b16 %v1580
        %v1652 = vunpack.c.l.b16 %v1581
        %v1653 = vunpack.c.l.b16 %v1582
        %v1654 = vunpack.c.l.b16 %v1583
        %v1655 = vunpack.c.l.b16 %v1584
        %v1656 = vunpack.c.l.b16 %v1585
        %v1657 = vunpack.c.l.b16 %v1586
        %v1658 = vunpack.c.l.b16 %v1587
        %v1659 = vunpack.c.l.b16 %v1588
        %v1660 = vunpack.c.l.b16 %v1589
        %v1661 = vunpack.c.l.b16 %v1590
        %v1662 = vunpack.c.l.b16 %v1591
        %v1663 = vunpack.c.l.b16 %v1592
        %v1664 = vunpack.c.l.b16 %v1593
        %v1665 = vunpack.c.l.b16 %v1594
        %v1666 = vunpack.c.l.b16 %v1595
        %v1667 = vunpack.c.l.b16 %v1596
        %v1668 = vunpack.c.l.b16 %v1597
        %v1669 = vunpack.c.l.b16 %v1598
        %v1670 = vpack.c.b16 %v1639, %v1638
        %v1671 = vpack.c.b16 %v1641, %v1640
        %v1672 = vpack.c.b16 %v1643, %v1642
        %v1673 = vpack.c.b16 %v1645, %v1644
        %v1674 = vpack.c.b16 %v1647, %v1646
        %v1675 = vpack.c.b16 %v1649, %v1648
        %v1676 = vpack.c.b16 %v1651, %v1650
        %v1677 = vpack.c.b16 %v1653, %v1652
        %v1678 = vpack.c.b16 %v1655, %v1654
        %v1679 = vpack.c.b16 %v1657, %v1656
        %v1680 = vpack.c.b16 %v1659, %v1658
        %v1681 = vpack.c.b16 %v1661, %v1660
        %v1682 = vpack.c.b16 %v1663, %v1662
        %v1683 = vpack.c.b16 %v1665, %v1664
        %v1684 = vpack.c.b16 %v1667, %v1666
        %v1685 = vpack.c.b16 %v1669, %v1668
        %1702 = vmatprep.subr.bf16.mxu0 0
        %1703 = vmatpush1.bf16.msra.mxu0 %v1670
        %1704 = vmatprep.subr.bf16.mxu0 0
        %1705 = vmatpush1.bf16.msra.mxu0 %v1671
        %1706 = vmatprep.subr.bf16.mxu0 0
        %1707 = vmatpush1.bf16.msra.mxu0 %v1672
        %1708 = vmatprep.subr.bf16.mxu0 0
        %1709 = vmatpush1.bf16.msra.mxu0 %v1673
        %1710 = vmatprep.subr.bf16.mxu0 0
        %1711 = vmatpush1.bf16.msra.mxu0 %v1674
        %1712 = vmatprep.subr.bf16.mxu0 0
        %1713 = vmatpush1.bf16.msra.mxu0 %v1675
        %1714 = vmatprep.subr.bf16.mxu0 0
        %1715 = vmatpush1.bf16.msra.mxu0 %v1676
        %1716 = vmatprep.subr.bf16.mxu0 0
        %1717 = vmatpush1.bf16.msra.mxu0 %v1677
        %1718 = vmatprep.subr.bf16.mxu0 0
        %1719 = vmatpush1.bf16.msra.mxu0 %v1678
        %1720 = vmatprep.subr.bf16.mxu0 0
        %1721 = vmatpush1.bf16.msra.mxu0 %v1679
        %1722 = vmatprep.subr.bf16.mxu0 0
        %1723 = vmatpush1.bf16.msra.mxu0 %v1680
        %1724 = vmatprep.subr.bf16.mxu0 0
        %1725 = vmatpush1.bf16.msra.mxu0 %v1681
        %1726 = vmatprep.subr.bf16.mxu0 0
        %1727 = vmatpush1.bf16.msra.mxu0 %v1682
        %1728 = vmatprep.subr.bf16.mxu0 0
        %1729 = vmatpush1.bf16.msra.mxu0 %v1683
        %1730 = vmatprep.subr.bf16.mxu0 0
        %1731 = vmatpush1.bf16.msra.mxu0 %v1684
        %1732 = vmatprep.subr.bf16.mxu0 0
        %1733 = vmatpush1.bf16.msra.mxu0 %v1685
        %1734 = vmatprep.mubr.bf16.mxu0 %v1560
        %1735 = vmatmul.mubr.bf16.gmra.mrb[0].mxu0 %v1559
        %v1736 = vpop.f32.mrb[0].mxu0
        %v1737 = vadd.f32 %v1604, %v1736
        %v1738 = vpop.f32.mrb[0].mxu0
        %v1739 = vpop.f32.mrb[0].mxu0
        %v1740 = vadd.f32 %v1604, %v1739
        %v1741 = vpop.f32.mrb[0].mxu0
        %1742 = vmatprep.mubr.bf16.mxu0 %v1562
        %1743 = vmatmul.mubr.bf16.gmra.mrb[0].mxu0 %v1561
        %v1744 = vpop.f32.mrb[0].mxu0
        %v1745 = vadd.f32 %v1604, %v1744
        %v1746 = vpop.f32.mrb[0].mxu0
        %v1747 = vpop.f32.mrb[0].mxu0
        %v1748 = vadd.f32 %v1604, %v1747
        %v1749 = vpop.f32.mrb[0].mxu0
        %1750 = vmatprep.mubr.bf16.mxu0 %v1564
        %1751 = vmatmul.mubr.bf16.gmra.mrb[0].mxu0 %v1563
        %v1752 = vpop.f32.mrb[0].mxu0
        %v1753 = vadd.f32 %v1604, %v1752
        %v1754 = vpop.f32.mrb[0].mxu0
        %v1755 = vpop.f32.mrb[0].mxu0
        %v1756 = vadd.f32 %v1604, %v1755
        %v1757 = vpop.f32.mrb[0].mxu0
        %1758 = vmatprep.mubr.bf16.mxu0 %v1566
        %1759 = vmatmul.mubr.bf16.gmra.mrb[0].mxu0 %v1565
        %v1760 = vpop.f32.mrb[0].mxu0
        %v1761 = vadd.f32 %v1604, %v1760
        %v1762 = vpop.f32.mrb[0].mxu0
        %v1763 = vpop.f32.mrb[0].mxu0
        %v1764 = vadd.f32 %v1604, %v1763
        %v1765 = vpop.f32.mrb[0].mxu0
        %1766 = vdwg.mxu0
        %v1767 = vadd.f32 %v1350, %v1737
        %v1768 = vadd.f32 %v1351, %v1740
        %v1769 = vadd.f32 %v1352, %v1745
        %v1770 = vadd.f32 %v1353, %v1748
        %v1771 = vadd.f32 %v1354, %v1753
        %v1772 = vadd.f32 %v1355, %v1756
        %v1773 = vadd.f32 %v1356, %v1761
        %v1774 = vadd.f32 %v1357, %v1764
        %v1775 = vld [vmem:[%s11] sm:$0x1]
        %v1776 = vld [vmem:[%s12] sm:$0x1]
        %1777 = vadd.xlane.f32.xlu0 %v1767
        %v1778 = vpop.xlane.xlu0 %1777
        %1779 = vadd.xlane.f32.xlu0 %v1768
        %v1780 = vpop.xlane.xlu0 %1779
        %1781 = vadd.xlane.f32.xlu0 %v1769
        %v1782 = vpop.xlane.xlu0 %1781
        %1783 = vadd.xlane.f32.xlu0 %v1770
        %v1784 = vpop.xlane.xlu0 %1783
        %1785 = vadd.xlane.f32.xlu0 %v1771
        %v1786 = vpop.xlane.xlu0 %1785
        %1787 = vadd.xlane.f32.xlu0 %v1772
        %v1788 = vpop.xlane.xlu0 %1787
        %1789 = vadd.xlane.f32.xlu0 %v1773
        %v1790 = vpop.xlane.xlu0 %1789
        %1791 = vadd.xlane.f32.xlu0 %v1774
        %v1792 = vpop.xlane.xlu0 %1791
        %v1793 = vmul.f32 %v1778, %v1257
        %v1794 = vmul.f32 %v1780, %v1257
        %v1795 = vmul.f32 %v1782, %v1257
        %v1796 = vmul.f32 %v1784, %v1257
        %v1797 = vmul.f32 %v1786, %v1257
        %v1798 = vmul.f32 %v1788, %v1257
        %v1799 = vmul.f32 %v1790, %v1257
        %v1800 = vmul.f32 %v1792, %v1257
        %v1801 = vsub.f32 %v1767, %v1793
        %v1802 = vsub.f32 %v1768, %v1794
        %v1803 = vsub.f32 %v1769, %v1795
        %v1804 = vsub.f32 %v1770, %v1796
        %v1805 = vsub.f32 %v1771, %v1797
        %v1806 = vsub.f32 %v1772, %v1798
        %v1807 = vsub.f32 %v1773, %v1799
        %v1808 = vsub.f32 %v1774, %v1800
        %v1809 = vmul.f32 %v1801, %v1801
        %v1810 = vmul.f32 %v1802, %v1802
        %v1811 = vmul.f32 %v1803, %v1803
        %v1812 = vmul.f32 %v1804, %v1804
        %v1813 = vmul.f32 %v1805, %v1805
        %v1814 = vmul.f32 %v1806, %v1806
        %v1815 = vmul.f32 %v1807, %v1807
        %v1816 = vmul.f32 %v1808, %v1808
        %1817 = vadd.xlane.f32.xlu0 %v1809
        %v1818 = vpop.xlane.xlu0 %1817
        %1819 = vadd.xlane.f32.xlu0 %v1810
        %v1820 = vpop.xlane.xlu0 %1819
        %1821 = vadd.xlane.f32.xlu0 %v1811
        %v1822 = vpop.xlane.xlu0 %1821
        %1823 = vadd.xlane.f32.xlu0 %v1812
        %v1824 = vpop.xlane.xlu0 %1823
        %1825 = vadd.xlane.f32.xlu0 %v1813
        %v1826 = vpop.xlane.xlu0 %1825
        %1827 = vadd.xlane.f32.xlu0 %v1814
        %v1828 = vpop.xlane.xlu0 %1827
        %1829 = vadd.xlane.f32.xlu0 %v1815
        %v1830 = vpop.xlane.xlu0 %1829
        %1831 = vadd.xlane.f32.xlu0 %v1816
        %v1832 = vpop.xlane.xlu0 %1831
        %v1833 = vmul.f32 %v1818, %v1257
        %v1834 = vmul.f32 %v1820, %v1257
        %v1835 = vmul.f32 %v1822, %v1257
        %v1836 = vmul.f32 %v1824, %v1257
        %v1837 = vmul.f32 %v1826, %v1257
        %v1838 = vmul.f32 %v1828, %v1257
        %v1839 = vmul.f32 %v1830, %v1257
        %v1840 = vmul.f32 %v1832, %v1257
        %v1841 = vadd.f32 %v1833, 1e-05
        %v1842 = vadd.f32 %v1834, 1e-05
        %v1843 = vadd.f32 %v1835, 1e-05
        %v1844 = vadd.f32 %v1836, 1e-05
        %v1845 = vadd.f32 %v1837, 1e-05
        %v1846 = vadd.f32 %v1838, 1e-05
        %v1847 = vadd.f32 %v1839, 1e-05
        %v1848 = vadd.f32 %v1840, 1e-05
        %v1849 = vrsqrt.pop %v1841
        %v1850 = vrsqrt.pop %v1842
        %v1851 = vrsqrt.pop %v1843
        %v1852 = vrsqrt.pop %v1844
        %v1853 = vrsqrt.pop %v1845
        %v1854 = vrsqrt.pop %v1846
        %v1855 = vrsqrt.pop %v1847
        %v1856 = vrsqrt.pop %v1848
        %v1857 = vmul.f32 %v1801, %v1849
        %v1858 = vmul.f32 %v1802, %v1850
        %v1859 = vmul.f32 %v1803, %v1851
        %v1860 = vmul.f32 %v1804, %v1852
        %v1861 = vmul.f32 %v1805, %v1853
        %v1862 = vmul.f32 %v1806, %v1854
        %v1863 = vmul.f32 %v1807, %v1855
        %v1864 = vmul.f32 %v1808, %v1856
        %v1866 = vlaneseq
        %v1867 = vshrl.u32 %v1866, 7
        %v1868 = vsub.s32 0, %v1867
        %v1869 = vrot.slane %v1775, %v1868
        %v1871 = vmul.f32 %v1857, %v1869
        %v1872 = vmul.f32 %v1858, %v1869
        %v1873 = vmul.f32 %v1859, %v1869
        %v1874 = vmul.f32 %v1860, %v1869
        %v1875 = vmul.f32 %v1861, %v1869
        %v1876 = vmul.f32 %v1862, %v1869
        %v1877 = vmul.f32 %v1863, %v1869
        %v1878 = vmul.f32 %v1864, %v1869
        %v1880 = vlaneseq
        %v1881 = vshrl.u32 %v1880, 7
        %v1882 = vsub.s32 0, %v1881
        %v1883 = vrot.slane %v1776, %v1882
        %v1885 = vadd.f32 %v1871, %v1883
        %v1886 = vadd.f32 %v1872, %v1883
        %v1887 = vadd.f32 %v1873, %v1883
        %v1888 = vadd.f32 %v1874, %v1883
        %v1889 = vadd.f32 %v1875, %v1883
        %v1890 = vadd.f32 %v1876, %v1883
        %v1891 = vadd.f32 %v1877, %v1883
        %v1892 = vadd.f32 %v1878, %v1883
        %1893 = vst [vmem:[%s563] sm:$0xff] %v1885
        %1894 = vst [vmem:[%s563 + $0x8] sm:$0xff] %v1886
        %1895 = vst [vmem:[%s563 + $0x10] sm:$0xff] %v1887
        %1896 = vst [vmem:[%s563 + $0x18] sm:$0xff] %v1888
        %1897 = vst [vmem:[%s563 + $0x20] sm:$0xff] %v1889
        %1898 = vst [vmem:[%s563 + $0x28] sm:$0xff] %v1890
        %1899 = vst [vmem:[%s563 + $0x30] sm:$0xff] %v1891
        %1900 = vst [vmem:[%s563 + $0x38] sm:$0xff] %v1892
        %1901 = vst [vmem:[%s570] sm:$0xff] %v1146
        %1902 = vst [vmem:[%s570 + $0x8] sm:$0xff] %v1147
        %1903 = vst [vmem:[%s570 + $0x10] sm:$0xff] %v1148
        %1904 = vst [vmem:[%s570 + $0x18] sm:$0xff] %v1149
        %1905 = vst [vmem:[%s570 + $0x20] sm:$0xff] %v1150
        %1906 = vst [vmem:[%s570 + $0x28] sm:$0xff] %v1151
        %1907 = vst [vmem:[%s570 + $0x30] sm:$0xff] %v1152
        %1908 = vst [vmem:[%s570 + $0x38] sm:$0xff] %v1153
        %s1909 = sand.u32 %s337, 1
        %s1910 = scalar_lea.sflag [#allocation6], %s1909
        %s1911 = sand.u32 %s337, 1
        %s1912 = smul.addr %s1911, 64
        %s1913 = scalar_lea.vmem [#allocation13], %s1912
        %s1914 = sand.u32 %s365, 1
        %s1915 = scalar_lea.sflag [#allocation15], %s1914
        %s1916 = sand.u32 %s365, 1
        %s1917 = smul.addr %s1916, 64
        %s1918 = scalar_lea.vmem [#allocation14], %s1917
        // Predicated region
        $region97: #{tpu_custom_call.1} parent=71 // pred_check
          %p1919 = pneg %p347
        $region98: #{tpu_custom_call.1} parent=71 // pred_check_branch
          %1921 = sbr.rel (%p1919) target = $region100
        $region99: #{tpu_custom_call.1} parent=71 // pred_region
          %s1922 = smul.u32 8, %s42
          %s1924 = ssub.s32 1024, 1024
          %1925 = vsyncadd %s1910, %s1924
          %s1926 = smul.addr %s41, 16
          %s1927 = sadd.s32 %s1922, %s1926
          %s1928 = smul.addr %s1927, 128
          %s1929 = scalar_lea.hbm %s13, %s1928
          %s1930 = sshll.u32 %s1913, 4
          %s1931 = int_to_ptr.vmem [resolvable:$true] %s1930
          %1936 = dma.vmem_to_hbm [thread:$0]  %s1931, 1024, %s1929, %s1910, 128, 128, 8
        $region100: #{tpu_custom_call.1} parent=71 // pred_fallthru
          _
        // Predicated region
        $region101: #{tpu_custom_call.1} parent=71 // pred_check
          %p1937 = pneg %p375
        $region102: #{tpu_custom_call.1} parent=71 // pred_check_branch
          %1939 = sbr.rel (%p1937) target = $region104
        $region103: #{tpu_custom_call.1} parent=71 // pred_region
          %s1940 = smul.u32 8, %s42
          %s1942 = ssub.s32 1024, 1024
          %1943 = vsyncadd %s1915, %s1942
          %s1944 = smul.addr %s41, 16
          %s1945 = sadd.s32 %s1940, %s1944
          %s1946 = smul.addr %s1945, 128
          %s1947 = scalar_lea.hbm %s14, %s1946
          %s1948 = sshll.u32 %s1918, 4
          %s1949 = int_to_ptr.vmem [resolvable:$true] %s1948
          %1954 = dma.vmem_to_hbm [thread:$0]  %s1949, 1024, %s1947, %s1915, 128, 128, 8
        $region104: #{tpu_custom_call.1} parent=71 // pred_fallthru
          _
      $region72: #{tpu_custom_call.1} parent=5 // pred_fallthru
        _
      %p1955 = scmp.le.s32.totalorder 2, %s32
      // Predicated region
      $region105: #{tpu_custom_call.1} parent=5 // pred_check
        %p1956 = pneg %p1955
      $region106: #{tpu_custom_call.1} parent=5 // pred_check_branch
        %1958 = sbr.rel (%p1956) target = $region108
      $region107: #{tpu_custom_call.1} parent=5 // pred_region
        %s1959 = ssub.s32 %s32, 2
        // Predicated region
        $region109: #{tpu_custom_call.1} parent=107 // pred_check
          %p1960 = pneg %p353
        $region110: #{tpu_custom_call.1} parent=107 // pred_check_branch
          %1962 = sbr.rel (%p1960) target = $region112
        $region111: #{tpu_custom_call.1} parent=107 // pred_region
          %s1963 = sand.u32 %s338, 1
          %s1964 = scalar_lea.sflag [#allocation6], %s1963
          %s1965 = sand.u32 %s338, 1
          %s1966 = smul.addr %s1965, 64
          %s1967 = scalar_lea.vmem [#allocation13], %s1966
          %1968 = dma.done %s1964, 1024
        $region112: #{tpu_custom_call.1} parent=107 // pred_fallthru
          _
        // Predicated region
        $region113: #{tpu_custom_call.1} parent=107 // pred_check
          %p1969 = pneg %p381
        $region114: #{tpu_custom_call.1} parent=107 // pred_check_branch
          %1971 = sbr.rel (%p1969) target = $region116
        $region115: #{tpu_custom_call.1} parent=107 // pred_region
          %s1972 = sand.u32 %s366, 1
          %s1973 = scalar_lea.sflag [#allocation15], %s1972
          %s1974 = sand.u32 %s366, 1
          %s1975 = smul.addr %s1974, 64
          %s1976 = scalar_lea.vmem [#allocation14], %s1975
          %1977 = dma.done %s1973, 1024
        $region116: #{tpu_custom_call.1} parent=107 // pred_fallthru
          _
      $region108: #{tpu_custom_call.1} parent=5 // pred_fallthru
        _
    $region6: #{tpu_custom_call.1} parent=1 // loop_footer
      %s36 = sadd.s32 1, %s32
    $region7: #{tpu_custom_call.1} parent=1 // loop_footer_branch
      %31 = sbr.rel target = $region3
    $region8: #{tpu_custom_call.1} parent=1 // loop_exit
      _
    %1978 = vsyncpa [#allocation5], 1
    %s1979 = scalar_lea.sflag [#allocation5], 1
    %1980 = vsyncpa %s1979, 1
    %1981 = vsyncpa [#allocation8], 1
    %1982 = vsyncpa [#allocation11], 1
    %1983 = vsyncpa [#allocation6], 1
    %s1984 = scalar_lea.sflag [#allocation6], 1
    %1985 = vsyncpa %s1984, 1
    %1986 = vsyncpa [#allocation15], 1
    %s1987 = scalar_lea.sflag [#allocation15], 1
    %1988 = vsyncpa %s1987, 1

// kernel: tpu_custom_call.1
$region0: #{tpu_custom_call.1}
  #allocation0 [shape = 'u32[]', space=smem, size = 0x4, offset = 0x4, fixed_abs, tag = 'smem constant byte address 0x4 - core index']
  #allocation1 [shape = 'u32[144,128]{1,0:T(1,128)}', space=vmem, size = 0x12000, scoped, tag = 'internal scratch']
  #allocation2 [shape = 'bf16[128,128]{1,0:T(16,128)(2,1)}', space=vmem, size = 0x8000, scoped, tag = 'scratch operand']
  #allocation3 [shape = 'bf16[128,128]{1,0:T(16,128)(2,1)}', space=vmem, size = 0x8000, scoped, tag = 'scratch operand']
  %s0 = inlined_call_operand.hbm [shape: f32[2,128,128], index: 0, kind: input, shape index: {}]
  %s1 = inlined_call_operand.hbm [shape: bf16[128,128], index: 1, kind: input, shape index: {}]
  %s2 = inlined_call_operand.vmem [shape: f32[1,128], index: 2, kind: input, shape index: {}]
  %s3 = inlined_call_operand.hbm [shape: bf16[128,256], index: 3, kind: input, shape index: {}]
  %s4 = inlined_call_operand.vmem [shape: f32[1,256], index: 4, kind: input, shape index: {}]
  %s5 = inlined_call_operand.vmem [shape: f32[1,128], index: 5, kind: input, shape index: {}]
  %s6 = inlined_call_operand.vmem [shape: f32[1,128], index: 6, kind: input, shape index: {}]
  %s7 = inlined_call_operand.hbm [shape: bf16[128,256], index: 7, kind: input, shape index: {}]
  %s8 = inlined_call_operand.vmem [shape: f32[1,256], index: 8, kind: input, shape index: {}]
  %s9 = inlined_call_operand.hbm [shape: bf16[256,128], index: 9, kind: input, shape index: {}]
  %s10 = inlined_call_operand.vmem [shape: f32[1,128], index: 10, kind: input, shape index: {}]
  %s11 = inlined_call_operand.vmem [shape: f32[1,128], index: 11, kind: input, shape index: {}]
  %s12 = inlined_call_operand.vmem [shape: f32[1,128], index: 12, kind: input, shape index: {}]
  %s13 = inlined_call_operand.hbm [shape: f32[2,128,128], index: 13, kind: output, shape index: {0}]
  %s14 = inlined_call_operand.hbm [shape: f32[2,128,128], index: 14, kind: output, shape index: {1}]
  %15 = xla_tuple %s13, %s14
  %s16 = sld [smem:[#allocation0]]
  $region117: #{tpu_custom_call.1} parent=0
    _
  %s18 = ssub.s32 1, %s16
  %s19 = scalar_select 0, %s18, %s16
  $region1: #{tpu_custom_call.1} parent=0
    #allocation4 [shape = 'u8[131072]{0}', space=vmem, size = 0x20000, scoped, tag = 'input window, operand 0']
    #allocation5 [shape = 's32[2]{0}', space=sflag, size = 0x8, scoped, tag = 'scoped memory for tpu_custom_call.1']
    #allocation6 [shape = 's32[2]{0}', space=sflag, size = 0x8, scoped, tag = 'scoped memory for tpu_custom_call.1']
    #allocation7 [shape = 'u8[32768]{0}', space=vmem, size = 0x8000, scoped, tag = 'input window, operand 1, single buffered']
    #allocation8 [shape = 's32[1]{0}', space=sflag, size = 0x4, scoped, tag = 'scoped memory for tpu_custom_call.1']
    #allocation9 [shape = 'u8[65536]{0}', space=vmem, size = 0x10000, scoped, tag = 'input window, operand 3, single buffered']
    #allocation10 [shape = 'u8[65536]{0}', space=vmem, size = 0x10000, scoped, tag = 'input window, operand 7, single buffered']
    #allocation11 [shape = 's32[1]{0}', space=sflag, size = 0x4, scoped, tag = 'scoped memory for tpu_custom_call.1']
    #allocation12 [shape = 'u8[65536]{0}', space=vmem, size = 0x10000, scoped, tag = 'input window, operand 9, single buffered']
    #allocation13 [shape = 'u8[65536]{0}', space=vmem, size = 0x10000, scoped, tag = 'output window, operand 0']
    #allocation14 [shape = 'u8[65536]{0}', space=vmem, size = 0x10000, scoped, tag = 'output window, operand 1']
    #allocation15 [shape = 's32[2]{0}', space=sflag, size = 0x8, scoped, tag = 'scoped memory for tpu_custom_call.1']
    %20 = vsyncpa [#allocation5], 0
    %s21 = scalar_lea.sflag [#allocation5], 1
    %22 = vsyncpa %s21, 0
    %23 = vsyncpa [#allocation8], 0
    %24 = vsyncpa [#allocation11], 0
    %25 = vsyncpa [#allocation6], 0
    %s26 = scalar_lea.sflag [#allocation6], 1
    %27 = vsyncpa %s26, 0
    %28 = vsyncpa [#allocation15], 0
    %s29 = scalar_lea.sflag [#allocation15], 1
    %30 = vsyncpa %s29, 0
    loop: start=0, step=1, limit=6
    $region2: #{tpu_custom_call.1} parent=1 // loop_pre_header
      _
    $region3: #{tpu_custom_call.1} parent=1 // loop_header
      %s32 = sphi 0, %s36
      %p33 = scmp.ge.s32.totalorder %s32, 6
      %s39 = sphi 0, %s51
      %s40 = sphi 0, %s47
      %s41 = sphi 0, %s39
      %s42 = sphi 0, %s40
      %s43 = sphi 0, %s41
      %s44 = sphi 0, %s42
      %s54 = sphi 0, %s56
      %s57 = sphi 0, %s54
      %s58 = sphi 0, %s57
      %s74 = sphi 0, %s58
      %s78 = sphi 0, %s78
      %s80 = sphi 0, %s78
      %s81 = sphi 0, %s80
      %s95 = sphi 0, %s81
      %s99 = sphi 0, %s99
      %s101 = sphi 0, %s99
      %s102 = sphi 0, %s101
      %s116 = sphi 0, %s102
      %s120 = sphi 0, %s120
      %s122 = sphi 0, %s120
      %s123 = sphi 0, %s122
      %s137 = sphi 0, %s123
      %s141 = sphi 0, %s141
      %s143 = sphi 0, %s141
      %s144 = sphi 0, %s143
      %s158 = sphi 0, %s144
      %s162 = sphi 0, %s162
      %s164 = sphi 0, %s162
      %s165 = sphi 0, %s164
      %s179 = sphi 0, %s165
      %s183 = sphi 0, %s183
      %s185 = sphi 0, %s183
      %s186 = sphi 0, %s185
      %s200 = sphi 0, %s186
      %s204 = sphi 0, %s204
      %s206 = sphi 0, %s204
      %s207 = sphi 0, %s206
      %s221 = sphi 0, %s207
      %s225 = sphi 0, %s225
      %s227 = sphi 0, %s225
      %s228 = sphi 0, %s227
      %s242 = sphi 0, %s228
      %s246 = sphi 0, %s246
      %s248 = sphi 0, %s246
      %s249 = sphi 0, %s248
      %s263 = sphi 0, %s249
      %s267 = sphi 0, %s267
      %s269 = sphi 0, %s267
      %s270 = sphi 0, %s269
      %s284 = sphi 0, %s270
      %s288 = sphi 0, %s288
      %s290 = sphi 0, %s288
      %s291 = sphi 0, %s290
      %s305 = sphi 0, %s291
      %s309 = sphi 0, %s309
      %s311 = sphi 0, %s309
      %s312 = sphi 0, %s311
      %s326 = sphi 0, %s312
      %s334 = sphi 0, %s336
      %s337 = sphi 0, %s334
      %s338 = sphi 0, %s337
      %s354 = sphi 0, %s338
      %s362 = sphi 0, %s364
      %s365 = sphi 0, %s362
      %s366 = sphi 0, %s365
      %s382 = sphi 0, %s366
    $region4: #{tpu_custom_call.1} parent=1 // loop_header_branch
      %35 = sbr.rel (%p33) target = $region8
    $region5: #{tpu_custom_call.1} parent=1 // loop_body
      %s37 = ssub.s32 %s32, 1
      %s38 = ssub.s32 %s32, 2
      %s45 = sadd.s32 1, %s40
      %p46 = scmp.ge.s32.totalorder %s45, 2
      %s47 = scalar_select %p46, 0, %s45
      %s48 = sadd.s32 1, %s39
      %s49 = scalar_select %p46, %s48, %s39
      %p50 = scmp.ge.s32.totalorder %s49, 2
      %s51 = scalar_select %p50, 0, %s49
      %s52 = ssub.s32 %s39, %s51
      %p53 = scmp.eq.s32.totalorder %s52, 0
      %s55 = sadd.s32 %s54, 1
      %s56 = scalar_select %p53, %s54, %s55
      %p59 = pneg %p53
      %p60 = scmp.eq.s32.totalorder %s32, 3
      %p61 = por %p59, %p60
      %p62 = scmp.ne.s32.totalorder %s54, %s57
      %p63 = scmp.eq.s32.totalorder %s32, 0
      %p64 = por %p62, %p63
      %p65 = scmp.ne.s32.totalorder %s54, %s57
      %p66 = scmp.eq.s32.totalorder %s37, 3
      %p67 = por %p65, %p66
      %p68 = scmp.ne.s32.totalorder %s57, %s58
      %p69 = scmp.eq.s32.totalorder %s37, 0
      %p70 = por %p68, %p69
      %p71 = scmp.ne.s32.totalorder %s57, %s58
      %p72 = scmp.eq.s32.totalorder %s38, 3
      %p73 = por %p71, %p72
      %p75 = scmp.ne.s32.totalorder %s58, %s74
      %p76 = scmp.eq.s32.totalorder %s38, 0
      %p77 = por %p75, %p76
      %s79 = sadd.s32 %s78, 1
      %p82 = scmp.eq.s32.totalorder %s32, 3
      %p83 = scmp.ne.s32.totalorder %s78, %s80
      %p84 = scmp.eq.s32.totalorder %s32, 0
      %p85 = por %p83, %p84
      %p86 = scmp.ne.s32.totalorder %s78, %s80
      %p87 = scmp.eq.s32.totalorder %s37, 3
      %p88 = por %p86, %p87
      %p89 = scmp.ne.s32.totalorder %s80, %s81
      %p90 = scmp.eq.s32.totalorder %s37, 0
      %p91 = por %p89, %p90
      %p92 = scmp.ne.s32.totalorder %s80, %s81
      %p93 = scmp.eq.s32.totalorder %s38, 3
      %p94 = por %p92, %p93
      %p96 = scmp.ne.s32.totalorder %s81, %s95
      %p97 = scmp.eq.s32.totalorder %s38, 0
      %p98 = por %p96, %p97
      %s100 = sadd.s32 %s99, 1
      %p103 = scmp.eq.s32.totalorder %s32, 3
      %p104 = scmp.ne.s32.totalorder %s99, %s101
      %p105 = scmp.eq.s32.totalorder %s32, 0
      %p106 = por %p104, %p105
      %p107 = scmp.ne.s32.totalorder %s99, %s101
      %p108 = scmp.eq.s32.totalorder %s37, 3
      %p109 = por %p107, %p108
      %p110 = scmp.ne.s32.totalorder %s101, %s102
      %p111 = scmp.eq.s32.totalorder %s37, 0
      %p112 = por %p110, %p111
      %p113 = scmp.ne.s32.totalorder %s101, %s102
      %p114 = scmp.eq.s32.totalorder %s38, 3
      %p115 = por %p113, %p114
      %p117 = scmp.ne.s32.totalorder %s102, %s116
      %p118 = scmp.eq.s32.totalorder %s38, 0
      %p119 = por %p117, %p118
      %s121 = sadd.s32 %s120, 1
      %p124 = scmp.eq.s32.totalorder %s32, 3
      %p125 = scmp.ne.s32.totalorder %s120, %s122
      %p126 = scmp.eq.s32.totalorder %s32, 0
      %p127 = por %p125, %p126
      %p128 = scmp.ne.s32.totalorder %s120, %s122
      %p129 = scmp.eq.s32.totalorder %s37, 3
      %p130 = por %p128, %p129
      %p131 = scmp.ne.s32.totalorder %s122, %s123
      %p132 = scmp.eq.s32.totalorder %s37, 0
      %p133 = por %p131, %p132
      %p134 = scmp.ne.s32.totalorder %s122, %s123
      %p135 = scmp.eq.s32.totalorder %s38, 3
      %p136 = por %p134, %p135
      %p138 = scmp.ne.s32.totalorder %s123, %s137
      %p139 = scmp.eq.s32.totalorder %s38, 0
      %p140 = por %p138, %p139
      %s142 = sadd.s32 %s141, 1
      %p145 = scmp.eq.s32.totalorder %s32, 3
      %p146 = scmp.ne.s32.totalorder %s141, %s143
      %p147 = scmp.eq.s32.totalorder %s32, 0
      %p148 = por %p146, %p147
      %p149 = scmp.ne.s32.totalorder %s141, %s143
      %p150 = scmp.eq.s32.totalorder %s37, 3
      %p151 = por %p149, %p150
      %p152 = scmp.ne.s32.totalorder %s143, %s144
      %p153 = scmp.eq.s32.totalorder %s37, 0
      %p154 = por %p152, %p153
      %p155 = scmp.ne.s32.totalorder %s143, %s144
      %p156 = scmp.eq.s32.totalorder %s38, 3
      %p157 = por %p155, %p156
      %p159 = scmp.ne.s32.totalorder %s144, %s158
      %p160 = scmp.eq.s32.totalorder %s38, 0
      %p161 = por %p159, %p160
      %s163 = sadd.s32 %s162, 1
      %p166 = scmp.eq.s32.totalorder %s32, 3
      %p167 = scmp.ne.s32.totalorder %s162, %s164
      %p168 = scmp.eq.s32.totalorder %s32, 0
      %p169 = por %p167, %p168
      %p170 = scmp.ne.s32.totalorder %s162, %s164
      %p171 = scmp.eq.s32.totalorder %s37, 3
      %p172 = por %p170, %p171
      %p173 = scmp.ne.s32.totalorder %s164, %s165
      %p174 = scmp.eq.s32.totalorder %s37, 0
      %p175 = por %p173, %p174
      %p176 = scmp.ne.s32.totalorder %s164, %s165
      %p177 = scmp.eq.s32.totalorder %s38, 3
      %p178 = por %p176, %p177
      %p180 = scmp.ne.s32.totalorder %s165, %s179
      %p181 = scmp.eq.s32.totalorder %s38, 0
      %p182 = por %p180, %p181
      %s184 = sadd.s32 %s183, 1
      %p187 = scmp.eq.s32.totalorder %s32, 3
      %p188 = scmp.ne.s32.totalorder %s183, %s185
      %p189 = scmp.eq.s32.totalorder %s32, 0
      %p190 = por %p188, %p189
      %p191 = scmp.ne.s32.totalorder %s183, %s185
      %p192 = scmp.eq.s32.totalorder %s37, 3
      %p193 = por %p191, %p192
      %p194 = scmp.ne.s32.totalorder %s185, %s186
      %p195 = scmp.eq.s32.totalorder %s37, 0
      %p196 = por %p194, %p195
      %p197 = scmp.ne.s32.totalorder %s185, %s186
      %p198 = scmp.eq.s32.totalorder %s38, 3
      %p199 = por %p197, %p198
      %p201 = scmp.ne.s32.totalorder %s186, %s200
      %p202 = scmp.eq.s32.totalorder %s38, 0
      %p203 = por %p201, %p202
      %s205 = sadd.s32 %s204, 1
      %p208 = scmp.eq.s32.totalorder %s32, 3
      %p209 = scmp.ne.s32.totalorder %s204, %s206
      %p210 = scmp.eq.s32.totalorder %s32, 0
      %p211 = por %p209, %p210
      %p212 = scmp.ne.s32.totalorder %s204, %s206
      %p213 = scmp.eq.s32.totalorder %s37, 3
      %p214 = por %p212, %p213
      %p215 = scmp.ne.s32.totalorder %s206, %s207
      %p216 = scmp.eq.s32.totalorder %s37, 0
      %p217 = por %p215, %p216
      %p218 = scmp.ne.s32.totalorder %s206, %s207
      %p219 = scmp.eq.s32.totalorder %s38, 3
      %p220 = por %p218, %p219
      %p222 = scmp.ne.s32.totalorder %s207, %s221
      %p223 = scmp.eq.s32.totalorder %s38, 0
      %p224 = por %p222, %p223
      %s226 = sadd.s32 %s225, 1
      %p229 = scmp.eq.s32.totalorder %s32, 3
      %p230 = scmp.ne.s32.totalorder %s225, %s227
      %p231 = scmp.eq.s32.totalorder %s32, 0
      %p232 = por %p230, %p231
      %p233 = scmp.ne.s32.totalorder %s225, %s227
      %p234 = scmp.eq.s32.totalorder %s37, 3
      %p235 = por %p233, %p234
      %p236 = scmp.ne.s32.totalorder %s227, %s228
      %p237 = scmp.eq.s32.totalorder %s37, 0
      %p238 = por %p236, %p237
      %p239 = scmp.ne.s32.totalorder %s227, %s228
      %p240 = scmp.eq.s32.totalorder %s38, 3
      %p241 = por %p239, %p240
      %p243 = scmp.ne.s32.totalorder %s228, %s242
      %p244 = scmp.eq.s32.totalorder %s38, 0
      %p245 = por %p243, %p244
      %s247 = sadd.s32 %s246, 1
      %p250 = scmp.eq.s32.totalorder %s32, 3
      %p251 = scmp.ne.s32.totalorder %s246, %s248
      %p252 = scmp.eq.s32.totalorder %s32, 0
      %p253 = por %p251, %p252
      %p254 = scmp.ne.s32.totalorder %s246, %s248
      %p255 = scmp.eq.s32.totalorder %s37, 3
      %p256 = por %p254, %p255
      %p257 = scmp.ne.s32.totalorder %s248, %s249
      %p258 = scmp.eq.s32.totalorder %s37, 0
      %p259 = por %p257, %p258
      %p260 = scmp.ne.s32.totalorder %s248, %s249
      %p261 = scmp.eq.s32.totalorder %s38, 3
      %p262 = por %p260, %p261
      %p264 = scmp.ne.s32.totalorder %s249, %s263
      %p265 = scmp.eq.s32.totalorder %s38, 0
      %p266 = por %p264, %p265
      %s268 = sadd.s32 %s267, 1
      %p271 = scmp.eq.s32.totalorder %s32, 3
      %p272 = scmp.ne.s32.totalorder %s267, %s269
      %p273 = scmp.eq.s32.totalorder %s32, 0
      %p274 = por %p272, %p273
      %p275 = scmp.ne.s32.totalorder %s267, %s269
      %p276 = scmp.eq.s32.totalorder %s37, 3
      %p277 = por %p275, %p276
      %p278 = scmp.ne.s32.totalorder %s269, %s270
      %p279 = scmp.eq.s32.totalorder %s37, 0
      %p280 = por %p278, %p279
      %p281 = scmp.ne.s32.totalorder %s269, %s270
      %p282 = scmp.eq.s32.totalorder %s38, 3
      %p283 = por %p281, %p282
      %p285 = scmp.ne.s32.totalorder %s270, %s284
      %p286 = scmp.eq.s32.totalorder %s38, 0
      %p287 = por %p285, %p286
      %s289 = sadd.s32 %s288, 1
      %p292 = scmp.eq.s32.totalorder %s32, 3
      %p293 = scmp.ne.s32.totalorder %s288, %s290
      %p294 = scmp.eq.s32.totalorder %s32, 0
      %p295 = por %p293, %p294
      %p296 = scmp.ne.s32.totalorder %s288, %s290
      %p297 = scmp.eq.s32.totalorder %s37, 3
      %p298 = por %p296, %p297
      %p299 = scmp.ne.s32.totalorder %s290, %s291
      %p300 = scmp.eq.s32.totalorder %s37, 0
      %p301 = por %p299, %p300
      %p302 = scmp.ne.s32.totalorder %s290, %s291
      %p303 = scmp.eq.s32.totalorder %s38, 3
      %p304 = por %p302, %p303
      %p306 = scmp.ne.s32.totalorder %s291, %s305
      %p307 = scmp.eq.s32.totalorder %s38, 0
      %p308 = por %p306, %p307
      %s310 = sadd.s32 %s309, 1
      %p313 = scmp.eq.s32.totalorder %s32, 3
      %p314 = scmp.ne.s32.totalorder %s309, %s311
      %p315 = scmp.eq.s32.totalorder %s32, 0
      %p316 = por %p314, %p315
      %p317 = scmp.ne.s32.totalorder %s309, %s311
      %p318 = scmp.eq.s32.totalorder %s37, 3
      %p319 = por %p317, %p318
      %p320 = scmp.ne.s32.totalorder %s311, %s312
      %p321 = scmp.eq.s32.totalorder %s37, 0
      %p322 = por %p320, %p321
      %p323 = scmp.ne.s32.totalorder %s311, %s312
      %p324 = scmp.eq.s32.totalorder %s38, 3
      %p325 = por %p323, %p324
      %p327 = scmp.ne.s32.totalorder %s312, %s326
      %p328 = scmp.eq.s32.totalorder %s38, 0
      %p329 = por %p327, %p328
      %s330 = ssub.s32 %s39, %s51
      %s331 = ssub.s32 %s40, %s47
      %s332 = sor.u32 %s330, %s331
      %p333 = scmp.eq.s32.totalorder %s332, 0
      %s335 = sadd.s32 %s334, 1
      %s336 = scalar_select %p333, %s334, %s335
      %p339 = pneg %p333
      %p340 = scmp.eq.s32.totalorder %s32, 3
      %p341 = por %p339, %p340
      %p342 = scmp.ne.s32.totalorder %s334, %s337
      %p343 = scmp.eq.s32.totalorder %s32, 0
      %p344 = por %p342, %p343
      %p345 = scmp.ne.s32.totalorder %s334, %s337
      %p346 = scmp.eq.s32.totalorder %s37, 3
      %p347 = por %p345, %p346
      %p348 = scmp.ne.s32.totalorder %s337, %s338
      %p349 = scmp.eq.s32.totalorder %s37, 0
      %p350 = por %p348, %p349
      %p351 = scmp.ne.s32.totalorder %s337, %s338
      %p352 = scmp.eq.s32.totalorder %s38, 3
      %p353 = por %p351, %p352
      %p355 = scmp.ne.s32.totalorder %s338, %s354
      %p356 = scmp.eq.s32.totalorder %s38, 0
      %p357 = por %p355, %p356
      %s358 = ssub.s32 %s39, %s51
      %s359 = ssub.s32 %s40, %s47
      %s360 = sor.u32 %s358, %s359
      %p361 = scmp.eq.s32.totalorder %s360, 0
      %s363 = sadd.s32 %s362, 1
      %s364 = scalar_select %p361, %s362, %s363
      %p367 = pneg %p361
      %p368 = scmp.eq.s32.totalorder %s32, 3
      %p369 = por %p367, %p368
      %p370 = scmp.ne.s32.totalorder %s362, %s365
      %p371 = scmp.eq.s32.totalorder %s32, 0
      %p372 = por %p370, %p371
      %p373 = scmp.ne.s32.totalorder %s362, %s365
      %p374 = scmp.eq.s32.totalorder %s37, 3
      %p375 = por %p373, %p374
      %p376 = scmp.ne.s32.totalorder %s365, %s366
      %p377 = scmp.eq.s32.totalorder %s37, 0
      %p378 = por %p376, %p377
      %p379 = scmp.ne.s32.totalorder %s365, %s366
      %p380 = scmp.eq.s32.totalorder %s38, 3
      %p381 = por %p379, %p380
      %p383 = scmp.ne.s32.totalorder %s366, %s382
      %p384 = scmp.eq.s32.totalorder %s38, 0
      %p385 = por %p383, %p384
      %p386 = scmp.le.s32.totalorder 1, %s32
      %p387 = scmp.lt.s32.totalorder %s32, 5
      %p388 = pnand %p386, %p387
      %p389 = pneg %p388
      // Predicated region
      $region9: #{tpu_custom_call.1} parent=5 // pred_check
        _
      $region10: #{tpu_custom_call.1} parent=5 // pred_check_branch
        %391 = sbr.rel (%p388) target = $region12
      $region11: #{tpu_custom_call.1} parent=5 // pred_region
        %s392 = ssub.s32 %s32, 1
        // Predicated region
        $region13: #{tpu_custom_call.1} parent=11 // pred_check
          %p393 = pneg %p91
        $region14: #{tpu_custom_call.1} parent=11 // pred_check_branch
          %395 = sbr.rel (%p393) target = $region16
        $region15: #{tpu_custom_call.1} parent=11 // pred_region
          %s397 = ssub.s32 1024, 1024
          %398 = vsyncadd [#allocation8], %s397
          %s399 = sshll.u32 [#allocation7], 4
          %s400 = int_to_ptr.vmem [resolvable:$true] %s399
          %405 = dma.hbm_to_vmem [thread:$0]  %s1, 1024, %s400, [#allocation8], 64, 64, 4
        $region16: #{tpu_custom_call.1} parent=11 // pred_fallthru
          _
        // Predicated region
        $region17: #{tpu_custom_call.1} parent=11 // pred_check
          %p406 = pneg %p112
        $region18: #{tpu_custom_call.1} parent=11 // pred_check_branch
          %408 = sbr.rel (%p406) target = $region20
        $region19: #{tpu_custom_call.1} parent=11 // pred_region
          _
        $region20: #{tpu_custom_call.1} parent=11 // pred_fallthru
          _
        // Predicated region
        $region21: #{tpu_custom_call.1} parent=11 // pred_check
          %p409 = pneg %p133
        $region22: #{tpu_custom_call.1} parent=11 // pred_check_branch
          %411 = sbr.rel (%p409) target = $region24
        $region23: #{tpu_custom_call.1} parent=11 // pred_region
          %s413 = ssub.s32 2048, 2048
          %414 = vsyncadd [#allocation8], %s413
          %s415 = sshll.u32 [#allocation9], 4
          %s416 = int_to_ptr.vmem [resolvable:$true] %s415
          %421 = dma.hbm_to_vmem [thread:$0]  %s3, 2048, %s416, [#allocation8], 128, 128, 8
        $region24: #{tpu_custom_call.1} parent=11 // pred_fallthru
          _
        // Predicated region
        $region25: #{tpu_custom_call.1} parent=11 // pred_check
          %p422 = pneg %p154
        $region26: #{tpu_custom_call.1} parent=11 // pred_check_branch
          %424 = sbr.rel (%p422) target = $region28
        $region27: #{tpu_custom_call.1} parent=11 // pred_region
          _
        $region28: #{tpu_custom_call.1} parent=11 // pred_fallthru
          _
        // Predicated region
        $region29: #{tpu_custom_call.1} parent=11 // pred_check
          %p425 = pneg %p175
        $region30: #{tpu_custom_call.1} parent=11 // pred_check_branch
          %427 = sbr.rel (%p425) target = $region32
        $region31: #{tpu_custom_call.1} parent=11 // pred_region
          _
        $region32: #{tpu_custom_call.1} parent=11 // pred_fallthru
          _
        // Predicated region
        $region33: #{tpu_custom_call.1} parent=11 // pred_check
          %p428 = pneg %p196
        $region34: #{tpu_custom_call.1} parent=11 // pred_check_branch
          %430 = sbr.rel (%p428) target = $region36
        $region35: #{tpu_custom_call.1} parent=11 // pred_region
          _
        $region36: #{tpu_custom_call.1} parent=11 // pred_fallthru
          _
        // Predicated region
        $region37: #{tpu_custom_call.1} parent=11 // pred_check
          %p431 = pneg %p217
        $region38: #{tpu_custom_call.1} parent=11 // pred_check_branch
          %433 = sbr.rel (%p431) target = $region40
        $region39: #{tpu_custom_call.1} parent=11 // pred_region
          %s435 = ssub.s32 2048, 2048
          %436 = vsyncadd [#allocation11], %s435
          %s437 = sshll.u32 [#allocation10], 4
          %s438 = int_to_ptr.vmem [resolvable:$true] %s437
          %443 = dma.hbm_to_vmem [thread:$0]  %s7, 2048, %s438, [#allocation11], 128, 128, 8
        $region40: #{tpu_custom_call.1} parent=11 // pred_fallthru
          _
        // Predicated region
        $region41: #{tpu_custom_call.1} parent=11 // pred_check
          %p444 = pneg %p238
        $region42: #{tpu_custom_call.1} parent=11 // pred_check_branch
          %446 = sbr.rel (%p444) target = $region44
        $region43: #{tpu_custom_call.1} parent=11 // pred_region
          _
        $region44: #{tpu_custom_call.1} parent=11 // pred_fallthru
          _
        // Predicated region
        $region45: #{tpu_custom_call.1} parent=11 // pred_check
          %p447 = pneg %p259
        $region46: #{tpu_custom_call.1} parent=11 // pred_check_branch
          %449 = sbr.rel (%p447) target = $region48
        $region47: #{tpu_custom_call.1} parent=11 // pred_region
          %s451 = ssub.s32 2048, 2048
          %452 = vsyncadd [#allocation11], %s451
          %s453 = sshll.u32 [#allocation12], 4
          %s454 = int_to_ptr.vmem [resolvable:$true] %s453
          %459 = dma.hbm_to_vmem [thread:$0]  %s9, 2048, %s454, [#allocation11], 64, 64, 4
        $region48: #{tpu_custom_call.1} parent=11 // pred_fallthru
          _
        // Predicated region
        $region49: #{tpu_custom_call.1} parent=11 // pred_check
          %p460 = pneg %p280
        $region50: #{tpu_custom_call.1} parent=11 // pred_check_branch
          %462 = sbr.rel (%p460) target = $region52
        $region51: #{tpu_custom_call.1} parent=11 // pred_region
          _
        $region52: #{tpu_custom_call.1} parent=11 // pred_fallthru
          _
        // Predicated region
        $region53: #{tpu_custom_call.1} parent=11 // pred_check
          %p463 = pneg %p301
        $region54: #{tpu_custom_call.1} parent=11 // pred_check_branch
          %465 = sbr.rel (%p463) target = $region56
        $region55: #{tpu_custom_call.1} parent=11 // pred_region
          _
        $region56: #{tpu_custom_call.1} parent=11 // pred_fallthru
          _
        // Predicated region
        $region57: #{tpu_custom_call.1} parent=11 // pred_check
          %p466 = pneg %p322
        $region58: #{tpu_custom_call.1} parent=11 // pred_check_branch
          %468 = sbr.rel (%p466) target = $region60
        $region59: #{tpu_custom_call.1} parent=11 // pred_region
          _
        $region60: #{tpu_custom_call.1} parent=11 // pred_fallthru
          _
      $region12: #{tpu_custom_call.1} parent=5 // pred_fallthru
        _
      %p469 = scmp.lt.s32.totalorder %s32, 4
      // Predicated region
      $region61: #{tpu_custom_call.1} parent=5 // pred_check
        %p470 = pneg %p469
      $region62: #{tpu_custom_call.1} parent=5 // pred_check_branch
        %472 = sbr.rel (%p470) target = $region64
      $region63: #{tpu_custom_call.1} parent=5 // pred_region
        // Predicated region
        $region65: #{tpu_custom_call.1} parent=63 // pred_check
          %p473 = pneg %p64
        $region66: #{tpu_custom_call.1} parent=63 // pred_check_branch
          %475 = sbr.rel (%p473) target = $region68
        $region67: #{tpu_custom_call.1} parent=63 // pred_region
          %s476 = sand.u32 %s54, 1
          %s477 = scalar_lea.sflag [#allocation5], %s476
          %s478 = sand.u32 %s54, 1
          %s479 = smul.addr %s478, 128
          %s480 = scalar_lea.vmem [#allocation4], %s479
          %s482 = ssub.s32 2048, 2048
          %483 = vsyncadd %s477, %s482
          %s484 = smul.addr %s39, 16
          %s485 = smul.addr %s484, 128
          %s486 = scalar_lea.hbm %s0, %s485
          %s487 = sshll.u32 %s480, 4
          %s488 = int_to_ptr.vmem [resolvable:$true] %s487
          %493 = dma.hbm_to_vmem [thread:$0]  %s486, 2048, %s488, %s477, 128, 128, 8
        $region68: #{tpu_custom_call.1} parent=63 // pred_fallthru
          _
      $region64: #{tpu_custom_call.1} parent=5 // pred_fallthru
        _
      %p494 = scmp.le.s32.totalorder 1, %s32
      %p495 = scmp.lt.s32.totalorder %s32, 5
      %p496 = pnand %p494, %p495
      %p497 = pneg %p496
      // Predicated region
      $region69: #{tpu_custom_call.1} parent=5 // pred_check
        _
      $region70: #{tpu_custom_call.1} parent=5 // pred_check_branch
        %499 = sbr.rel (%p496) target = $region72
      $region71: #{tpu_custom_call.1} parent=5 // pred_region
        %s500 = ssub.s32 %s32, 1
        %s501 = sand.u32 %s57, 1
        %s502 = scalar_lea.sflag [#allocation5], %s501
        %s503 = sand.u32 %s57, 1
        %s504 = smul.addr %s503, 128
        %s505 = scalar_lea.vmem [#allocation4], %s504
        // Predicated region
        $region73: #{tpu_custom_call.1} parent=71 // pred_check
          %p506 = pneg %p70
        $region74: #{tpu_custom_call.1} parent=71 // pred_check_branch
          %508 = sbr.rel (%p506) target = $region76
        $region75: #{tpu_custom_call.1} parent=71 // pred_region
          %509 = dma.done %s502, 2048
        $region76: #{tpu_custom_call.1} parent=71 // pred_fallthru
          _
        // Predicated region
        $region77: #{tpu_custom_call.1} parent=71 // pred_check
          %p510 = pneg %p91
        $region78: #{tpu_custom_call.1} parent=71 // pred_check_branch
          %512 = sbr.rel (%p510) target = $region80
        $region79: #{tpu_custom_call.1} parent=71 // pred_region
          %513 = dma.done [#allocation8], 1024
        $region80: #{tpu_custom_call.1} parent=71 // pred_fallthru
          _
        // Predicated region
        $region81: #{tpu_custom_call.1} parent=71 // pred_check
          %p514 = pneg %p133
        $region82: #{tpu_custom_call.1} parent=71 // pred_check_branch
          %516 = sbr.rel (%p514) target = $region84
        $region83: #{tpu_custom_call.1} parent=71 // pred_region
          %517 = dma.done [#allocation8], 2048
        $region84: #{tpu_custom_call.1} parent=71 // pred_fallthru
          _
        // Predicated region
        $region85: #{tpu_custom_call.1} parent=71 // pred_check
          %p518 = pneg %p217
        $region86: #{tpu_custom_call.1} parent=71 // pred_check_branch
          %520 = sbr.rel (%p518) target = $region88
        $region87: #{tpu_custom_call.1} parent=71 // pred_region
          %521 = dma.done [#allocation11], 2048
        $region88: #{tpu_custom_call.1} parent=71 // pred_fallthru
          _
        // Predicated region
        $region89: #{tpu_custom_call.1} parent=71 // pred_check
          %p522 = pneg %p259
        $region90: #{tpu_custom_call.1} parent=71 // pred_check_branch
          %524 = sbr.rel (%p522) target = $region92
        $region91: #{tpu_custom_call.1} parent=71 // pred_region
          %525 = dma.done [#allocation11], 2048
        $region92: #{tpu_custom_call.1} parent=71 // pred_fallthru
          _
        %s526 = sand.u32 %s57, 1
        %s527 = scalar_lea.sflag [#allocation5], %s526
        %s528 = sand.u32 %s57, 1
        %s529 = smul.addr %s528, 128
        %s530 = scalar_lea.vmem [#allocation4], %s529
        %p531 = pneg %p70
        %p532 = pneg %p67
        %p533 = pneg %p91
        %p534 = pneg %p88
        %p535 = pneg %p112
        %p536 = pneg %p109
        %p537 = pneg %p133
        %p538 = pneg %p130
        %p539 = pneg %p154
        %p540 = pneg %p151
        %p541 = pneg %p175
        %p542 = pneg %p172
        %p543 = pneg %p196
        %p544 = pneg %p193
        %p545 = pneg %p217
        %p546 = pneg %p214
        %p547 = pneg %p238
        %p548 = pneg %p235
        %p549 = pneg %p259
        %p550 = pneg %p256
        %p551 = pneg %p280
        %p552 = pneg %p277
        %p553 = pneg %p301
        %p554 = pneg %p298
        %p555 = pneg %p322
        %p556 = pneg %p319
        %p557 = pneg %p350
        %p558 = pneg %p347
        %s559 = sand.u32 %s337, 1
        %s560 = scalar_lea.sflag [#allocation6], %s559
        %s561 = sand.u32 %s337, 1
        %s562 = smul.addr %s561, 64
        %s563 = scalar_lea.vmem [#allocation13], %s562
        %p564 = pneg %p378
        %p565 = pneg %p375
        %s566 = sand.u32 %s365, 1
        %s567 = scalar_lea.sflag [#allocation15], %s566
        %s568 = sand.u32 %s365, 1
        %s569 = smul.addr %s568, 64
        %s570 = scalar_lea.vmem [#allocation14], %s569
        %s571 = smul.u32 8, %s42
        %s572 = smul.u32 8, %s42
        %p574 = scmp.eq.s32.totalorder %s42, 0
        // Predicated region
        $region93: #{tpu_custom_call.1} parent=71 // pred_check
          %p575 = pneg %p574
        $region94: #{tpu_custom_call.1} parent=71 // pred_check_branch
          %577 = sbr.rel (%p575) target = $region96
        $region95: #{tpu_custom_call.1} parent=71 // pred_region
          %v578 = vld [vmem:[%s505] sm:$0xff]
          %v579 = vld [vmem:[%s505 + $0x8] sm:$0xff]
          %v580 = vld [vmem:[%s505 + $0x10] sm:$0xff]
          %v581 = vld [vmem:[%s505 + $0x18] sm:$0xff]
          %v582 = vld [vmem:[%s505 + $0x20] sm:$0xff]
          %v583 = vld [vmem:[%s505 + $0x28] sm:$0xff]
          %v584 = vld [vmem:[%s505 + $0x30] sm:$0xff]
          %v585 = vld [vmem:[%s505 + $0x38] sm:$0xff]
          %v586 = vld [vmem:[%s505 + $0x40] sm:$0xff]
          %v587 = vld [vmem:[%s505 + $0x48] sm:$0xff]
          %v588 = vld [vmem:[%s505 + $0x50] sm:$0xff]
          %v589 = vld [vmem:[%s505 + $0x58] sm:$0xff]
          %v590 = vld [vmem:[%s505 + $0x60] sm:$0xff]
          %v591 = vld [vmem:[%s505 + $0x68] sm:$0xff]
          %v592 = vld [vmem:[%s505 + $0x70] sm:$0xff]
          %v593 = vld [vmem:[%s505 + $0x78] sm:$0xff]
          %v594 = vpack.c.bf16 %v579, %v578
          %v595 = vpack.c.bf16 %v581, %v580
          %v596 = vpack.c.bf16 %v583, %v582
          %v597 = vpack.c.bf16 %v585, %v584
          %v598 = vpack.c.bf16 %v587, %v586
          %v599 = vpack.c.bf16 %v589, %v588
          %v600 = vpack.c.bf16 %v591, %v590
          %v601 = vpack.c.bf16 %v593, %v592
          %v602 = vld [vmem:[#allocation9] sm:$0xff]
          %v603 = vld [vmem:[#allocation9 + $0x8] sm:$0xff]
          %v604 = vld [vmem:[#allocation9 + $0x10] sm:$0xff]
          %v605 = vld [vmem:[#allocation9 + $0x18] sm:$0xff]
          %v606 = vld [vmem:[#allocation9 + $0x20] sm:$0xff]
          %v607 = vld [vmem:[#allocation9 + $0x28] sm:$0xff]
          %v608 = vld [vmem:[#allocation9 + $0x30] sm:$0xff]
          %v609 = vld [vmem:[#allocation9 + $0x38] sm:$0xff]
          %v610 = vld [vmem:[#allocation9 + $0x40] sm:$0xff]
          %v611 = vld [vmem:[#allocation9 + $0x48] sm:$0xff]
          %v612 = vld [vmem:[#allocation9 + $0x50] sm:$0xff]
          %v613 = vld [vmem:[#allocation9 + $0x58] sm:$0xff]
          %v614 = vld [vmem:[#allocation9 + $0x60] sm:$0xff]
          %v615 = vld [vmem:[#allocation9 + $0x68] sm:$0xff]
          %v616 = vld [vmem:[#allocation9 + $0x70] sm:$0xff]
          %v617 = vld [vmem:[#allocation9 + $0x78] sm:$0xff]
          %v618 = vld [vmem:[%s4] sm:$0x3]
          %v620 = vlaneseq
          %v621 = vshrl.u32 %v620, 7
          %v622 = vsub.s32 0, %v621
          %v623 = vrot.slane %v618, %v622
          %v624 = vlaneseq
          %v625 = vshrl.u32 %v624, 7
          %v626 = vsub.s32 1, %v625
          %v627 = vrot.slane %v618, %v626
          %v646 = vunpack.c.l.b16 %v602
          %v647 = vunpack.c.h.b16 %v602
          %v648 = vunpack.c.l.b16 %v603
          %v649 = vunpack.c.h.b16 %v603
          %v650 = vunpack.c.l.b16 %v604
          %v651 = vunpack.c.h.b16 %v604
          %v652 = vunpack.c.l.b16 %v605
          %v653 = vunpack.c.h.b16 %v605
          %v654 = vunpack.c.l.b16 %v606
          %v655 = vunpack.c.h.b16 %v606
          %v656 = vunpack.c.l.b16 %v607
          %v657 = vunpack.c.h.b16 %v607
          %v658 = vunpack.c.l.b16 %v608
          %v659 = vunpack.c.h.b16 %v608
          %v660 = vunpack.c.l.b16 %v609
          %v661 = vunpack.c.h.b16 %v609
          %v662 = vunpack.c.l.b16 %v610
          %v663 = vunpack.c.h.b16 %v610
          %v664 = vunpack.c.l.b16 %v611
          %v665 = vunpack.c.h.b16 %v611
          %v666 = vunpack.c.l.b16 %v612
          %v667 = vunpack.c.h.b16 %v612
          %v668 = vunpack.c.l.b16 %v613
          %v669 = vunpack.c.h.b16 %v613
          %v670 = vunpack.c.l.b16 %v614
          %v671 = vunpack.c.h.b16 %v614
          %v672 = vunpack.c.l.b16 %v615
          %v673 = vunpack.c.h.b16 %v615
          %v674 = vunpack.c.l.b16 %v616
          %v675 = vunpack.c.h.b16 %v616
          %v676 = vunpack.c.l.b16 %v617
          %v677 = vunpack.c.h.b16 %v617
          %v678 = vpack.c.b16 %v648, %v646
          %v679 = vpack.c.b16 %v649, %v647
          %v680 = vpack.c.b16 %v652, %v650
          %v681 = vpack.c.b16 %v653, %v651
          %v682 = vpack.c.b16 %v656, %v654
          %v683 = vpack.c.b16 %v657, %v655
          %v684 = vpack.c.b16 %v660, %v658
          %v685 = vpack.c.b16 %v661, %v659
          %v686 = vpack.c.b16 %v664, %v662
          %v687 = vpack.c.b16 %v665, %v663
          %v688 = vpack.c.b16 %v668, %v666
          %v689 = vpack.c.b16 %v669, %v667
          %v690 = vpack.c.b16 %v672, %v670
          %v691 = vpack.c.b16 %v673, %v671
          %v692 = vpack.c.b16 %v676, %v674
          %v693 = vpack.c.b16 %v677, %v675
          %710 = vmatprep.subr.bf16.mxu0 %v679
          %711 = vmatpush1.bf16.msra.mxu0 %v678
          %712 = vmatprep.subr.bf16.mxu0 %v681
          %713 = vmatpush1.bf16.msra.mxu0 %v680
          %714 = vmatprep.subr.bf16.mxu0 %v683
          %715 = vmatpush1.bf16.msra.mxu0 %v682
          %716 = vmatprep.subr.bf16.mxu0 %v685
          %717 = vmatpush1.bf16.msra.mxu0 %v684
          %718 = vmatprep.subr.bf16.mxu0 %v687
          %719 = vmatpush1.bf16.msra.mxu0 %v686
          %720 = vmatprep.subr.bf16.mxu0 %v689
          %721 = vmatpush1.bf16.msra.mxu0 %v688
          %722 = vmatprep.subr.bf16.mxu0 %v691
          %723 = vmatpush1.bf16.msra.mxu0 %v690
          %724 = vmatprep.subr.bf16.mxu0 %v693
          %725 = vmatpush1.bf16.msra.mxu0 %v692
          %726 = vmatprep.subr.bf16.mxu0 0
          %727 = vmatpush1.bf16.msra.mxu0 0
          %728 = vmatprep.subr.bf16.mxu0 0
          %729 = vmatpush1.bf16.msra.mxu0 0
          %730 = vmatprep.subr.bf16.mxu0 0
          %731 = vmatpush1.bf16.msra.mxu0 0
          %732 = vmatprep.subr.bf16.mxu0 0
          %733 = vmatpush1.bf16.msra.mxu0 0
          %734 = vmatprep.subr.bf16.mxu0 0
          %735 = vmatpush1.bf16.msra.mxu0 0
          %736 = vmatprep.subr.bf16.mxu0 0
          %737 = vmatpush1.bf16.msra.mxu0 0
          %738 = vmatprep.subr.bf16.mxu0 0
          %739 = vmatpush1.bf16.msra.mxu0 0
          %740 = vmatprep.subr.bf16.mxu0 0
          %741 = vmatpush1.bf16.msra.mxu0 0
          %742 = vmatprep.mubr.bf16.mxu0 0
          %743 = vmatmul.mubr.bf16.gmra.mrb[0].mxu0 %v594
          %v744 = vpop.f32.mrb[0].mxu0
          %v745 = vadd.f32 %v623, %v744
          %v746 = vpop.f32.mrb[0].mxu0
          %v747 = vadd.f32 %v627, %v746
          %v748 = vpop.f32.mrb[0].mxu0
          %v749 = vadd.f32 %v623, %v748
          %v750 = vpop.f32.mrb[0].mxu0
          %v751 = vadd.f32 %v627, %v750
          %752 = vmatprep.mubr.bf16.mxu0 0
          %753 = vmatmul.mubr.bf16.gmra.mrb[0].mxu0 %v595
          %v754 = vpop.f32.mrb[0].mxu0
          %v755 = vadd.f32 %v623, %v754
          %v756 = vpop.f32.mrb[0].mxu0
          %v757 = vadd.f32 %v627, %v756
          %v758 = vpop.f32.mrb[0].mxu0
          %v759 = vadd.f32 %v623, %v758
          %v760 = vpop.f32.mrb[0].mxu0
          %v761 = vadd.f32 %v627, %v760
          %762 = vmatprep.mubr.bf16.mxu0 0
          %763 = vmatmul.mubr.bf16.gmra.mrb[0].mxu0 %v596
          %v764 = vpop.f32.mrb[0].mxu0
          %v765 = vadd.f32 %v623, %v764
          %v766 = vpop.f32.mrb[0].mxu0
          %v767 = vadd.f32 %v627, %v766
          %v768 = vpop.f32.mrb[0].mxu0
          %v769 = vadd.f32 %v623, %v768
          %v770 = vpop.f32.mrb[0].mxu0
          %v771 = vadd.f32 %v627, %v770
          %772 = vmatprep.mubr.bf16.mxu0 0
          %773 = vmatmul.mubr.bf16.gmra.mrb[0].mxu0 %v597
          %v774 = vpop.f32.mrb[0].mxu0
          %v775 = vadd.f32 %v623, %v774
          %v776 = vpop.f32.mrb[0].mxu0
          %v777 = vadd.f32 %v627, %v776
          %v778 = vpop.f32.mrb[0].mxu0
          %v779 = vadd.f32 %v623, %v778
          %v780 = vpop.f32.mrb[0].mxu0
          %v781 = vadd.f32 %v627, %v780
          %782 = vmatprep.mubr.bf16.mxu0 0
          %783 = vmatmul.mubr.bf16.gmra.mrb[0].mxu0 %v598
          %v784 = vpop.f32.mrb[0].mxu0
          %v785 = vadd.f32 %v623, %v784
          %v786 = vpop.f32.mrb[0].mxu0
          %v787 = vadd.f32 %v627, %v786
          %v788 = vpop.f32.mrb[0].mxu0
          %v789 = vadd.f32 %v623, %v788
          %v790 = vpop.f32.mrb[0].mxu0
          %v791 = vadd.f32 %v627, %v790
          %792 = vmatprep.mubr.bf16.mxu0 0
          %793 = vmatmul.mubr.bf16.gmra.mrb[0].mxu0 %v599
          %v794 = vpop.f32.mrb[0].mxu0
          %v795 = vadd.f32 %v623, %v794
          %v796 = vpop.f32.mrb[0].mxu0
          %v797 = vadd.f32 %v627, %v796
          %v798 = vpop.f32.mrb[0].mxu0
          %v799 = vadd.f32 %v623, %v798
          %v800 = vpop.f32.mrb[0].mxu0
          %v801 = vadd.f32 %v627, %v800
          %802 = vmatprep.mubr.bf16.mxu0 0
          %803 = vmatmul.mubr.bf16.gmra.mrb[0].mxu0 %v600
          %v804 = vpop.f32.mrb[0].mxu0
          %v805 = vadd.f32 %v623, %v804
          %v806 = vpop.f32.mrb[0].mxu0
          %v807 = vadd.f32 %v627, %v806
          %v808 = vpop.f32.mrb[0].mxu0
          %v809 = vadd.f32 %v623, %v808
          %v810 = vpop.f32.mrb[0].mxu0
          %v811 = vadd.f32 %v627, %v810
          %812 = vmatprep.mubr.bf16.mxu0 0
          %813 = vmatmul.mubr.bf16.gmra.mrb[0].mxu0 %v601
          %v814 = vpop.f32.mrb[0].mxu0
          %v815 = vadd.f32 %v623, %v814
          %v816 = vpop.f32.mrb[0].mxu0
          %v817 = vadd.f32 %v627, %v816
          %v818 = vpop.f32.mrb[0].mxu0
          %v819 = vadd.f32 %v623, %v818
          %v820 = vpop.f32.mrb[0].mxu0
          %v821 = vadd.f32 %v627, %v820
          %822 = vdwg.mxu0
          %v823 = vpack.c.bf16 %v749, %v745
          %v824 = vpack.c.bf16 %v759, %v755
          %v825 = vpack.c.bf16 %v769, %v765
          %v826 = vpack.c.bf16 %v779, %v775
          %v827 = vpack.c.bf16 %v789, %v785
          %v828 = vpack.c.bf16 %v799, %v795
          %v829 = vpack.c.bf16 %v809, %v805
          %v830 = vpack.c.bf16 %v819, %v815
          %831 = vst [vmem:[#allocation2] sm:$0xff] %v823
          %832 = vst [vmem:[#allocation2 + $0x8] sm:$0xff] %v824
          %833 = vst [vmem:[#allocation2 + $0x10] sm:$0xff] %v825
          %834 = vst [vmem:[#allocation2 + $0x18] sm:$0xff] %v826
          %835 = vst [vmem:[#allocation2 + $0x20] sm:$0xff] %v827
          %836 = vst [vmem:[#allocation2 + $0x28] sm:$0xff] %v828
          %837 = vst [vmem:[#allocation2 + $0x30] sm:$0xff] %v829
          %838 = vst [vmem:[#allocation2 + $0x38] sm:$0xff] %v830
          %v839 = vpack.c.bf16 %v751, %v747
          %v840 = vpack.c.bf16 %v761, %v757
          %v841 = vpack.c.bf16 %v771, %v767
          %v842 = vpack.c.bf16 %v781, %v777
          %v843 = vpack.c.bf16 %v791, %v787
          %v844 = vpack.c.bf16 %v801, %v797
          %v845 = vpack.c.bf16 %v811, %v807
          %v846 = vpack.c.bf16 %v821, %v817
          %847 = vst [vmem:[#allocation3] sm:$0xff] %v839
          %848 = vst [vmem:[#allocation3 + $0x8] sm:$0xff] %v840
          %849 = vst [vmem:[#allocation3 + $0x10] sm:$0xff] %v841
          %850 = vst [vmem:[#allocation3 + $0x18] sm:$0xff] %v842
          %851 = vst [vmem:[#allocation3 + $0x20] sm:$0xff] %v843
          %852 = vst [vmem:[#allocation3 + $0x28] sm:$0xff] %v844
          %853 = vst [vmem:[#allocation3 + $0x30] sm:$0xff] %v845
          %854 = vst [vmem:[#allocation3 + $0x38] sm:$0xff] %v846
        $region96: #{tpu_custom_call.1} parent=71 // pred_fallthru
          _
        %s855 = smul.u32 %s42, 64
        %s856 = scalar_lea.vmem %s505, %s855 [#allocation4]
        %v857 = vld [vmem:[%s856] sm:$0xff]
        %v858 = vld [vmem:[%s856 + $0x8] sm:$0xff]
        %v859 = vld [vmem:[%s856 + $0x10] sm:$0xff]
        %v860 = vld [vmem:[%s856 + $0x18] sm:$0xff]
        %v861 = vld [vmem:[%s856 + $0x20] sm:$0xff]
        %v862 = vld [vmem:[%s856 + $0x28] sm:$0xff]
        %v863 = vld [vmem:[%s856 + $0x30] sm:$0xff]
        %v864 = vld [vmem:[%s856 + $0x38] sm:$0xff]
        %v865 = vpack.c.bf16 %v858, %v857
        %v866 = vpack.c.bf16 %v860, %v859
        %v867 = vpack.c.bf16 %v862, %v861
        %v868 = vpack.c.bf16 %v864, %v863
        %v869 = vld [vmem:[#allocation7] sm:$0xf]
        %v870 = vld [vmem:[#allocation7 + $0x4] sm:$0xf]
        %v871 = vld [vmem:[#allocation7 + $0x8] sm:$0xf]
        %v872 = vld [vmem:[#allocation7 + $0xc] sm:$0xf]
        %v873 = vld [vmem:[#allocation7 + $0x10] sm:$0xf]
        %v874 = vld [vmem:[#allocation7 + $0x14] sm:$0xf]
        %v875 = vld [vmem:[#allocation7 + $0x18] sm:$0xf]
        %v876 = vld [vmem:[#allocation7 + $0x1c] sm:$0xf]
        %v877 = vld [vmem:[#allocation7 + $0x20] sm:$0xf]
        %v878 = vld [vmem:[#allocation7 + $0x24] sm:$0xf]
        %v879 = vld [vmem:[#allocation7 + $0x28] sm:$0xf]
        %v880 = vld [vmem:[#allocation7 + $0x2c] sm:$0xf]
        %v881 = vld [vmem:[#allocation7 + $0x30] sm:$0xf]
        %v882 = vld [vmem:[#allocation7 + $0x34] sm:$0xf]
        %v883 = vld [vmem:[#allocation7 + $0x38] sm:$0xf]
        %v884 = vld [vmem:[#allocation7 + $0x3c] sm:$0xf]
        %v885 = vld [vmem:[%s2] sm:$0x1]
        %v887 = vlaneseq
        %v888 = vshrl.u32 %v887, 7
        %v889 = vsub.s32 0, %v888
        %v890 = vrot.slane %v885, %v889
        %v908 = vunpack.c.l.b16 %v869
        %v909 = vunpack.c.l.b16 %v870
        %v910 = vunpack.c.l.b16 %v871
        %v911 = vunpack.c.l.b16 %v872
        %v912 = vunpack.c.l.b16 %v873
        %v913 = vunpack.c.l.b16 %v874
        %v914 = vunpack.c.l.b16 %v875
        %v915 = vunpack.c.l.b16 %v876
        %v916 = vunpack.c.l.b16 %v877
        %v917 = vunpack.c.l.b16 %v878
        %v918 = vunpack.c.l.b16 %v879
        %v919 = vunpack.c.l.b16 %v880
        %v920 = vunpack.c.l.b16 %v881
        %v921 = vunpack.c.l.b16 %v882
        %v922 = vunpack.c.l.b16 %v883
        %v923 = vunpack.c.l.b16 %v884
        %v924 = vpack.c.b16 %v909, %v908
        %v925 = vpack.c.b16 %v911, %v910
        %v926 = vpack.c.b16 %v913, %v912
        %v927 = vpack.c.b16 %v915, %v914
        %v928 = vpack.c.b16 %v917, %v916
        %v929 = vpack.c.b16 %v919, %v918
        %v930 = vpack.c.b16 %v921, %v920
        %v931 = vpack.c.b16 %v923, %v922
        %940 = vmatprep.subr.bf16.mxu0 0
        %941 = vmatpush1.bf16.msra.mxu0 %v924
        %942 = vmatprep.subr.bf16.mxu0 0
        %943 = vmatpush1.bf16.msra.mxu0 %v925
        %944 = vmatprep.subr.bf16.mxu0 0
        %945 = vmatpush1.bf16.msra.mxu0 %v926
        %946 = vmatprep.subr.bf16.mxu0 0
        %947 = vmatpush1.bf16.msra.mxu0 %v927
        %948 = vmatprep.subr.bf16.mxu0 0
        %949 = vmatpush1.bf16.msra.mxu0 %v928
        %950 = vmatprep.subr.bf16.mxu0 0
        %951 = vmatpush1.bf16.msra.mxu0 %v929
        %952 = vmatprep.subr.bf16.mxu0 0
        %953 = vmatpush1.bf16.msra.mxu0 %v930
        %954 = vmatprep.subr.bf16.mxu0 0
        %955 = vmatpush1.bf16.msra.mxu0 %v931
        %956 = vmatprep.subr.bf16.mxu0 0
        %957 = vmatpush1.bf16.msra.mxu0 0
        %958 = vmatprep.subr.bf16.mxu0 0
        %959 = vmatpush1.bf16.msra.mxu0 0
        %960 = vmatprep.subr.bf16.mxu0 0
        %961 = vmatpush1.bf16.msra.mxu0 0
        %962 = vmatprep.subr.bf16.mxu0 0
        %963 = vmatpush1.bf16.msra.mxu0 0
        %964 = vmatprep.subr.bf16.mxu0 0
        %965 = vmatpush1.bf16.msra.mxu0 0
        %966 = vmatprep.subr.bf16.mxu0 0
        %967 = vmatpush1.bf16.msra.mxu0 0
        %968 = vmatprep.subr.bf16.mxu0 0
        %969 = vmatpush1.bf16.msra.mxu0 0
        %970 = vmatprep.subr.bf16.mxu0 0
        %971 = vmatpush1.bf16.msra.mxu0 0
        %972 = vmatprep.mubr.bf16.mxu0 0
        %973 = vmatmul.mubr.bf16.gmra.mrb[0].mxu0 %v865
        %v974 = vpop.f32.mrb[0].mxu0
        %v975 = vadd.f32 %v890, %v974
        %v976 = vpop.f32.mrb[0].mxu0
        %v977 = vpop.f32.mrb[0].mxu0
        %v978 = vadd.f32 %v890, %v977
        %v979 = vpop.f32.mrb[0].mxu0
        %980 = vmatprep.mubr.bf16.mxu0 0
        %981 = vmatmul.mubr.bf16.gmra.mrb[0].mxu0 %v866
        %v982 = vpop.f32.mrb[0].mxu0
        %v983 = vadd.f32 %v890, %v982
        %v984 = vpop.f32.mrb[0].mxu0
        %v985 = vpop.f32.mrb[0].mxu0
        %v986 = vadd.f32 %v890, %v985
        %v987 = vpop.f32.mrb[0].mxu0
        %988 = vmatprep.mubr.bf16.mxu0 0
        %989 = vmatmul.mubr.bf16.gmra.mrb[0].mxu0 %v867
        %v990 = vpop.f32.mrb[0].mxu0
        %v991 = vadd.f32 %v890, %v990
        %v992 = vpop.f32.mrb[0].mxu0
        %v993 = vpop.f32.mrb[0].mxu0
        %v994 = vadd.f32 %v890, %v993
        %v995 = vpop.f32.mrb[0].mxu0
        %996 = vmatprep.mubr.bf16.mxu0 0
        %997 = vmatmul.mubr.bf16.gmra.mrb[0].mxu0 %v868
        %v998 = vpop.f32.mrb[0].mxu0
        %v999 = vadd.f32 %v890, %v998
        %v1000 = vpop.f32.mrb[0].mxu0
        %v1001 = vpop.f32.mrb[0].mxu0
        %v1002 = vadd.f32 %v890, %v1001
        %v1003 = vpop.f32.mrb[0].mxu0
        %1004 = vdwg.mxu0
        %v1005 = vpack.c.bf16 %v978, %v975
        %v1006 = vpack.c.bf16 %v986, %v983
        %v1007 = vpack.c.bf16 %v994, %v991
        %v1008 = vpack.c.bf16 %v1002, %v999
        %v1009 = vld [vmem:[#allocation2] sm:$0xff]
        %v1010 = vld [vmem:[#allocation2 + $0x8] sm:$0xff]
        %v1011 = vld [vmem:[#allocation2 + $0x10] sm:$0xff]
        %v1012 = vld [vmem:[#allocation2 + $0x18] sm:$0xff]
        %v1013 = vld [vmem:[#allocation2 + $0x20] sm:$0xff]
        %v1014 = vld [vmem:[#allocation2 + $0x28] sm:$0xff]
        %v1015 = vld [vmem:[#allocation2 + $0x30] sm:$0xff]
        %v1016 = vld [vmem:[#allocation2 + $0x38] sm:$0xff]
        %1017 = vmatprep.subr.bf16.mxu0 0
        %1018 = vmatpush1.bf16.xpose.msra.mxu0 %v1009
        %1019 = vmatprep.subr.bf16.mxu0 0
        %1020 = vmatpush1.bf16.xpose.msra.mxu0 %v1010
        %1021 = vmatprep.subr.bf16.mxu0 0
        %1022 = vmatpush1.bf16.xpose.msra.mxu0 %v1011
        %1023 = vmatprep.subr.bf16.mxu0 0
        %1024 = vmatpush1.bf16.xpose.msra.mxu0 %v1012
        %1025 = vmatprep.subr.bf16.mxu0 0
        %1026 = vmatpush1.bf16.xpose.msra.mxu0 %v1013
        %1027 = vmatprep.subr.bf16.mxu0 0
        %1028 = vmatpush1.bf16.xpose.msra.mxu0 %v1014
        %1029 = vmatprep.subr.bf16.mxu0 0
        %1030 = vmatpush1.bf16.xpose.msra.mxu0 %v1015
        %1031 = vmatprep.subr.bf16.mxu0 0
        %1032 = vmatpush1.bf16.xpose.msra.mxu0 %v1016
        %1033 = vmatprep.subr.bf16.mxu0 0
        %1034 = vmatpush1.bf16.xpose.msra.mxu0 0
        %1035 = vmatprep.subr.bf16.mxu0 0
        %1036 = vmatpush1.bf16.xpose.msra.mxu0 0
        %1037 = vmatprep.subr.bf16.mxu0 0
        %1038 = vmatpush1.bf16.xpose.msra.mxu0 0
        %1039 = vmatprep.subr.bf16.mxu0 0
        %1040 = vmatpush1.bf16.xpose.msra.mxu0 0
        %1041 = vmatprep.subr.bf16.mxu0 0
        %1042 = vmatpush1.bf16.xpose.msra.mxu0 0
        %1043 = vmatprep.subr.bf16.mxu0 0
        %1044 = vmatpush1.bf16.xpose.msra.mxu0 0
        %1045 = vmatprep.subr.bf16.mxu0 0
        %1046 = vmatpush1.bf16.xpose.msra.mxu0 0
        %1047 = vmatprep.subr.bf16.mxu0 0
        %1048 = vmatpush1.bf16.xpose.msra.mxu0 0
        %1049 = vmatprep.mubr.bf16.mxu0 0
        %1050 = vmatmul.mubr.bf16.gmra.mrb[0].mxu0 %v1005
        %v1051 = vpop.f32.mrb[0].mxu0
        %v1052 = vadd.f32 0.0, %v1051
        %v1053 = vpop.f32.mrb[0].mxu0
        %v1054 = vpop.f32.mrb[0].mxu0
        %v1055 = vadd.f32 0.0, %v1054
        %v1056 = vpop.f32.mrb[0].mxu0
        %1057 = vmatprep.mubr.bf16.mxu0 0
        %1058 = vmatmul.mubr.bf16.gmra.mrb[0].mxu0 %v1006
        %v1059 = vpop.f32.mrb[0].mxu0
        %v1060 = vadd.f32 0.0, %v1059
        %v1061 = vpop.f32.mrb[0].mxu0
        %v1062 = vpop.f32.mrb[0].mxu0
        %v1063 = vadd.f32 0.0, %v1062
        %v1064 = vpop.f32.mrb[0].mxu0
        %1065 = vmatprep.mubr.bf16.mxu0 0
        %1066 = vmatmul.mubr.bf16.gmra.mrb[0].mxu0 %v1007
        %v1067 = vpop.f32.mrb[0].mxu0
        %v1068 = vadd.f32 0.0, %v1067
        %v1069 = vpop.f32.mrb[0].mxu0
        %v1070 = vpop.f32.mrb[0].mxu0
        %v1071 = vadd.f32 0.0, %v1070
        %v1072 = vpop.f32.mrb[0].mxu0
        %1073 = vmatprep.mubr.bf16.mxu0 0
        %1074 = vmatmul.mubr.bf16.gmra.mrb[0].mxu0 %v1008
        %v1075 = vpop.f32.mrb[0].mxu0
        %v1076 = vadd.f32 0.0, %v1075
        %v1077 = vpop.f32.mrb[0].mxu0
        %v1078 = vpop.f32.mrb[0].mxu0
        %v1079 = vadd.f32 0.0, %v1078
        %v1080 = vpop.f32.mrb[0].mxu0
        %1081 = vdwg.mxu0
        %1082 = vmax.xlane.f32.xlu0 %v1052
        %v1083 = vpop.xlane.xlu0 %1082
        %1084 = vmax.xlane.f32.xlu0 %v1055
        %v1085 = vpop.xlane.xlu0 %1084
        %1086 = vmax.xlane.f32.xlu0 %v1060
        %v1087 = vpop.xlane.xlu0 %1086
        %1088 = vmax.xlane.f32.xlu0 %v1063
        %v1089 = vpop.xlane.xlu0 %1088
        %1090 = vmax.xlane.f32.xlu0 %v1068
        %v1091 = vpop.xlane.xlu0 %1090
        %1092 = vmax.xlane.f32.xlu0 %v1071
        %v1093 = vpop.xlane.xlu0 %1092
        %1094 = vmax.xlane.f32.xlu0 %v1076
        %v1095 = vpop.xlane.xlu0 %1094
        %1096 = vmax.xlane.f32.xlu0 %v1079
        %v1097 = vpop.xlane.xlu0 %1096
        %v1098 = vsub.f32 %v1052, %v1083
        %v1099 = vsub.f32 %v1055, %v1085
        %v1100 = vsub.f32 %v1060, %v1087
        %v1101 = vsub.f32 %v1063, %v1089
        %v1102 = vsub.f32 %v1068, %v1091
        %v1103 = vsub.f32 %v1071, %v1093
        %v1104 = vsub.f32 %v1076, %v1095
        %v1105 = vsub.f32 %v1079, %v1097
        %v1106 = vmul.f32 %v1098, 1.442695
        %v1107 = vpow.pop %v1106
        %v1108 = vmul.f32 %v1099, 1.442695
        %v1109 = vpow.pop %v1108
        %v1110 = vmul.f32 %v1100, 1.442695
        %v1111 = vpow.pop %v1110
        %v1112 = vmul.f32 %v1101, 1.442695
        %v1113 = vpow.pop %v1112
        %v1114 = vmul.f32 %v1102, 1.442695
        %v1115 = vpow.pop %v1114
        %v1116 = vmul.f32 %v1103, 1.442695
        %v1117 = vpow.pop %v1116
        %v1118 = vmul.f32 %v1104, 1.442695
        %v1119 = vpow.pop %v1118
        %v1120 = vmul.f32 %v1105, 1.442695
        %v1121 = vpow.pop %v1120
        %1122 = vadd.xlane.f32.xlu0 %v1107
        %v1123 = vpop.xlane.xlu0 %1122
        %1124 = vadd.xlane.f32.xlu0 %v1109
        %v1125 = vpop.xlane.xlu0 %1124
        %1126 = vadd.xlane.f32.xlu0 %v1111
        %v1127 = vpop.xlane.xlu0 %1126
        %1128 = vadd.xlane.f32.xlu0 %v1113
        %v1129 = vpop.xlane.xlu0 %1128
        %1130 = vadd.xlane.f32.xlu0 %v1115
        %v1131 = vpop.xlane.xlu0 %1130
        %1132 = vadd.xlane.f32.xlu0 %v1117
        %v1133 = vpop.xlane.xlu0 %1132
        %1134 = vadd.xlane.f32.xlu0 %v1119
        %v1135 = vpop.xlane.xlu0 %1134
        %1136 = vadd.xlane.f32.xlu0 %v1121
        %v1137 = vpop.xlane.xlu0 %1136
        %v1138 = vrcp.pop %v1123
        %v1139 = vrcp.pop %v1125
        %v1140 = vrcp.pop %v1127
        %v1141 = vrcp.pop %v1129
        %v1142 = vrcp.pop %v1131
        %v1143 = vrcp.pop %v1133
        %v1144 = vrcp.pop %v1135
        %v1145 = vrcp.pop %v1137
        %v1146 = vmul.f32 %v1107, %v1138
        %v1147 = vmul.f32 %v1109, %v1139
        %v1148 = vmul.f32 %v1111, %v1140
        %v1149 = vmul.f32 %v1113, %v1141
        %v1150 = vmul.f32 %v1115, %v1142
        %v1151 = vmul.f32 %v1117, %v1143
        %v1152 = vmul.f32 %v1119, %v1144
        %v1153 = vmul.f32 %v1121, %v1145
        %v1154 = vpack.c.bf16 %v1147, %v1146
        %v1155 = vpack.c.bf16 %v1149, %v1148
        %v1156 = vpack.c.bf16 %v1151, %v1150
        %v1157 = vpack.c.bf16 %v1153, %v1152
        %v1158 = vld [vmem:[#allocation3] sm:$0xff]
        %v1159 = vld [vmem:[#allocation3 + $0x8] sm:$0xff]
        %v1160 = vld [vmem:[#allocation3 + $0x10] sm:$0xff]
        %v1161 = vld [vmem:[#allocation3 + $0x18] sm:$0xff]
        %v1162 = vld [vmem:[#allocation3 + $0x20] sm:$0xff]
        %v1163 = vld [vmem:[#allocation3 + $0x28] sm:$0xff]
        %v1164 = vld [vmem:[#allocation3 + $0x30] sm:$0xff]
        %v1165 = vld [vmem:[#allocation3 + $0x38] sm:$0xff]
        %1166 = vmatprep.subr.bf16.mxu0 0
        %1167 = vmatpush1.bf16.msra.mxu0 %v1158
        %1168 = vmatprep.subr.bf16.mxu0 0
        %1169 = vmatpush1.bf16.msra.mxu0 %v1159
        %1170 = vmatprep.subr.bf16.mxu0 0
        %1171 = vmatpush1.bf16.msra.mxu0 %v1160
        %1172 = vmatprep.subr.bf16.mxu0 0
        %1173 = vmatpush1.bf16.msra.mxu0 %v1161
        %1174 = vmatprep.subr.bf16.mxu0 0
        %1175 = vmatpush1.bf16.msra.mxu0 %v1162
        %1176 = vmatprep.subr.bf16.mxu0 0
        %1177 = vmatpush1.bf16.msra.mxu0 %v1163
        %1178 = vmatprep.subr.bf16.mxu0 0
        %1179 = vmatpush1.bf16.msra.mxu0 %v1164
        %1180 = vmatprep.subr.bf16.mxu0 0
        %1181 = vmatpush1.bf16.msra.mxu0 %v1165
        %1182 = vmatprep.subr.bf16.mxu0 0
        %1183 = vmatpush1.bf16.msra.mxu0 0
        %1184 = vmatprep.subr.bf16.mxu0 0
        %1185 = vmatpush1.bf16.msra.mxu0 0
        %1186 = vmatprep.subr.bf16.mxu0 0
        %1187 = vmatpush1.bf16.msra.mxu0 0
        %1188 = vmatprep.subr.bf16.mxu0 0
        %1189 = vmatpush1.bf16.msra.mxu0 0
        %1190 = vmatprep.subr.bf16.mxu0 0
        %1191 = vmatpush1.bf16.msra.mxu0 0
        %1192 = vmatprep.subr.bf16.mxu0 0
        %1193 = vmatpush1.bf16.msra.mxu0 0
        %1194 = vmatprep.subr.bf16.mxu0 0
        %1195 = vmatpush1.bf16.msra.mxu0 0
        %1196 = vmatprep.subr.bf16.mxu0 0
        %1197 = vmatpush1.bf16.msra.mxu0 0
        %1198 = vmatprep.mubr.bf16.mxu0 0
        %1199 = vmatmul.mubr.bf16.gmra.mrb[0].mxu0 %v1154
        %v1200 = vpop.f32.mrb[0].mxu0
        %v1201 = vadd.f32 0.0, %v1200
        %v1202 = vpop.f32.mrb[0].mxu0
        %v1203 = vpop.f32.mrb[0].mxu0
        %v1204 = vadd.f32 0.0, %v1203
        %v1205 = vpop.f32.mrb[0].mxu0
        %1206 = vmatprep.mubr.bf16.mxu0 0
        %1207 = vmatmul.mubr.bf16.gmra.mrb[0].mxu0 %v1155
        %v1208 = vpop.f32.mrb[0].mxu0
        %v1209 = vadd.f32 0.0, %v1208
        %v1210 = vpop.f32.mrb[0].mxu0
        %v1211 = vpop.f32.mrb[0].mxu0
        %v1212 = vadd.f32 0.0, %v1211
        %v1213 = vpop.f32.mrb[0].mxu0
        %1214 = vmatprep.mubr.bf16.mxu0 0
        %1215 = vmatmul.mubr.bf16.gmra.mrb[0].mxu0 %v1156
        %v1216 = vpop.f32.mrb[0].mxu0
        %v1217 = vadd.f32 0.0, %v1216
        %v1218 = vpop.f32.mrb[0].mxu0
        %v1219 = vpop.f32.mrb[0].mxu0
        %v1220 = vadd.f32 0.0, %v1219
        %v1221 = vpop.f32.mrb[0].mxu0
        %1222 = vmatprep.mubr.bf16.mxu0 0
        %1223 = vmatmul.mubr.bf16.gmra.mrb[0].mxu0 %v1157
        %v1224 = vpop.f32.mrb[0].mxu0
        %v1225 = vadd.f32 0.0, %v1224
        %v1226 = vpop.f32.mrb[0].mxu0
        %v1227 = vpop.f32.mrb[0].mxu0
        %v1228 = vadd.f32 0.0, %v1227
        %v1229 = vpop.f32.mrb[0].mxu0
        %1230 = vdwg.mxu0
        %v1231 = vadd.f32 %v857, %v1201
        %v1232 = vadd.f32 %v858, %v1204
        %v1233 = vadd.f32 %v859, %v1209
        %v1234 = vadd.f32 %v860, %v1212
        %v1235 = vadd.f32 %v861, %v1217
        %v1236 = vadd.f32 %v862, %v1220
        %v1237 = vadd.f32 %v863, %v1225
        %v1238 = vadd.f32 %v864, %v1228
        %v1239 = vld [vmem:[%s5] sm:$0x1]
        %v1240 = vld [vmem:[%s6] sm:$0x1]
        %1241 = vadd.xlane.f32.xlu0 %v1231
        %v1242 = vpop.xlane.xlu0 %1241
        %1243 = vadd.xlane.f32.xlu0 %v1232
        %v1244 = vpop.xlane.xlu0 %1243
        %1245 = vadd.xlane.f32.xlu0 %v1233
        %v1246 = vpop.xlane.xlu0 %1245
        %1247 = vadd.xlane.f32.xlu0 %v1234
        %v1248 = vpop.xlane.xlu0 %1247
        %1249 = vadd.xlane.f32.xlu0 %v1235
        %v1250 = vpop.xlane.xlu0 %1249
        %1251 = vadd.xlane.f32.xlu0 %v1236
        %v1252 = vpop.xlane.xlu0 %1251
        %1253 = vadd.xlane.f32.xlu0 %v1237
        %v1254 = vpop.xlane.xlu0 %1253
        %1255 = vadd.xlane.f32.xlu0 %v1238
        %v1256 = vpop.xlane.xlu0 %1255
        %v1257 = vrcp.pop 128.0
        %v1258 = vmul.f32 %v1242, %v1257
        %v1259 = vmul.f32 %v1244, %v1257
        %v1260 = vmul.f32 %v1246, %v1257
        %v1261 = vmul.f32 %v1248, %v1257
        %v1262 = vmul.f32 %v1250, %v1257
        %v1263 = vmul.f32 %v1252, %v1257
        %v1264 = vmul.f32 %v1254, %v1257
        %v1265 = vmul.f32 %v1256, %v1257
        %v1266 = vsub.f32 %v1231, %v1258
        %v1267 = vsub.f32 %v1232, %v1259
        %v1268 = vsub.f32 %v1233, %v1260
        %v1269 = vsub.f32 %v1234, %v1261
        %v1270 = vsub.f32 %v1235, %v1262
        %v1271 = vsub.f32 %v1236, %v1263
        %v1272 = vsub.f32 %v1237, %v1264
        %v1273 = vsub.f32 %v1238, %v1265
        %v1274 = vmul.f32 %v1266, %v1266
        %v1275 = vmul.f32 %v1267, %v1267
        %v1276 = vmul.f32 %v1268, %v1268
        %v1277 = vmul.f32 %v1269, %v1269
        %v1278 = vmul.f32 %v1270, %v1270
        %v1279 = vmul.f32 %v1271, %v1271
        %v1280 = vmul.f32 %v1272, %v1272
        %v1281 = vmul.f32 %v1273, %v1273
        %1282 = vadd.xlane.f32.xlu0 %v1274
        %v1283 = vpop.xlane.xlu0 %1282
        %1284 = vadd.xlane.f32.xlu0 %v1275
        %v1285 = vpop.xlane.xlu0 %1284
        %1286 = vadd.xlane.f32.xlu0 %v1276
        %v1287 = vpop.xlane.xlu0 %1286
        %1288 = vadd.xlane.f32.xlu0 %v1277
        %v1289 = vpop.xlane.xlu0 %1288
        %1290 = vadd.xlane.f32.xlu0 %v1278
        %v1291 = vpop.xlane.xlu0 %1290
        %1292 = vadd.xlane.f32.xlu0 %v1279
        %v1293 = vpop.xlane.xlu0 %1292
        %1294 = vadd.xlane.f32.xlu0 %v1280
        %v1295 = vpop.xlane.xlu0 %1294
        %1296 = vadd.xlane.f32.xlu0 %v1281
        %v1297 = vpop.xlane.xlu0 %1296
        %v1298 = vmul.f32 %v1283, %v1257
        %v1299 = vmul.f32 %v1285, %v1257
        %v1300 = vmul.f32 %v1287, %v1257
        %v1301 = vmul.f32 %v1289, %v1257
        %v1302 = vmul.f32 %v1291, %v1257
        %v1303 = vmul.f32 %v1293, %v1257
        %v1304 = vmul.f32 %v1295, %v1257
        %v1305 = vmul.f32 %v1297, %v1257
        %v1306 = vadd.f32 %v1298, 1e-05
        %v1307 = vadd.f32 %v1299, 1e-05
        %v1308 = vadd.f32 %v1300, 1e-05
        %v1309 = vadd.f32 %v1301, 1e-05
        %v1310 = vadd.f32 %v1302, 1e-05
        %v1311 = vadd.f32 %v1303, 1e-05
        %v1312 = vadd.f32 %v1304, 1e-05
        %v1313 = vadd.f32 %v1305, 1e-05
        %v1314 = vrsqrt.pop %v1306
        %v1315 = vrsqrt.pop %v1307
        %v1316 = vrsqrt.pop %v1308
        %v1317 = vrsqrt.pop %v1309
        %v1318 = vrsqrt.pop %v1310
        %v1319 = vrsqrt.pop %v1311
        %v1320 = vrsqrt.pop %v1312
        %v1321 = vrsqrt.pop %v1313
        %v1322 = vmul.f32 %v1266, %v1314
        %v1323 = vmul.f32 %v1267, %v1315
        %v1324 = vmul.f32 %v1268, %v1316
        %v1325 = vmul.f32 %v1269, %v1317
        %v1326 = vmul.f32 %v1270, %v1318
        %v1327 = vmul.f32 %v1271, %v1319
        %v1328 = vmul.f32 %v1272, %v1320
        %v1329 = vmul.f32 %v1273, %v1321
        %v1331 = vlaneseq
        %v1332 = vshrl.u32 %v1331, 7
        %v1333 = vsub.s32 0, %v1332
        %v1334 = vrot.slane %v1239, %v1333
        %v1336 = vmul.f32 %v1322, %v1334
        %v1337 = vmul.f32 %v1323, %v1334
        %v1338 = vmul.f32 %v1324, %v1334
        %v1339 = vmul.f32 %v1325, %v1334
        %v1340 = vmul.f32 %v1326, %v1334
        %v1341 = vmul.f32 %v1327, %v1334
        %v1342 = vmul.f32 %v1328, %v1334
        %v1343 = vmul.f32 %v1329, %v1334
        %v1345 = vlaneseq
        %v1346 = vshrl.u32 %v1345, 7
        %v1347 = vsub.s32 0, %v1346
        %v1348 = vrot.slane %v1240, %v1347
        %v1350 = vadd.f32 %v1336, %v1348
        %v1351 = vadd.f32 %v1337, %v1348
        %v1352 = vadd.f32 %v1338, %v1348
        %v1353 = vadd.f32 %v1339, %v1348
        %v1354 = vadd.f32 %v1340, %v1348
        %v1355 = vadd.f32 %v1341, %v1348
        %v1356 = vadd.f32 %v1342, %v1348
        %v1357 = vadd.f32 %v1343, %v1348
        %v1358 = vpack.c.bf16 %v1351, %v1350
        %v1359 = vpack.c.bf16 %v1353, %v1352
        %v1360 = vpack.c.bf16 %v1355, %v1354
        %v1361 = vpack.c.bf16 %v1357, %v1356
        %v1362 = vld [vmem:[#allocation10] sm:$0xff]
        %v1363 = vld [vmem:[#allocation10 + $0x8] sm:$0xff]
        %v1364 = vld [vmem:[#allocation10 + $0x10] sm:$0xff]
        %v1365 = vld [vmem:[#allocation10 + $0x18] sm:$0xff]
        %v1366 = vld [vmem:[#allocation10 + $0x20] sm:$0xff]
        %v1367 = vld [vmem:[#allocation10 + $0x28] sm:$0xff]
        %v1368 = vld [vmem:[#allocation10 + $0x30] sm:$0xff]
        %v1369 = vld [vmem:[#allocation10 + $0x38] sm:$0xff]
        %v1370 = vld [vmem:[#allocation10 + $0x40] sm:$0xff]
        %v1371 = vld [vmem:[#allocation10 + $0x48] sm:$0xff]
        %v1372 = vld [vmem:[#allocation10 + $0x50] sm:$0xff]
        %v1373 = vld [vmem:[#allocation10 + $0x58] sm:$0xff]
        %v1374 = vld [vmem:[#allocation10 + $0x60] sm:$0xff]
        %v1375 = vld [vmem:[#allocation10 + $0x68] sm:$0xff]
        %v1376 = vld [vmem:[#allocation10 + $0x70] sm:$0xff]
        %v1377 = vld [vmem:[#allocation10 + $0x78] sm:$0xff]
        %v1378 = vld [vmem:[%s8] sm:$0x3]
        %v1380 = vlaneseq
        %v1381 = vshrl.u32 %v1380, 7
        %v1382 = vsub.s32 0, %v1381
        %v1383 = vrot.slane %v1378, %v1382
        %v1384 = vlaneseq
        %v1385 = vshrl.u32 %v1384, 7
        %v1386 = vsub.s32 1, %v1385
        %v1387 = vrot.slane %v1378, %v1386
        %v1406 = vunpack.c.l.b16 %v1362
        %v1407 = vunpack.c.h.b16 %v1362
        %v1408 = vunpack.c.l.b16 %v1363
        %v1409 = vunpack.c.h.b16 %v1363
        %v1410 = vunpack.c.l.b16 %v1364
        %v1411 = vunpack.c.h.b16 %v1364
        %v1412 = vunpack.c.l.b16 %v1365
        %v1413 = vunpack.c.h.b16 %v1365
        %v1414 = vunpack.c.l.b16 %v1366
        %v1415 = vunpack.c.h.b16 %v1366
        %v1416 = vunpack.c.l.b16 %v1367
        %v1417 = vunpack.c.h.b16 %v1367
        %v1418 = vunpack.c.l.b16 %v1368
        %v1419 = vunpack.c.h.b16 %v1368
        %v1420 = vunpack.c.l.b16 %v1369
        %v1421 = vunpack.c.h.b16 %v1369
        %v1422 = vunpack.c.l.b16 %v1370
        %v1423 = vunpack.c.h.b16 %v1370
        %v1424 = vunpack.c.l.b16 %v1371
        %v1425 = vunpack.c.h.b16 %v1371
        %v1426 = vunpack.c.l.b16 %v1372
        %v1427 = vunpack.c.h.b16 %v1372
        %v1428 = vunpack.c.l.b16 %v1373
        %v1429 = vunpack.c.h.b16 %v1373
        %v1430 = vunpack.c.l.b16 %v1374
        %v1431 = vunpack.c.h.b16 %v1374
        %v1432 = vunpack.c.l.b16 %v1375
        %v1433 = vunpack.c.h.b16 %v1375
        %v1434 = vunpack.c.l.b16 %v1376
        %v1435 = vunpack.c.h.b16 %v1376
        %v1436 = vunpack.c.l.b16 %v1377
        %v1437 = vunpack.c.h.b16 %v1377
        %v1438 = vpack.c.b16 %v1408, %v1406
        %v1439 = vpack.c.b16 %v1409, %v1407
        %v1440 = vpack.c.b16 %v1412, %v1410
        %v1441 = vpack.c.b16 %v1413, %v1411
        %v1442 = vpack.c.b16 %v1416, %v1414
        %v1443 = vpack.c.b16 %v1417, %v1415
        %v1444 = vpack.c.b16 %v1420, %v1418
        %v1445 = vpack.c.b16 %v1421, %v1419
        %v1446 = vpack.c.b16 %v1424, %v1422
        %v1447 = vpack.c.b16 %v1425, %v1423
        %v1448 = vpack.c.b16 %v1428, %v1426
        %v1449 = vpack.c.b16 %v1429, %v1427
        %v1450 = vpack.c.b16 %v1432, %v1430
        %v1451 = vpack.c.b16 %v1433, %v1431
        %v1452 = vpack.c.b16 %v1436, %v1434
        %v1453 = vpack.c.b16 %v1437, %v1435
        %1470 = vmatprep.subr.bf16.mxu0 %v1439
        %1471 = vmatpush1.bf16.msra.mxu0 %v1438
        %1472 = vmatprep.subr.bf16.mxu0 %v1441
        %1473 = vmatpush1.bf16.msra.mxu0 %v1440
        %1474 = vmatprep.subr.bf16.mxu0 %v1443
        %1475 = vmatpush1.bf16.msra.mxu0 %v1442
        %1476 = vmatprep.subr.bf16.mxu0 %v1445
        %1477 = vmatpush1.bf16.msra.mxu0 %v1444
        %1478 = vmatprep.subr.bf16.mxu0 %v1447
        %1479 = vmatpush1.bf16.msra.mxu0 %v1446
        %1480 = vmatprep.subr.bf16.mxu0 %v1449
        %1481 = vmatpush1.bf16.msra.mxu0 %v1448
        %1482 = vmatprep.subr.bf16.mxu0 %v1451
        %1483 = vmatpush1.bf16.msra.mxu0 %v1450
        %1484 = vmatprep.subr.bf16.mxu0 %v1453
        %1485 = vmatpush1.bf16.msra.mxu0 %v1452
        %1486 = vmatprep.subr.bf16.mxu0 0
        %1487 = vmatpush1.bf16.msra.mxu0 0
        %1488 = vmatprep.subr.bf16.mxu0 0
        %1489 = vmatpush1.bf16.msra.mxu0 0
        %1490 = vmatprep.subr.bf16.mxu0 0
        %1491 = vmatpush1.bf16.msra.mxu0 0
        %1492 = vmatprep.subr.bf16.mxu0 0
        %1493 = vmatpush1.bf16.msra.mxu0 0
        %1494 = vmatprep.subr.bf16.mxu0 0
        %1495 = vmatpush1.bf16.msra.mxu0 0
        %1496 = vmatprep.subr.bf16.mxu0 0
        %1497 = vmatpush1.bf16.msra.mxu0 0
        %1498 = vmatprep.subr.bf16.mxu0 0
        %1499 = vmatpush1.bf16.msra.mxu0 0
        %1500 = vmatprep.subr.bf16.mxu0 0
        %1501 = vmatpush1.bf16.msra.mxu0 0
        %1502 = vmatprep.mubr.bf16.mxu0 0
        %1503 = vmatmul.mubr.bf16.gmra.mrb[0].mxu0 %v1358
        %v1504 = vpop.f32.mrb[0].mxu0
        %v1505 = vadd.f32 %v1383, %v1504
        %v1506 = vpop.f32.mrb[0].mxu0
        %v1507 = vadd.f32 %v1387, %v1506
        %v1508 = vpop.f32.mrb[0].mxu0
        %v1509 = vadd.f32 %v1383, %v1508
        %v1510 = vpop.f32.mrb[0].mxu0
        %v1511 = vadd.f32 %v1387, %v1510
        %1512 = vmatprep.mubr.bf16.mxu0 0
        %1513 = vmatmul.mubr.bf16.gmra.mrb[0].mxu0 %v1359
        %v1514 = vpop.f32.mrb[0].mxu0
        %v1515 = vadd.f32 %v1383, %v1514
        %v1516 = vpop.f32.mrb[0].mxu0
        %v1517 = vadd.f32 %v1387, %v1516
        %v1518 = vpop.f32.mrb[0].mxu0
        %v1519 = vadd.f32 %v1383, %v1518
        %v1520 = vpop.f32.mrb[0].mxu0
        %v1521 = vadd.f32 %v1387, %v1520
        %1522 = vmatprep.mubr.bf16.mxu0 0
        %1523 = vmatmul.mubr.bf16.gmra.mrb[0].mxu0 %v1360
        %v1524 = vpop.f32.mrb[0].mxu0
        %v1525 = vadd.f32 %v1383, %v1524
        %v1526 = vpop.f32.mrb[0].mxu0
        %v1527 = vadd.f32 %v1387, %v1526
        %v1528 = vpop.f32.mrb[0].mxu0
        %v1529 = vadd.f32 %v1383, %v1528
        %v1530 = vpop.f32.mrb[0].mxu0
        %v1531 = vadd.f32 %v1387, %v1530
        %1532 = vmatprep.mubr.bf16.mxu0 0
        %1533 = vmatmul.mubr.bf16.gmra.mrb[0].mxu0 %v1361
        %v1534 = vpop.f32.mrb[0].mxu0
        %v1535 = vadd.f32 %v1383, %v1534
        %v1536 = vpop.f32.mrb[0].mxu0
        %v1537 = vadd.f32 %v1387, %v1536
        %v1538 = vpop.f32.mrb[0].mxu0
        %v1539 = vadd.f32 %v1383, %v1538
        %v1540 = vpop.f32.mrb[0].mxu0
        %v1541 = vadd.f32 %v1387, %v1540
        %1542 = vdwg.mxu0
        %v1543 = vmax.f32 %v1505, 0.0
        %v1544 = vmax.f32 %v1507, 0.0
        %v1545 = vmax.f32 %v1509, 0.0
        %v1546 = vmax.f32 %v1511, 0.0
        %v1547 = vmax.f32 %v1515, 0.0
        %v1548 = vmax.f32 %v1517, 0.0
        %v1549 = vmax.f32 %v1519, 0.0
        %v1550 = vmax.f32 %v1521, 0.0
        %v1551 = vmax.f32 %v1525, 0.0
        %v1552 = vmax.f32 %v1527, 0.0
        %v1553 = vmax.f32 %v1529, 0.0
        %v1554 = vmax.f32 %v1531, 0.0
        %v1555 = vmax.f32 %v1535, 0.0
        %v1556 = vmax.f32 %v1537, 0.0
        %v1557 = vmax.f32 %v1539, 0.0
        %v1558 = vmax.f32 %v1541, 0.0
        %v1559 = vpack.c.bf16 %v1545, %v1543
        %v1560 = vpack.c.bf16 %v1546, %v1544
        %v1561 = vpack.c.bf16 %v1549, %v1547
        %v1562 = vpack.c.bf16 %v1550, %v1548
        %v1563 = vpack.c.bf16 %v1553, %v1551
        %v1564 = vpack.c.bf16 %v1554, %v1552
        %v1565 = vpack.c.bf16 %v1557, %v1555
        %v1566 = vpack.c.bf16 %v1558, %v1556
        %v1567 = vld [vmem:[#allocation12] sm:$0xf]
        %v1568 = vld [vmem:[#allocation12 + $0x4] sm:$0xf]
        %v1569 = vld [vmem:[#allocation12 + $0x8] sm:$0xf]
        %v1570 = vld [vmem:[#allocation12 + $0xc] sm:$0xf]
        %v1571 = vld [vmem:[#allocation12 + $0x10] sm:$0xf]
        %v1572 = vld [vmem:[#allocation12 + $0x14] sm:$0xf]
        %v1573 = vld [vmem:[#allocation12 + $0x18] sm:$0xf]
        %v1574 = vld [vmem:[#allocation12 + $0x1c] sm:$0xf]
        %v1575 = vld [vmem:[#allocation12 + $0x20] sm:$0xf]
        %v1576 = vld [vmem:[#allocation12 + $0x24] sm:$0xf]
        %v1577 = vld [vmem:[#allocation12 + $0x28] sm:$0xf]
        %v1578 = vld [vmem:[#allocation12 + $0x2c] sm:$0xf]
        %v1579 = vld [vmem:[#allocation12 + $0x30] sm:$0xf]
        %v1580 = vld [vmem:[#allocation12 + $0x34] sm:$0xf]
        %v1581 = vld [vmem:[#allocation12 + $0x38] sm:$0xf]
        %v1582 = vld [vmem:[#allocation12 + $0x3c] sm:$0xf]
        %v1583 = vld [vmem:[#allocation12 + $0x40] sm:$0xf]
        %v1584 = vld [vmem:[#allocation12 + $0x44] sm:$0xf]
        %v1585 = vld [vmem:[#allocation12 + $0x48] sm:$0xf]
        %v1586 = vld [vmem:[#allocation12 + $0x4c] sm:$0xf]
        %v1587 = vld [vmem:[#allocation12 + $0x50] sm:$0xf]
        %v1588 = vld [vmem:[#allocation12 + $0x54] sm:$0xf]
        %v1589 = vld [vmem:[#allocation12 + $0x58] sm:$0xf]
        %v1590 = vld [vmem:[#allocation12 + $0x5c] sm:$0xf]
        %v1591 = vld [vmem:[#allocation12 + $0x60] sm:$0xf]
        %v1592 = vld [vmem:[#allocation12 + $0x64] sm:$0xf]
        %v1593 = vld [vmem:[#allocation12 + $0x68] sm:$0xf]
        %v1594 = vld [vmem:[#allocation12 + $0x6c] sm:$0xf]
        %v1595 = vld [vmem:[#allocation12 + $0x70] sm:$0xf]
        %v1596 = vld [vmem:[#allocation12 + $0x74] sm:$0xf]
        %v1597 = vld [vmem:[#allocation12 + $0x78] sm:$0xf]
        %v1598 = vld [vmem:[#allocation12 + $0x7c] sm:$0xf]
        %v1599 = vld [vmem:[%s10] sm:$0x1]
        %v1601 = vlaneseq
        %v1602 = vshrl.u32 %v1601, 7
        %v1603 = vsub.s32 0, %v1602
        %v1604 = vrot.slane %v1599, %v1603
        %v1638 = vunpack.c.l.b16 %v1567
        %v1639 = vunpack.c.l.b16 %v1568
        %v1640 = vunpack.c.l.b16 %v1569
        %v1641 = vunpack.c.l.b16 %v1570
        %v1642 = vunpack.c.l.b16 %v1571
        %v1643 = vunpack.c.l.b16 %v1572
        %v1644 = vunpack.c.l.b16 %v1573
        %v1645 = vunpack.c.l.b16 %v1574
        %v1646 = vunpack.c.l.b16 %v1575
        %v1647 = vunpack.c.l.b16 %v1576
        %v1648 = vunpack.c.l.b16 %v1577
        %v1649 = vunpack.c.l.b16 %v1578
        %v1650 = vunpack.c.l.b16 %v1579
        %v1651 = vunpack.c.l.b16 %v1580
        %v1652 = vunpack.c.l.b16 %v1581
        %v1653 = vunpack.c.l.b16 %v1582
        %v1654 = vunpack.c.l.b16 %v1583
        %v1655 = vunpack.c.l.b16 %v1584
        %v1656 = vunpack.c.l.b16 %v1585
        %v1657 = vunpack.c.l.b16 %v1586
        %v1658 = vunpack.c.l.b16 %v1587
        %v1659 = vunpack.c.l.b16 %v1588
        %v1660 = vunpack.c.l.b16 %v1589
        %v1661 = vunpack.c.l.b16 %v1590
        %v1662 = vunpack.c.l.b16 %v1591
        %v1663 = vunpack.c.l.b16 %v1592
        %v1664 = vunpack.c.l.b16 %v1593
        %v1665 = vunpack.c.l.b16 %v1594
        %v1666 = vunpack.c.l.b16 %v1595
        %v1667 = vunpack.c.l.b16 %v1596
        %v1668 = vunpack.c.l.b16 %v1597
        %v1669 = vunpack.c.l.b16 %v1598
        %v1670 = vpack.c.b16 %v1639, %v1638
        %v1671 = vpack.c.b16 %v1641, %v1640
        %v1672 = vpack.c.b16 %v1643, %v1642
        %v1673 = vpack.c.b16 %v1645, %v1644
        %v1674 = vpack.c.b16 %v1647, %v1646
        %v1675 = vpack.c.b16 %v1649, %v1648
        %v1676 = vpack.c.b16 %v1651, %v1650
        %v1677 = vpack.c.b16 %v1653, %v1652
        %v1678 = vpack.c.b16 %v1655, %v1654
        %v1679 = vpack.c.b16 %v1657, %v1656
        %v1680 = vpack.c.b16 %v1659, %v1658
        %v1681 = vpack.c.b16 %v1661, %v1660
        %v1682 = vpack.c.b16 %v1663, %v1662
        %v1683 = vpack.c.b16 %v1665, %v1664
        %v1684 = vpack.c.b16 %v1667, %v1666
        %v1685 = vpack.c.b16 %v1669, %v1668
        %1702 = vmatprep.subr.bf16.mxu0 0
        %1703 = vmatpush1.bf16.msra.mxu0 %v1670
        %1704 = vmatprep.subr.bf16.mxu0 0
        %1705 = vmatpush1.bf16.msra.mxu0 %v1671
        %1706 = vmatprep.subr.bf16.mxu0 0
        %1707 = vmatpush1.bf16.msra.mxu0 %v1672
        %1708 = vmatprep.subr.bf16.mxu0 0
        %1709 = vmatpush1.bf16.msra.mxu0 %v1673
        %1710 = vmatprep.subr.bf16.mxu0 0
        %1711 = vmatpush1.bf16.msra.mxu0 %v1674
        %1712 = vmatprep.subr.bf16.mxu0 0
        %1713 = vmatpush1.bf16.msra.mxu0 %v1675
        %1714 = vmatprep.subr.bf16.mxu0 0
        %1715 = vmatpush1.bf16.msra.mxu0 %v1676
        %1716 = vmatprep.subr.bf16.mxu0 0
        %1717 = vmatpush1.bf16.msra.mxu0 %v1677
        %1718 = vmatprep.subr.bf16.mxu0 0
        %1719 = vmatpush1.bf16.msra.mxu0 %v1678
        %1720 = vmatprep.subr.bf16.mxu0 0
        %1721 = vmatpush1.bf16.msra.mxu0 %v1679
        %1722 = vmatprep.subr.bf16.mxu0 0
        %1723 = vmatpush1.bf16.msra.mxu0 %v1680
        %1724 = vmatprep.subr.bf16.mxu0 0
        %1725 = vmatpush1.bf16.msra.mxu0 %v1681
        %1726 = vmatprep.subr.bf16.mxu0 0
        %1727 = vmatpush1.bf16.msra.mxu0 %v1682
        %1728 = vmatprep.subr.bf16.mxu0 0
        %1729 = vmatpush1.bf16.msra.mxu0 %v1683
        %1730 = vmatprep.subr.bf16.mxu0 0
        %1731 = vmatpush1.bf16.msra.mxu0 %v1684
        %1732 = vmatprep.subr.bf16.mxu0 0
        %1733 = vmatpush1.bf16.msra.mxu0 %v1685
        %1734 = vmatprep.mubr.bf16.mxu0 %v1560
        %1735 = vmatmul.mubr.bf16.gmra.mrb[0].mxu0 %v1559
        %v1736 = vpop.f32.mrb[0].mxu0
        %v1737 = vadd.f32 %v1604, %v1736
        %v1738 = vpop.f32.mrb[0].mxu0
        %v1739 = vpop.f32.mrb[0].mxu0
        %v1740 = vadd.f32 %v1604, %v1739
        %v1741 = vpop.f32.mrb[0].mxu0
        %1742 = vmatprep.mubr.bf16.mxu0 %v1562
        %1743 = vmatmul.mubr.bf16.gmra.mrb[0].mxu0 %v1561
        %v1744 = vpop.f32.mrb[0].mxu0
        %v1745 = vadd.f32 %v1604, %v1744
        %v1746 = vpop.f32.mrb[0].mxu0
        %v1747 = vpop.f32.mrb[0].mxu0
        %v1748 = vadd.f32 %v1604, %v1747
        %v1749 = vpop.f32.mrb[0].mxu0
        %1750 = vmatprep.mubr.bf16.mxu0 %v1564
        %1751 = vmatmul.mubr.bf16.gmra.mrb[0].mxu0 %v1563
        %v1752 = vpop.f32.mrb[0].mxu0
        %v1753 = vadd.f32 %v1604, %v1752
        %v1754 = vpop.f32.mrb[0].mxu0
        %v1755 = vpop.f32.mrb[0].mxu0
        %v1756 = vadd.f32 %v1604, %v1755
        %v1757 = vpop.f32.mrb[0].mxu0
        %1758 = vmatprep.mubr.bf16.mxu0 %v1566
        %1759 = vmatmul.mubr.bf16.gmra.mrb[0].mxu0 %v1565
        %v1760 = vpop.f32.mrb[0].mxu0
        %v1761 = vadd.f32 %v1604, %v1760
        %v1762 = vpop.f32.mrb[0].mxu0
        %v1763 = vpop.f32.mrb[0].mxu0
        %v1764 = vadd.f32 %v1604, %v1763
        %v1765 = vpop.f32.mrb[0].mxu0
        %1766 = vdwg.mxu0
        %v1767 = vadd.f32 %v1350, %v1737
        %v1768 = vadd.f32 %v1351, %v1740
        %v1769 = vadd.f32 %v1352, %v1745
        %v1770 = vadd.f32 %v1353, %v1748
        %v1771 = vadd.f32 %v1354, %v1753
        %v1772 = vadd.f32 %v1355, %v1756
        %v1773 = vadd.f32 %v1356, %v1761
        %v1774 = vadd.f32 %v1357, %v1764
        %v1775 = vld [vmem:[%s11] sm:$0x1]
        %v1776 = vld [vmem:[%s12] sm:$0x1]
        %1777 = vadd.xlane.f32.xlu0 %v1767
        %v1778 = vpop.xlane.xlu0 %1777
        %1779 = vadd.xlane.f32.xlu0 %v1768
        %v1780 = vpop.xlane.xlu0 %1779
        %1781 = vadd.xlane.f32.xlu0 %v1769
        %v1782 = vpop.xlane.xlu0 %1781
        %1783 = vadd.xlane.f32.xlu0 %v1770
        %v1784 = vpop.xlane.xlu0 %1783
        %1785 = vadd.xlane.f32.xlu0 %v1771
        %v1786 = vpop.xlane.xlu0 %1785
        %1787 = vadd.xlane.f32.xlu0 %v1772
        %v1788 = vpop.xlane.xlu0 %1787
        %1789 = vadd.xlane.f32.xlu0 %v1773
        %v1790 = vpop.xlane.xlu0 %1789
        %1791 = vadd.xlane.f32.xlu0 %v1774
        %v1792 = vpop.xlane.xlu0 %1791
        %v1793 = vmul.f32 %v1778, %v1257
        %v1794 = vmul.f32 %v1780, %v1257
        %v1795 = vmul.f32 %v1782, %v1257
        %v1796 = vmul.f32 %v1784, %v1257
        %v1797 = vmul.f32 %v1786, %v1257
        %v1798 = vmul.f32 %v1788, %v1257
        %v1799 = vmul.f32 %v1790, %v1257
        %v1800 = vmul.f32 %v1792, %v1257
        %v1801 = vsub.f32 %v1767, %v1793
        %v1802 = vsub.f32 %v1768, %v1794
        %v1803 = vsub.f32 %v1769, %v1795
        %v1804 = vsub.f32 %v1770, %v1796
        %v1805 = vsub.f32 %v1771, %v1797
        %v1806 = vsub.f32 %v1772, %v1798
        %v1807 = vsub.f32 %v1773, %v1799
        %v1808 = vsub.f32 %v1774, %v1800
        %v1809 = vmul.f32 %v1801, %v1801
        %v1810 = vmul.f32 %v1802, %v1802
        %v1811 = vmul.f32 %v1803, %v1803
        %v1812 = vmul.f32 %v1804, %v1804
        %v1813 = vmul.f32 %v1805, %v1805
        %v1814 = vmul.f32 %v1806, %v1806
        %v1815 = vmul.f32 %v1807, %v1807
        %v1816 = vmul.f32 %v1808, %v1808
        %1817 = vadd.xlane.f32.xlu0 %v1809
        %v1818 = vpop.xlane.xlu0 %1817
        %1819 = vadd.xlane.f32.xlu0 %v1810
        %v1820 = vpop.xlane.xlu0 %1819
        %1821 = vadd.xlane.f32.xlu0 %v1811
        %v1822 = vpop.xlane.xlu0 %1821
        %1823 = vadd.xlane.f32.xlu0 %v1812
        %v1824 = vpop.xlane.xlu0 %1823
        %1825 = vadd.xlane.f32.xlu0 %v1813
        %v1826 = vpop.xlane.xlu0 %1825
        %1827 = vadd.xlane.f32.xlu0 %v1814
        %v1828 = vpop.xlane.xlu0 %1827
        %1829 = vadd.xlane.f32.xlu0 %v1815
        %v1830 = vpop.xlane.xlu0 %1829
        %1831 = vadd.xlane.f32.xlu0 %v1816
        %v1832 = vpop.xlane.xlu0 %1831
        %v1833 = vmul.f32 %v1818, %v1257
        %v1834 = vmul.f32 %v1820, %v1257
        %v1835 = vmul.f32 %v1822, %v1257
        %v1836 = vmul.f32 %v1824, %v1257
        %v1837 = vmul.f32 %v1826, %v1257
        %v1838 = vmul.f32 %v1828, %v1257
        %v1839 = vmul.f32 %v1830, %v1257
        %v1840 = vmul.f32 %v1832, %v1257
        %v1841 = vadd.f32 %v1833, 1e-05
        %v1842 = vadd.f32 %v1834, 1e-05
        %v1843 = vadd.f32 %v1835, 1e-05
        %v1844 = vadd.f32 %v1836, 1e-05
        %v1845 = vadd.f32 %v1837, 1e-05
        %v1846 = vadd.f32 %v1838, 1e-05
        %v1847 = vadd.f32 %v1839, 1e-05
        %v1848 = vadd.f32 %v1840, 1e-05
        %v1849 = vrsqrt.pop %v1841
        %v1850 = vrsqrt.pop %v1842
        %v1851 = vrsqrt.pop %v1843
        %v1852 = vrsqrt.pop %v1844
        %v1853 = vrsqrt.pop %v1845
        %v1854 = vrsqrt.pop %v1846
        %v1855 = vrsqrt.pop %v1847
        %v1856 = vrsqrt.pop %v1848
        %v1857 = vmul.f32 %v1801, %v1849
        %v1858 = vmul.f32 %v1802, %v1850
        %v1859 = vmul.f32 %v1803, %v1851
        %v1860 = vmul.f32 %v1804, %v1852
        %v1861 = vmul.f32 %v1805, %v1853
        %v1862 = vmul.f32 %v1806, %v1854
        %v1863 = vmul.f32 %v1807, %v1855
        %v1864 = vmul.f32 %v1808, %v1856
        %v1866 = vlaneseq
        %v1867 = vshrl.u32 %v1866, 7
        %v1868 = vsub.s32 0, %v1867
        %v1869 = vrot.slane %v1775, %v1868
        %v1871 = vmul.f32 %v1857, %v1869
        %v1872 = vmul.f32 %v1858, %v1869
        %v1873 = vmul.f32 %v1859, %v1869
        %v1874 = vmul.f32 %v1860, %v1869
        %v1875 = vmul.f32 %v1861, %v1869
        %v1876 = vmul.f32 %v1862, %v1869
        %v1877 = vmul.f32 %v1863, %v1869
        %v1878 = vmul.f32 %v1864, %v1869
        %v1880 = vlaneseq
        %v1881 = vshrl.u32 %v1880, 7
        %v1882 = vsub.s32 0, %v1881
        %v1883 = vrot.slane %v1776, %v1882
        %v1885 = vadd.f32 %v1871, %v1883
        %v1886 = vadd.f32 %v1872, %v1883
        %v1887 = vadd.f32 %v1873, %v1883
        %v1888 = vadd.f32 %v1874, %v1883
        %v1889 = vadd.f32 %v1875, %v1883
        %v1890 = vadd.f32 %v1876, %v1883
        %v1891 = vadd.f32 %v1877, %v1883
        %v1892 = vadd.f32 %v1878, %v1883
        %1893 = vst [vmem:[%s563] sm:$0xff] %v1885
        %1894 = vst [vmem:[%s563 + $0x8] sm:$0xff] %v1886
        %1895 = vst [vmem:[%s563 + $0x10] sm:$0xff] %v1887
        %1896 = vst [vmem:[%s563 + $0x18] sm:$0xff] %v1888
        %1897 = vst [vmem:[%s563 + $0x20] sm:$0xff] %v1889
        %1898 = vst [vmem:[%s563 + $0x28] sm:$0xff] %v1890
        %1899 = vst [vmem:[%s563 + $0x30] sm:$0xff] %v1891
        %1900 = vst [vmem:[%s563 + $0x38] sm:$0xff] %v1892
        %1901 = vst [vmem:[%s570] sm:$0xff] %v1146
        %1902 = vst [vmem:[%s570 + $0x8] sm:$0xff] %v1147
        %1903 = vst [vmem:[%s570 + $0x10] sm:$0xff] %v1148
        %1904 = vst [vmem:[%s570 + $0x18] sm:$0xff] %v1149
        %1905 = vst [vmem:[%s570 + $0x20] sm:$0xff] %v1150
        %1906 = vst [vmem:[%s570 + $0x28] sm:$0xff] %v1151
        %1907 = vst [vmem:[%s570 + $0x30] sm:$0xff] %v1152
        %1908 = vst [vmem:[%s570 + $0x38] sm:$0xff] %v1153
        %s1909 = sand.u32 %s337, 1
        %s1910 = scalar_lea.sflag [#allocation6], %s1909
        %s1911 = sand.u32 %s337, 1
        %s1912 = smul.addr %s1911, 64
        %s1913 = scalar_lea.vmem [#allocation13], %s1912
        %s1914 = sand.u32 %s365, 1
        %s1915 = scalar_lea.sflag [#allocation15], %s1914
        %s1916 = sand.u32 %s365, 1
        %s1917 = smul.addr %s1916, 64
        %s1918 = scalar_lea.vmem [#allocation14], %s1917
        // Predicated region
        $region97: #{tpu_custom_call.1} parent=71 // pred_check
          %p1919 = pneg %p347
        $region98: #{tpu_custom_call.1} parent=71 // pred_check_branch
          %1921 = sbr.rel (%p1919) target = $region100
        $region99: #{tpu_custom_call.1} parent=71 // pred_region
          %s1922 = smul.u32 8, %s42
          %s1924 = ssub.s32 1024, 1024
          %1925 = vsyncadd %s1910, %s1924
          %s1926 = smul.addr %s41, 16
          %s1927 = sadd.s32 %s1922, %s1926
          %s1928 = smul.addr %s1927, 128
          %s1929 = scalar_lea.hbm %s13, %s1928
          %s1930 = sshll.u32 %s1913, 4
          %s1931 = int_to_ptr.vmem [resolvable:$true] %s1930
          %1936 = dma.vmem_to_hbm [thread:$0]  %s1931, 1024, %s1929, %s1910, 128, 128, 8
        $region100: #{tpu_custom_call.1} parent=71 // pred_fallthru
          _
        // Predicated region
        $region101: #{tpu_custom_call.1} parent=71 // pred_check
          %p1937 = pneg %p375
        $region102: #{tpu_custom_call.1} parent=71 // pred_check_branch
          %1939 = sbr.rel (%p1937) target = $region104
        $region103: #{tpu_custom_call.1} parent=71 // pred_region
          %s1940 = smul.u32 8, %s42
          %s1942 = ssub.s32 1024, 1024
          %1943 = vsyncadd %s1915, %s1942
          %s1944 = smul.addr %s41, 16
          %s1945 = sadd.s32 %s1940, %s1944
          %s1946 = smul.addr %s1945, 128
          %s1947 = scalar_lea.hbm %s14, %s1946
          %s1948 = sshll.u32 %s1918, 4
          %s1949 = int_to_ptr.vmem [resolvable:$true] %s1948
          %1954 = dma.vmem_to_hbm [thread:$0]  %s1949, 1024, %s1947, %s1915, 128, 128, 8
        $region104: #{tpu_custom_call.1} parent=71 // pred_fallthru
          _
      $region72: #{tpu_custom_call.1} parent=5 // pred_fallthru
        _
      %p1955 = scmp.le.s32.totalorder 2, %s32
      // Predicated region
      $region105: #{tpu_custom_call.1} parent=5 // pred_check
        %p1956 = pneg %p1955
      $region106: #{tpu_custom_call.1} parent=5 // pred_check_branch
        %1958 = sbr.rel (%p1956) target = $region108
      $region107: #{tpu_custom_call.1} parent=5 // pred_region
        %s1959 = ssub.s32 %s32, 2
        // Predicated region
        $region109: #{tpu_custom_call.1} parent=107 // pred_check
          %p1960 = pneg %p353
        $region110: #{tpu_custom_call.1} parent=107 // pred_check_branch
          %1962 = sbr.rel (%p1960) target = $region112
        $region111: #{tpu_custom_call.1} parent=107 // pred_region
          %s1963 = sand.u32 %s338, 1
          %s1964 = scalar_lea.sflag [#allocation6], %s1963
          %s1965 = sand.u32 %s338, 1
          %s1966 = smul.addr %s1965, 64
          %s1967 = scalar_lea.vmem [#allocation13], %s1966
          %1968 = dma.done %s1964, 1024
        $region112: #{tpu_custom_call.1} parent=107 // pred_fallthru
          _
        // Predicated region
        $region113: #{tpu_custom_call.1} parent=107 // pred_check
          %p1969 = pneg %p381
        $region114: #{tpu_custom_call.1} parent=107 // pred_check_branch
          %1971 = sbr.rel (%p1969) target = $region116
        $region115: #{tpu_custom_call.1} parent=107 // pred_region
          %s1972 = sand.u32 %s366, 1
          %s1973 = scalar_lea.sflag [#allocation15], %s1972
          %s1974 = sand.u32 %s366, 1
          %s1975 = smul.addr %s1974, 64
          %s1976 = scalar_lea.vmem [#allocation14], %s1975
          %1977 = dma.done %s1973, 1024
        $region116: #{tpu_custom_call.1} parent=107 // pred_fallthru
          _
      $region108: #{tpu_custom_call.1} parent=5 // pred_fallthru
        _
    $region6: #{tpu_custom_call.1} parent=1 // loop_footer
      %s36 = sadd.s32 1, %s32
    $region7: #{tpu_custom_call.1} parent=1 // loop_footer_branch
      %31 = sbr.rel target = $region3
    $region8: #{tpu_custom_call.1} parent=1 // loop_exit
      _
    %1978 = vsyncpa [#allocation5], 1
    %s1979 = scalar_lea.sflag [#allocation5], 1
    %1980 = vsyncpa %s1979, 1
    %1981 = vsyncpa [#allocation8], 1
    %1982 = vsyncpa [#allocation11], 1
    %1983 = vsyncpa [#allocation6], 1
    %s1984 = scalar_lea.sflag [#allocation6], 1
    %1985 = vsyncpa %s1984, 1
    %1986 = vsyncpa [#allocation15], 1
    %s1987 = scalar_lea.sflag [#allocation15], 1
    %1988 = vsyncpa %s1987, 1

</llo_original>
